<compile_context>
chip_gen: v6e
topology: v6e:2x2x1
jax: 0.10.0
libtpu: 0.0.40
codegen_flags: <defaults>
</compile_context>

<pallas_src>
import jax
import jax.numpy as jnp
from jax import lax
from jax.experimental import pallas as pl
from jax.experimental.pallas import tpu as pltpu


# ----------------------------- small helpers --------------------------------

def _round_up(n, m):
    return (n + m - 1) // m * m


def _conv_toeplitz(w, w_in, w_out):
    """Lower a (Cout, Cin, KH, KW) conv weight to a dense matmul matrix.

    Rows ordered (kh, cin, w); columns ordered (cout, j), so that
      conv_out[b, co, i, j] = sum_r LHS[(b, i), r] * T[r, co*w_out + j]
    with LHS[(b, i), kh*Cin*w_in + ci*w_in + w] = x[b, ci, i + kh, w].
    The (kh, cin, w) K-order lets the in-kernel im2col be built from 5 wide
    lane chunks (one per kh) instead of Cin*KH narrow ones.
    """
    c_out, c_in, k_h, k_w = w.shape
    wi = jnp.arange(w_in)[:, None]              # (w_in, 1)
    jo = jnp.arange(w_out)[None, :]             # (1, w_out)
    d = wi - jo                                 # kernel tap index  (w - j)
    valid = (d >= 0) & (d < k_w)
    band = w[:, :, :, jnp.clip(d, 0, k_w - 1)]  # (Cout, Cin, KH, w_in, w_out)
    band = jnp.where(valid[None, None, None], band, 0.0)
    t = jnp.transpose(band, (2, 1, 3, 0, 4))    # (KH, Cin, w_in, Cout, w_out)
    return t.reshape(k_h * c_in * w_in, c_out * w_out)


def _pool_w_selectors(n_ch, w_in, dtype):
    """Exact 0/1 matrices selecting even / odd W columns per channel block."""
    n_in, n_out = n_ch * w_in, n_ch * (w_in // 2)
    r = jnp.arange(n_in)[:, None]
    c = jnp.arange(n_out)[None, :]
    same = (r // w_in) == (c // (w_in // 2))
    j, oj = r % w_in, c % (w_in // 2)
    sel_e = jnp.where(same & (j == 2 * oj), 1.0, 0.0).astype(dtype)
    sel_o = jnp.where(same & (j == 2 * oj + 1), 1.0, 0.0).astype(dtype)
    return sel_e, sel_o


def pack_params(params, compute_dtype=jnp.bfloat16):
    """One-time packing of PyTorch-layout params into kernel-ready matrices."""
    f32 = jnp.float32
    cd = compute_dtype
    t1 = _conv_toeplitz(params["conv1_w"].astype(f32), 28, 24)      # (140, 144)
    t2 = _conv_toeplitz(params["conv2_w"].astype(f32), 12, 8)       # (360, 128)
    b1 = jnp.repeat(params["conv1_b"].astype(f32), 24)[None, :]     # (1, 144)
    b2 = jnp.repeat(params["conv2_b"].astype(f32), 8)[None, :]      # (1, 128)
    s1e, s1o = _pool_w_selectors(6, 24, cd)                         # (144, 72)
    s2e, s2o = _pool_w_selectors(16, 8, cd)                         # (128, 64)
    # fc1: fold PyTorch's NCHW flatten (idx = c*16 + h*4 + w) into the weight,
    # matching the kernel's flatten order (idx = h*64 + c*4 + w).
    f1 = params["fc1_w"].astype(f32).reshape(120, 16, 4, 4)
    f1 = jnp.transpose(f1, (2, 1, 3, 0)).reshape(256, 120)
    f2 = params["fc2_w"].astype(f32).T                               # (120, 84)
    f3 = jnp.zeros((84, 128), f32).at[:, :10].set(params["fc3_w"].astype(f32).T)
    b3 = jnp.zeros((1, 128), f32).at[0, :10].set(params["fc3_b"].astype(f32))
    return (t1.astype(cd), b1, s1e, s1o,
            t2.astype(cd), b2, s2e, s2o,
            f1.astype(cd), params["fc1_b"].astype(f32)[None, :],
            f2.astype(cd), params["fc2_b"].astype(f32)[None, :],
            f3.astype(cd), b3)


# ----------------------------- fused kernel ---------------------------------

def _convnet_kernel(x_ref, t1_ref, b1_ref, s1e_ref, s1o_ref,
                    t2_ref, b2_ref, s2e_ref, s2o_ref,
                    f1w_ref, f1b_ref, f2w_ref, f2b_ref, f3w_ref, f3b_ref,
                    out_ref, scr1, scr2):
    tb = x_ref.shape[0]
    f32 = jnp.float32

    def mm(a, w_ref):
        # Narrow-precision operands (bf16 by default), f32 accumulation on MXU.
        return jnp.dot(a.astype(w_ref.dtype), w_ref[...],
                       preferred_element_type=f32)

    def pool_w(h, se_ref, so_ref):
        # Exact 2:1 max-downsample along W via precomputed 0/1 selection mats.
        hc = h.astype(se_ref.dtype)
        return jnp.maximum(
            jnp.dot(hc, se_ref[...], preferred_element_type=f32),
            jnp.dot(hc, so_ref[...], preferred_element_type=f32))

    # ---- conv1 + ReLU: (tb*24, 140) @ (140, 144); rows (b, i), cols (co, j).
    x = x_ref[...].astype(f32)                                # (tb, 28, 28)
    lhs1 = jnp.concatenate(
        [x[:, kh:kh + 24, :].reshape(tb * 24, 28) for kh in range(5)], axis=1)
    h1 = jnp.maximum(mm(lhs1, t1_ref) + b1_ref[...], 0.0)     # (tb*24, 144)

    # ---- pool1: W via selection matmuls, H via strided sublane reads.
    scr1[...] = pool_w(h1, s1e_ref, s1o_ref).reshape(tb, 24, 72)
    p1 = jnp.maximum(scr1[:, pl.ds(0, 12, 2), :],
                     scr1[:, pl.ds(1, 12, 2), :])             # (tb, 12, 72)

    # ---- conv2 + ReLU: K ordered (kh, ci, w) -> 5 lane chunks of width 72.
    lhs2 = jnp.concatenate(
        [p1[:, kh:kh + 8, :].reshape(tb * 8, 72) for kh in range(5)], axis=1)
    h2 = jnp.maximum(mm(lhs2, t2_ref) + b2_ref[...], 0.0)     # (tb*8, 128)

    # ---- pool2-W, then pool2-H fused with the NCHW-order flatten -> (tb, 256).
    scr2[...] = pool_w(h2, s2e_ref, s2o_ref).reshape(tb, 8, 64)
    flat = jnp.concatenate(
        [jnp.maximum(scr2[:, 2 * oi, :], scr2[:, 2 * oi + 1, :])
         for oi in range(4)], axis=1)                         # cols (h, c, w)

    # ---- fc1 / fc2 / fc3 (fc3 N padded to 128 for a lane-dense HBM store).
    f1 = jnp.maximum(mm(flat, f1w_ref) + f1b_ref[...], 0.0)   # (tb, 120)
    f2 = jnp.maximum(mm(f1, f2w_ref) + f2b_ref[...], 0.0)     # (tb, 84)
    out_ref[...] = (mm(f2, f3w_ref) + f3b_ref[...]).astype(out_ref.dtype)


def _resident_spec(a):
    zeros = (0,) * a.ndim
    return pl.BlockSpec(a.shape, lambda i, _z=zeros: _z)


def _tile_and_pad(b):
    """Batch tile <=256 rows; >=2 grid steps when possible (v7x has 2 cores)."""
    b8 = _round_up(b, 8)
    n_steps = max(1, (b8 + 255) // 256)
    if b8 > 8:
        n_steps = max(n_steps, 2)
    tile_b = _round_up((b8 + n_steps - 1) // n_steps, 8)
    return tile_b, tile_b * n_steps


def convnet_forward(packed, x):
    """Fused ConvNet forward.  x: anything reshapeable to (-1, 1, 28, 28)."""
    x = x.reshape(-1, 1, 28, 28)[:, 0]                         # (B, 28, 28)
    b = x.shape[0]
    cd = packed[0].dtype                                       # compute dtype
    x = x.astype(cd)                                           # bf16 input DMA

    tile_b, b_pad = _tile_and_pad(b)
    if b_pad != b:
        x = jnp.pad(x, ((0, b_pad - b), (0, 0), (0, 0)))

    in_specs = [pl.BlockSpec((tile_b, 28, 28), lambda i: (i, 0, 0))]
    in_specs += [_resident_spec(a) for a in packed]

    out = pl.pallas_call(
        _convnet_kernel,
        out_shape=jax.ShapeDtypeStruct((b_pad, 128), jnp.float32),
        grid=(b_pad // tile_b,),
        in_specs=in_specs,
        out_specs=pl.BlockSpec((tile_b, 128), lambda i: (i, 0)),
        scratch_shapes=[pltpu.VMEM((tile_b, 24, 72), jnp.float32),
                        pltpu.VMEM((tile_b, 8, 64), jnp.float32)],
        compiler_params=pltpu.CompilerParams(
            dimension_semantics=("parallel",),
            vmem_limit_bytes=64 * 1024 * 1024),
    )(x, *packed)
    return out[:b, :10]


# ----------------------------- params & reference ---------------------------

def _uniform(key, shape, fan_in):
    bound = 1.0 / float(fan_in) ** 0.5
    return jax.random.uniform(key, shape, jnp.float32, -bound, bound)


def init_params(key):
    ks = jax.random.split(key, 10)
    return {
        "conv1_w": _uniform(ks[0], (6, 1, 5, 5), 1 * 5 * 5),
        "conv1_b": _uniform(ks[1], (6,), 1 * 5 * 5),
        "conv2_w": _uniform(ks[2], (16, 6, 5, 5), 6 * 5 * 5),
        "conv2_b": _uniform(ks[3], (16,), 6 * 5 * 5),
        "fc1_w": _uniform(ks[4], (120, 16 * 4 * 4), 16 * 4 * 4),
        "fc1_b": _uniform(ks[5], (120,), 16 * 4 * 4),
        "fc2_w": _uniform(ks[6], (84, 120), 120),
        "fc2_b": _uniform(ks[7], (84,), 120),
        "fc3_w": _uniform(ks[8], (10, 84), 84),
        "fc3_b": _uniform(ks[9], (10,), 84),
    }


def convnet_reference(params, x):
    """Pure-JAX (XLA) reference matching the PyTorch module, for validation."""
    x = x.reshape(-1, 1, 28, 28).astype(jnp.float32)

    def conv(h, w, b):
        out = lax.conv_general_dilated(
            h, w, (1, 1), "VALID", dimension_numbers=("NCHW", "OIHW", "NCHW"))
        return jax.nn.relu(out + b[None, :, None, None])

    def pool(h):
        return lax.reduce_window(h, -jnp.inf, lax.max,
                                 (1, 1, 2, 2), (1, 1, 2, 2), "VALID")

    h = pool(conv(x, params["conv1_w"], params["conv1_b"]))
    h = pool(conv(h, params["conv2_w"], params["conv2_b"]))
    h = h.reshape(h.shape[0], -1)                 # NCHW flatten (matches view)
    h = jax.nn.relu(h @ params["fc1_w"].T + params["fc1_b"])
    h = jax.nn.relu(h @ params["fc2_w"].T + params["fc2_b"])
    return h @ params["fc3_w"].T + params["fc3_b"]


# ----------------------------- main ------------------------------------------

if __name__ == "__main__":
    key = jax.random.PRNGKey(0)
    pkey, xkey = jax.random.split(key)
    params = init_params(pkey)

    # --- small batch: tight numerical check with f32-operand packing ---------
    x = jax.random.normal(xkey, (2, 1, 28, 28), jnp.float32)
    ref = convnet_reference(params, x)

    packed_f32 = pack_params(params, compute_dtype=jnp.float32)
    out_f32 = jax.block_until_ready(jax.jit(convnet_forward)(packed_f32, x))
    assert out_f32.shape == (2, 10), out_f32.shape
    err_f32 = float(jnp.max(jnp.abs(out_f32 - ref)))
    assert err_f32 < 1e-3, f"f32 kernel mismatch vs reference: {err_f32}"

    # --- default bf16-operand packing (perf config), small batch -------------
    packed = pack_params(params)
    out = jax.block_until_ready(jax.jit(convnet_forward)(packed, x))
    assert out.shape == (2, 10), out.shape
    assert bool(jnp.all(jnp.isfinite(out)))
    err_bf16 = float(jnp.max(jnp.abs(out - ref)))
    assert err_bf16 < 5e-2, f"bf16 kernel mismatch vs reference: {err_bf16}"

    # --- larger batch: exercises the 256-row tile and the >=2-step grid ------
    xb = jax.random.normal(jax.random.PRNGKey(1), (512, 1, 28, 28), jnp.float32)
    refb = convnet_reference(params, xb)
    outb = jax.block_until_ready(jax.jit(convnet_forward)(packed, xb))
    assert outb.shape == (512, 10), outb.shape
    assert bool(jnp.all(jnp.isfinite(outb)))
    err_b = float(jnp.max(jnp.abs(outb - refb)))
    assert err_b < 1e-1, f"bf16 kernel mismatch vs reference (batch): {err_b}"

    print("KERNEL_OK")
</pallas_src>

<mosaic_0001>
module attributes {stable_mosaic.version = 11 : i64} {
  func.func @_convnet_kernel(%arg0: i32, %arg1: memref<8x28x28xf32, #tpu.memory_space<vmem>>, %arg2: memref<140x144xf32, #tpu.memory_space<vmem>>, %arg3: memref<1x144xf32, #tpu.memory_space<vmem>>, %arg4: memref<144x72xf32, #tpu.memory_space<vmem>>, %arg5: memref<144x72xf32, #tpu.memory_space<vmem>>, %arg6: memref<360x128xf32, #tpu.memory_space<vmem>>, %arg7: memref<1x128xf32, #tpu.memory_space<vmem>>, %arg8: memref<128x64xf32, #tpu.memory_space<vmem>>, %arg9: memref<128x64xf32, #tpu.memory_space<vmem>>, %arg10: memref<256x120xf32, #tpu.memory_space<vmem>>, %arg11: memref<1x120xf32, #tpu.memory_space<vmem>>, %arg12: memref<120x84xf32, #tpu.memory_space<vmem>>, %arg13: memref<1x84xf32, #tpu.memory_space<vmem>>, %arg14: memref<84x128xf32, #tpu.memory_space<vmem>>, %arg15: memref<1x128xf32, #tpu.memory_space<vmem>>, %arg16: memref<8x128xf32, #tpu.memory_space<vmem>>, %arg17: memref<8x24x72xf32, #tpu.memory_space<vmem>>, %arg18: memref<8x8x64xf32, #tpu.memory_space<vmem>>) attributes {dimension_semantics = [#tpu.dimension_semantics<parallel>], iteration_bounds = array<i64: 1>, scalar_prefetch = 0 : i64, scratch_operands = 2 : i64, tpu.core_type = #tpu.core_type<tc>, window_params = [{transform_indices = @transform_0, window_bounds = array<i64: 8, 28, 28>}, {pipeline_mode = #tpu.pipeline_mode<synchronous>, transform_indices = @transform_1, window_bounds = array<i64: 140, 144>}, {pipeline_mode = #tpu.pipeline_mode<synchronous>, transform_indices = @transform_2, window_bounds = array<i64: 1, 144>}, {pipeline_mode = #tpu.pipeline_mode<synchronous>, transform_indices = @transform_3, window_bounds = array<i64: 144, 72>}, {pipeline_mode = #tpu.pipeline_mode<synchronous>, transform_indices = @transform_4, window_bounds = array<i64: 144, 72>}, {pipeline_mode = #tpu.pipeline_mode<synchronous>, transform_indices = @transform_5, window_bounds = array<i64: 360, 128>}, {pipeline_mode = #tpu.pipeline_mode<synchronous>, transform_indices = @transform_6, window_bounds = array<i64: 1, 128>}, {pipeline_mode = #tpu.pipeline_mode<synchronous>, transform_indices = @transform_7, window_bounds = array<i64: 128, 64>}, {pipeline_mode = #tpu.pipeline_mode<synchronous>, transform_indices = @transform_8, window_bounds = array<i64: 128, 64>}, {pipeline_mode = #tpu.pipeline_mode<synchronous>, transform_indices = @transform_9, window_bounds = array<i64: 256, 120>}, {pipeline_mode = #tpu.pipeline_mode<synchronous>, transform_indices = @transform_10, window_bounds = array<i64: 1, 120>}, {pipeline_mode = #tpu.pipeline_mode<synchronous>, transform_indices = @transform_11, window_bounds = array<i64: 120, 84>}, {pipeline_mode = #tpu.pipeline_mode<synchronous>, transform_indices = @transform_12, window_bounds = array<i64: 1, 84>}, {pipeline_mode = #tpu.pipeline_mode<synchronous>, transform_indices = @transform_13, window_bounds = array<i64: 84, 128>}, {pipeline_mode = #tpu.pipeline_mode<synchronous>, transform_indices = @transform_14, window_bounds = array<i64: 1, 128>}, {transform_indices = @transform_15, window_bounds = array<i64: 8, 128>}]} {
    %c0 = arith.constant 0 : index
    %c0_0 = arith.constant 0 : index
    %c0_1 = arith.constant 0 : index
    %0 = vector.load %arg1[%c0, %c0_0, %c0_1] : memref<8x28x28xf32, #tpu.memory_space<vmem>>, vector<8x28x28xf32>
    %1 = vector.extract_strided_slice %0 {offsets = [0, 0, 0], sizes = [8, 24, 28], strides = [1, 1, 1]} : vector<8x28x28xf32> to vector<8x24x28xf32>
    %2 = vector.shape_cast %1 : vector<8x24x28xf32> to vector<192x28xf32>
    %3 = vector.extract_strided_slice %0 {offsets = [0, 1, 0], sizes = [8, 24, 28], strides = [1, 1, 1]} : vector<8x28x28xf32> to vector<8x24x28xf32>
    %4 = vector.shape_cast %3 : vector<8x24x28xf32> to vector<192x28xf32>
    %5 = vector.extract_strided_slice %0 {offsets = [0, 2, 0], sizes = [8, 24, 28], strides = [1, 1, 1]} : vector<8x28x28xf32> to vector<8x24x28xf32>
    %6 = vector.shape_cast %5 : vector<8x24x28xf32> to vector<192x28xf32>
    %7 = vector.extract_strided_slice %0 {offsets = [0, 3, 0], sizes = [8, 24, 28], strides = [1, 1, 1]} : vector<8x28x28xf32> to vector<8x24x28xf32>
    %8 = vector.shape_cast %7 : vector<8x24x28xf32> to vector<192x28xf32>
    %9 = vector.extract_strided_slice %0 {offsets = [0, 4, 0], sizes = [8, 24, 28], strides = [1, 1, 1]} : vector<8x28x28xf32> to vector<8x24x28xf32>
    %10 = vector.shape_cast %9 : vector<8x24x28xf32> to vector<192x28xf32>
    %11 = tpu.concatenate %2, %4, %6, %8, %10 in 1 : vector<192x28xf32>, vector<192x28xf32>, vector<192x28xf32>, vector<192x28xf32>, vector<192x28xf32> -> vector<192x140xf32>
    %c0_2 = arith.constant 0 : index
    %c0_3 = arith.constant 0 : index
    %12 = vector.load %arg2[%c0_2, %c0_3] : memref<140x144xf32, #tpu.memory_space<vmem>>, vector<140x144xf32>
    %cst = arith.constant dense<0.000000e+00> : vector<192x144xf32>
    %13 = tpu.matmul %11, %12, %cst {dimension_numbers = #tpu.dot_dimension_numbers<[1], [0], [0], [1], [0, 0, 1, 1], [], []>} : vector<192x140xf32>, vector<140x144xf32>, vector<192x144xf32> -> vector<192x144xf32>
    %c0_4 = arith.constant 0 : index
    %c0_5 = arith.constant 0 : index
    %14 = vector.load %arg3[%c0_4, %c0_5] : memref<1x144xf32, #tpu.memory_space<vmem>>, vector<1x144xf32>
    %15 = vector.broadcast %14 : vector<1x144xf32> to vector<192x144xf32>
    %16 = arith.addf %13, %15 : vector<192x144xf32>
    %cst_6 = arith.constant 0.000000e+00 : f32
    %17 = vector.broadcast %cst_6 : f32 to vector<192x144xf32>
    %18 = arith.maximumf %16, %17 : vector<192x144xf32>
    %c0_7 = arith.constant 0 : index
    %c0_8 = arith.constant 0 : index
    %19 = vector.load %arg4[%c0_7, %c0_8] : memref<144x72xf32, #tpu.memory_space<vmem>>, vector<144x72xf32>
    %cst_9 = arith.constant dense<0.000000e+00> : vector<192x72xf32>
    %20 = tpu.matmul %18, %19, %cst_9 {dimension_numbers = #tpu.dot_dimension_numbers<[1], [0], [0], [1], [0, 0, 1, 1], [], []>} : vector<192x144xf32>, vector<144x72xf32>, vector<192x72xf32> -> vector<192x72xf32>
    %c0_10 = arith.constant 0 : index
    %c0_11 = arith.constant 0 : index
    %21 = vector.load %arg5[%c0_10, %c0_11] : memref<144x72xf32, #tpu.memory_space<vmem>>, vector<144x72xf32>
    %cst_12 = arith.constant dense<0.000000e+00> : vector<192x72xf32>
    %22 = tpu.matmul %18, %21, %cst_12 {dimension_numbers = #tpu.dot_dimension_numbers<[1], [0], [0], [1], [0, 0, 1, 1], [], []>} : vector<192x144xf32>, vector<144x72xf32>, vector<192x72xf32> -> vector<192x72xf32>
    %23 = arith.maximumf %20, %22 : vector<192x72xf32>
    %24 = vector.shape_cast %23 : vector<192x72xf32> to vector<8x24x72xf32>
    %c0_13 = arith.constant 0 : index
    %c0_14 = arith.constant 0 : index
    %c0_15 = arith.constant 0 : index
    %25 = vector.load %arg17[%c0_13, %c0_14, %c0_15] : memref<8x24x72xf32, #tpu.memory_space<vmem>>, vector<8x24x72xf32>
    tpu.vector_store %arg17[%c0_13, %c0_14, %c0_15], %24 {strides = array<i32>} : memref<8x24x72xf32, #tpu.memory_space<vmem>>, vector<8x24x72xf32>,
    %c0_16 = arith.constant 0 : index
    %c0_17 = arith.constant 0 : index
    %c0_18 = arith.constant 0 : index
    %26 = tpu.strided_load %arg17[%c0_16, %c0_17, %c0_18] {strides = array<i32: 1, 2, 1>} : memref<8x24x72xf32, #tpu.memory_space<vmem>>, vector<8x12x72xf32>
    %c0_19 = arith.constant 0 : index
    %c1 = arith.constant 1 : index
    %c0_20 = arith.constant 0 : index
    %27 = tpu.strided_load %arg17[%c0_19, %c1, %c0_20] {strides = array<i32: 1, 2, 1>} : memref<8x24x72xf32, #tpu.memory_space<vmem>>, vector<8x12x72xf32>
    %28 = arith.maximumf %26, %27 : vector<8x12x72xf32>
    %29 = vector.extract_strided_slice %28 {offsets = [0, 0, 0], sizes = [8, 8, 72], strides = [1, 1, 1]} : vector<8x12x72xf32> to vector<8x8x72xf32>
    %30 = vector.shape_cast %29 : vector<8x8x72xf32> to vector<64x72xf32>
    %31 = vector.extract_strided_slice %28 {offsets = [0, 1, 0], sizes = [8, 8, 72], strides = [1, 1, 1]} : vector<8x12x72xf32> to vector<8x8x72xf32>
    %32 = vector.shape_cast %31 : vector<8x8x72xf32> to vector<64x72xf32>
    %33 = vector.extract_strided_slice %28 {offsets = [0, 2, 0], sizes = [8, 8, 72], strides = [1, 1, 1]} : vector<8x12x72xf32> to vector<8x8x72xf32>
    %34 = vector.shape_cast %33 : vector<8x8x72xf32> to vector<64x72xf32>
    %35 = vector.extract_strided_slice %28 {offsets = [0, 3, 0], sizes = [8, 8, 72], strides = [1, 1, 1]} : vector<8x12x72xf32> to vector<8x8x72xf32>
    %36 = vector.shape_cast %35 : vector<8x8x72xf32> to vector<64x72xf32>
    %37 = vector.extract_strided_slice %28 {offsets = [0, 4, 0], sizes = [8, 8, 72], strides = [1, 1, 1]} : vector<8x12x72xf32> to vector<8x8x72xf32>
    %38 = vector.shape_cast %37 : vector<8x8x72xf32> to vector<64x72xf32>
    %39 = tpu.concatenate %30, %32, %34, %36, %38 in 1 : vector<64x72xf32>, vector<64x72xf32>, vector<64x72xf32>, vector<64x72xf32>, vector<64x72xf32> -> vector<64x360xf32>
    %c0_21 = arith.constant 0 : index
    %c0_22 = arith.constant 0 : index
    %40 = vector.load %arg6[%c0_21, %c0_22] : memref<360x128xf32, #tpu.memory_space<vmem>>, vector<360x128xf32>
    %cst_23 = arith.constant dense<0.000000e+00> : vector<64x128xf32>
    %41 = tpu.matmul %39, %40, %cst_23 {dimension_numbers = #tpu.dot_dimension_numbers<[1], [0], [0], [1], [0, 0, 1, 1], [], []>} : vector<64x360xf32>, vector<360x128xf32>, vector<64x128xf32> -> vector<64x128xf32>
    %c0_24 = arith.constant 0 : index
    %c0_25 = arith.constant 0 : index
    %42 = vector.load %arg7[%c0_24, %c0_25] : memref<1x128xf32, #tpu.memory_space<vmem>>, vector<1x128xf32>
    %43 = vector.broadcast %42 : vector<1x128xf32> to vector<64x128xf32>
    %44 = arith.addf %41, %43 : vector<64x128xf32>
    %cst_26 = arith.constant 0.000000e+00 : f32
    %45 = vector.broadcast %cst_26 : f32 to vector<64x128xf32>
    %46 = arith.maximumf %44, %45 : vector<64x128xf32>
    %c0_27 = arith.constant 0 : index
    %c0_28 = arith.constant 0 : index
    %47 = vector.load %arg8[%c0_27, %c0_28] : memref<128x64xf32, #tpu.memory_space<vmem>>, vector<128x64xf32>
    %cst_29 = arith.constant dense<0.000000e+00> : vector<64x64xf32>
    %48 = tpu.matmul %46, %47, %cst_29 {dimension_numbers = #tpu.dot_dimension_numbers<[1], [0], [0], [1], [0, 0, 1, 1], [], []>} : vector<64x128xf32>, vector<128x64xf32>, vector<64x64xf32> -> vector<64x64xf32>
    %c0_30 = arith.constant 0 : index
    %c0_31 = arith.constant 0 : index
    %49 = vector.load %arg9[%c0_30, %c0_31] : memref<128x64xf32, #tpu.memory_space<vmem>>, vector<128x64xf32>
    %cst_32 = arith.constant dense<0.000000e+00> : vector<64x64xf32>
    %50 = tpu.matmul %46, %49, %cst_32 {dimension_numbers = #tpu.dot_dimension_numbers<[1], [0], [0], [1], [0, 0, 1, 1], [], []>} : vector<64x128xf32>, vector<128x64xf32>, vector<64x64xf32> -> vector<64x64xf32>
    %51 = arith.maximumf %48, %50 : vector<64x64xf32>
    %52 = vector.shape_cast %51 : vector<64x64xf32> to vector<8x8x64xf32>
    %c0_33 = arith.constant 0 : index
    %c0_34 = arith.constant 0 : index
    %c0_35 = arith.constant 0 : index
    %53 = vector.load %arg18[%c0_33, %c0_34, %c0_35] : memref<8x8x64xf32, #tpu.memory_space<vmem>>, vector<8x8x64xf32>
    tpu.vector_store %arg18[%c0_33, %c0_34, %c0_35], %52 {strides = array<i32>} : memref<8x8x64xf32, #tpu.memory_space<vmem>>, vector<8x8x64xf32>,
    %c0_36 = arith.constant 0 : index
    %c0_37 = arith.constant 0 : index
    %c0_38 = arith.constant 0 : index
    %54 = vector.load %arg18[%c0_36, %c0_37, %c0_38] : memref<8x8x64xf32, #tpu.memory_space<vmem>>, vector<8x1x64xf32>
    %55 = vector.shape_cast %54 : vector<8x1x64xf32> to vector<8x64xf32>
    %c0_39 = arith.constant 0 : index
    %c1_40 = arith.constant 1 : index
    %c0_41 = arith.constant 0 : index
    %56 = vector.load %arg18[%c0_39, %c1_40, %c0_41] : memref<8x8x64xf32, #tpu.memory_space<vmem>>, vector<8x1x64xf32>
    %57 = vector.shape_cast %56 : vector<8x1x64xf32> to vector<8x64xf32>
    %58 = arith.maximumf %55, %57 : vector<8x64xf32>
    %c0_42 = arith.constant 0 : index
    %c2 = arith.constant 2 : index
    %c0_43 = arith.constant 0 : index
    %59 = vector.load %arg18[%c0_42, %c2, %c0_43] : memref<8x8x64xf32, #tpu.memory_space<vmem>>, vector<8x1x64xf32>
    %60 = vector.shape_cast %59 : vector<8x1x64xf32> to vector<8x64xf32>
    %c0_44 = arith.constant 0 : index
    %c3 = arith.constant 3 : index
    %c0_45 = arith.constant 0 : index
    %61 = vector.load %arg18[%c0_44, %c3, %c0_45] : memref<8x8x64xf32, #tpu.memory_space<vmem>>, vector<8x1x64xf32>
    %62 = vector.shape_cast %61 : vector<8x1x64xf32> to vector<8x64xf32>
    %63 = arith.maximumf %60, %62 : vector<8x64xf32>
    %c0_46 = arith.constant 0 : index
    %c4 = arith.constant 4 : index
    %c0_47 = arith.constant 0 : index
    %64 = vector.load %arg18[%c0_46, %c4, %c0_47] : memref<8x8x64xf32, #tpu.memory_space<vmem>>, vector<8x1x64xf32>
    %65 = vector.shape_cast %64 : vector<8x1x64xf32> to vector<8x64xf32>
    %c0_48 = arith.constant 0 : index
    %c5 = arith.constant 5 : index
    %c0_49 = arith.constant 0 : index
    %66 = vector.load %arg18[%c0_48, %c5, %c0_49] : memref<8x8x64xf32, #tpu.memory_space<vmem>>, vector<8x1x64xf32>
    %67 = vector.shape_cast %66 : vector<8x1x64xf32> to vector<8x64xf32>
    %68 = arith.maximumf %65, %67 : vector<8x64xf32>
    %c0_50 = arith.constant 0 : index
    %c6 = arith.constant 6 : index
    %c0_51 = arith.constant 0 : index
    %69 = vector.load %arg18[%c0_50, %c6, %c0_51] : memref<8x8x64xf32, #tpu.memory_space<vmem>>, vector<8x1x64xf32>
    %70 = vector.shape_cast %69 : vector<8x1x64xf32> to vector<8x64xf32>
    %c0_52 = arith.constant 0 : index
    %c7 = arith.constant 7 : index
    %c0_53 = arith.constant 0 : index
    %71 = vector.load %arg18[%c0_52, %c7, %c0_53] : memref<8x8x64xf32, #tpu.memory_space<vmem>>, vector<8x1x64xf32>
    %72 = vector.shape_cast %71 : vector<8x1x64xf32> to vector<8x64xf32>
    %73 = arith.maximumf %70, %72 : vector<8x64xf32>
    %74 = tpu.concatenate %58, %63, %68, %73 in 1 : vector<8x64xf32>, vector<8x64xf32>, vector<8x64xf32>, vector<8x64xf32> -> vector<8x256xf32>
    %c0_54 = arith.constant 0 : index
    %c0_55 = arith.constant 0 : index
    %75 = vector.load %arg10[%c0_54, %c0_55] : memref<256x120xf32, #tpu.memory_space<vmem>>, vector<256x120xf32>
    %cst_56 = arith.constant dense<0.000000e+00> : vector<8x120xf32>
    %76 = tpu.matmul %74, %75, %cst_56 {dimension_numbers = #tpu.dot_dimension_numbers<[1], [0], [0], [1], [0, 0, 1, 1], [], []>} : vector<8x256xf32>, vector<256x120xf32>, vector<8x120xf32> -> vector<8x120xf32>
    %c0_57 = arith.constant 0 : index
    %c0_58 = arith.constant 0 : index
    %77 = vector.load %arg11[%c0_57, %c0_58] : memref<1x120xf32, #tpu.memory_space<vmem>>, vector<1x120xf32>
    %78 = vector.broadcast %77 : vector<1x120xf32> to vector<8x120xf32>
    %79 = arith.addf %76, %78 : vector<8x120xf32>
    %cst_59 = arith.constant 0.000000e+00 : f32
    %80 = vector.broadcast %cst_59 : f32 to vector<8x120xf32>
    %81 = arith.maximumf %79, %80 : vector<8x120xf32>
    %c0_60 = arith.constant 0 : index
    %c0_61 = arith.constant 0 : index
    %82 = vector.load %arg12[%c0_60, %c0_61] : memref<120x84xf32, #tpu.memory_space<vmem>>, vector<120x84xf32>
    %cst_62 = arith.constant dense<0.000000e+00> : vector<8x84xf32>
    %83 = tpu.matmul %81, %82, %cst_62 {dimension_numbers = #tpu.dot_dimension_numbers<[1], [0], [0], [1], [0, 0, 1, 1], [], []>} : vector<8x120xf32>, vector<120x84xf32>, vector<8x84xf32> -> vector<8x84xf32>
    %c0_63 = arith.constant 0 : index
    %c0_64 = arith.constant 0 : index
    %84 = vector.load %arg13[%c0_63, %c0_64] : memref<1x84xf32, #tpu.memory_space<vmem>>, vector<1x84xf32>
    %85 = vector.broadcast %84 : vector<1x84xf32> to vector<8x84xf32>
    %86 = arith.addf %83, %85 : vector<8x84xf32>
    %cst_65 = arith.constant 0.000000e+00 : f32
    %87 = vector.broadcast %cst_65 : f32 to vector<8x84xf32>
    %88 = arith.maximumf %86, %87 : vector<8x84xf32>
    %c0_66 = arith.constant 0 : index
    %c0_67 = arith.constant 0 : index
    %89 = vector.load %arg14[%c0_66, %c0_67] : memref<84x128xf32, #tpu.memory_space<vmem>>, vector<84x128xf32>
    %cst_68 = arith.constant dense<0.000000e+00> : vector<8x128xf32>
    %90 = tpu.matmul %88, %89, %cst_68 {dimension_numbers = #tpu.dot_dimension_numbers<[1], [0], [0], [1], [0, 0, 1, 1], [], []>} : vector<8x84xf32>, vector<84x128xf32>, vector<8x128xf32> -> vector<8x128xf32>
    %c0_69 = arith.constant 0 : index
    %c0_70 = arith.constant 0 : index
    %91 = vector.load %arg15[%c0_69, %c0_70] : memref<1x128xf32, #tpu.memory_space<vmem>>, vector<1x128xf32>
    %92 = vector.broadcast %91 : vector<1x128xf32> to vector<8x128xf32>
    %93 = arith.addf %90, %92 : vector<8x128xf32>
    %c0_71 = arith.constant 0 : index
    %c0_72 = arith.constant 0 : index
    %94 = vector.load %arg16[%c0_71, %c0_72] : memref<8x128xf32, #tpu.memory_space<vmem>>, vector<8x128xf32>
    tpu.vector_store %arg16[%c0_71, %c0_72], %93 {strides = array<i32>} : memref<8x128xf32, #tpu.memory_space<vmem>>, vector<8x128xf32>,
    return
  }
  func.func @transform_0(%arg0: i32) -> (i32, i32, i32) {
    %c0_i32 = arith.constant 0 : i32
    %c0_i32_0 = arith.constant 0 : i32
    %c0_i32_1 = arith.constant 0 : i32
    return %arg0, %c0_i32, %c0_i32_0 : i32, i32, i32
  }
  func.func @transform_1(%arg0: i32) -> (i32, i32) {
    %c0_i32 = arith.constant 0 : i32
    %c0_i32_0 = arith.constant 0 : i32
    %c0_i32_1 = arith.constant 0 : i32
    return %c0_i32, %c0_i32_0 : i32, i32
  }
  func.func @transform_2(%arg0: i32) -> (i32, i32) {
    %c0_i32 = arith.constant 0 : i32
    %c0_i32_0 = arith.constant 0 : i32
    %c0_i32_1 = arith.constant 0 : i32
    return %c0_i32, %c0_i32_0 : i32, i32
  }
  func.func @transform_3(%arg0: i32) -> (i32, i32) {
    %c0_i32 = arith.constant 0 : i32
    %c0_i32_0 = arith.constant 0 : i32
    %c0_i32_1 = arith.constant 0 : i32
    return %c0_i32, %c0_i32_0 : i32, i32
  }
  func.func @transform_4(%arg0: i32) -> (i32, i32) {
    %c0_i32 = arith.constant 0 : i32
    %c0_i32_0 = arith.constant 0 : i32
    %c0_i32_1 = arith.constant 0 : i32
    return %c0_i32, %c0_i32_0 : i32, i32
  }
  func.func @transform_5(%arg0: i32) -> (i32, i32) {
    %c0_i32 = arith.constant 0 : i32
    %c0_i32_0 = arith.constant 0 : i32
    %c0_i32_1 = arith.constant 0 : i32
    return %c0_i32, %c0_i32_0 : i32, i32
  }
  func.func @transform_6(%arg0: i32) -> (i32, i32) {
    %c0_i32 = arith.constant 0 : i32
    %c0_i32_0 = arith.constant 0 : i32
    %c0_i32_1 = arith.constant 0 : i32
    return %c0_i32, %c0_i32_0 : i32, i32
  }
  func.func @transform_7(%arg0: i32) -> (i32, i32) {
    %c0_i32 = arith.constant 0 : i32
    %c0_i32_0 = arith.constant 0 : i32
    %c0_i32_1 = arith.constant 0 : i32
    return %c0_i32, %c0_i32_0 : i32, i32
  }
  func.func @transform_8(%arg0: i32) -> (i32, i32) {
    %c0_i32 = arith.constant 0 : i32
    %c0_i32_0 = arith.constant 0 : i32
    %c0_i32_1 = arith.constant 0 : i32
    return %c0_i32, %c0_i32_0 : i32, i32
  }
  func.func @transform_9(%arg0: i32) -> (i32, i32) {
    %c0_i32 = arith.constant 0 : i32
    %c0_i32_0 = arith.constant 0 : i32
    %c0_i32_1 = arith.constant 0 : i32
    return %c0_i32, %c0_i32_0 : i32, i32
  }
  func.func @transform_10(%arg0: i32) -> (i32, i32) {
    %c0_i32 = arith.constant 0 : i32
    %c0_i32_0 = arith.constant 0 : i32
    %c0_i32_1 = arith.constant 0 : i32
    return %c0_i32, %c0_i32_0 : i32, i32
  }
  func.func @transform_11(%arg0: i32) -> (i32, i32) {
    %c0_i32 = arith.constant 0 : i32
    %c0_i32_0 = arith.constant 0 : i32
    %c0_i32_1 = arith.constant 0 : i32
    return %c0_i32, %c0_i32_0 : i32, i32
  }
  func.func @transform_12(%arg0: i32) -> (i32, i32) {
    %c0_i32 = arith.constant 0 : i32
    %c0_i32_0 = arith.constant 0 : i32
    %c0_i32_1 = arith.constant 0 : i32
    return %c0_i32, %c0_i32_0 : i32, i32
  }
  func.func @transform_13(%arg0: i32) -> (i32, i32) {
    %c0_i32 = arith.constant 0 : i32
    %c0_i32_0 = arith.constant 0 : i32
    %c0_i32_1 = arith.constant 0 : i32
    return %c0_i32, %c0_i32_0 : i32, i32
  }
  func.func @transform_14(%arg0: i32) -> (i32, i32) {
    %c0_i32 = arith.constant 0 : i32
    %c0_i32_0 = arith.constant 0 : i32
    %c0_i32_1 = arith.constant 0 : i32
    return %c0_i32, %c0_i32_0 : i32, i32
  }
  func.func @transform_15(%arg0: i32) -> (i32, i32) {
    %c0_i32 = arith.constant 0 : i32
    %c0_i32_0 = arith.constant 0 : i32
    return %arg0, %c0_i32 : i32, i32
  }
}

</mosaic_0001>

<llo_original>
// kernel: convnet_forward.1
$region0: #{convnet_forward.1}
  #allocation0 [shape = 'u32[]', space=smem, size = 0x4, offset = 0x4, fixed_abs, tag = 'smem constant byte address 0x4 - core index']
  #allocation1 [shape = 'u32[144,128]{1,0:T(1,128)}', space=vmem, size = 0x12000, scoped, tag = 'internal scratch']
  #allocation2 [shape = 'f32[8,24,72]{2,1,0:T(8,128)}', space=vmem, size = 0x18000, scoped, tag = 'scratch operand']
  #allocation3 [shape = 'f32[8,8,64]{2,1,0:T(8,128)}', space=vmem, size = 0x8000, scoped, tag = 'scratch operand']
  %s0 = inlined_call_operand.vmem [shape: f32[8,28,28], index: 0, kind: input, shape index: {}]
  %s1 = inlined_call_operand.vmem [shape: f32[140,144], index: 1, kind: input, shape index: {}]
  %s2 = inlined_call_operand.vmem [shape: f32[1,144], index: 2, kind: input, shape index: {}]
  %s3 = inlined_call_operand.vmem [shape: f32[144,72], index: 3, kind: input, shape index: {}]
  %s4 = inlined_call_operand.vmem [shape: f32[144,72], index: 4, kind: input, shape index: {}]
  %s5 = inlined_call_operand.vmem [shape: f32[360,128], index: 5, kind: input, shape index: {}]
  %s6 = inlined_call_operand.vmem [shape: f32[1,128], index: 6, kind: input, shape index: {}]
  %s7 = inlined_call_operand.vmem [shape: f32[128,64], index: 7, kind: input, shape index: {}]
  %s8 = inlined_call_operand.vmem [shape: f32[128,64], index: 8, kind: input, shape index: {}]
  %s9 = inlined_call_operand.vmem [shape: f32[256,120], index: 9, kind: input, shape index: {}]
  %s10 = inlined_call_operand.vmem [shape: f32[1,120], index: 10, kind: input, shape index: {}]
  %s11 = inlined_call_operand.vmem [shape: f32[120,84], index: 11, kind: input, shape index: {}]
  %s12 = inlined_call_operand.vmem [shape: f32[1,84], index: 12, kind: input, shape index: {}]
  %s13 = inlined_call_operand.vmem [shape: f32[84,128], index: 13, kind: input, shape index: {}]
  %s14 = inlined_call_operand.vmem [shape: f32[1,128], index: 14, kind: input, shape index: {}]
  %s15 = inlined_call_operand.vmem [shape: f32[8,128], index: 15, kind: output, shape index: {}]
  %s16 = sld [smem:[#allocation0]]
  $region70: #{convnet_forward.1} parent=0
    _
  %s18 = ssub.s32 1, %s16
  %s19 = scalar_select 0, %s18, %s16
  // Predicated region
  $region2: #{convnet_forward.1} parent=0 // pred_check
    _
  $region3: #{convnet_forward.1} parent=0 // pred_check_branch
    %21 = sbr.rel (0) target = $region5
  $region4: #{convnet_forward.1} parent=0 // pred_region
    _
  $region5: #{convnet_forward.1} parent=0 // pred_fallthru
    _
  // Predicated region
  $region6: #{convnet_forward.1} parent=0 // pred_check
    _
  $region7: #{convnet_forward.1} parent=0 // pred_check_branch
    %23 = sbr.rel (0) target = $region9
  $region8: #{convnet_forward.1} parent=0 // pred_region
    _
  $region9: #{convnet_forward.1} parent=0 // pred_fallthru
    _
  // Predicated region
  $region10: #{convnet_forward.1} parent=0 // pred_check
    _
  $region11: #{convnet_forward.1} parent=0 // pred_check_branch
    %25 = sbr.rel (0) target = $region13
  $region12: #{convnet_forward.1} parent=0 // pred_region
    _
  $region13: #{convnet_forward.1} parent=0 // pred_fallthru
    _
  // Predicated region
  $region14: #{convnet_forward.1} parent=0 // pred_check
    _
  $region15: #{convnet_forward.1} parent=0 // pred_check_branch
    %27 = sbr.rel (0) target = $region17
  $region16: #{convnet_forward.1} parent=0 // pred_region
    _
  $region17: #{convnet_forward.1} parent=0 // pred_fallthru
    _
  // Predicated region
  $region18: #{convnet_forward.1} parent=0 // pred_check
    _
  $region19: #{convnet_forward.1} parent=0 // pred_check_branch
    %29 = sbr.rel (0) target = $region21
  $region20: #{convnet_forward.1} parent=0 // pred_region
    _
  $region21: #{convnet_forward.1} parent=0 // pred_fallthru
    _
  // Predicated region
  $region22: #{convnet_forward.1} parent=0 // pred_check
    _
  $region23: #{convnet_forward.1} parent=0 // pred_check_branch
    %31 = sbr.rel (0) target = $region25
  $region24: #{convnet_forward.1} parent=0 // pred_region
    _
  $region25: #{convnet_forward.1} parent=0 // pred_fallthru
    _
  // Predicated region
  $region26: #{convnet_forward.1} parent=0 // pred_check
    _
  $region27: #{convnet_forward.1} parent=0 // pred_check_branch
    %33 = sbr.rel (0) target = $region29
  $region28: #{convnet_forward.1} parent=0 // pred_region
    _
  $region29: #{convnet_forward.1} parent=0 // pred_fallthru
    _
  // Predicated region
  $region30: #{convnet_forward.1} parent=0 // pred_check
    _
  $region31: #{convnet_forward.1} parent=0 // pred_check_branch
    %35 = sbr.rel (0) target = $region33
  $region32: #{convnet_forward.1} parent=0 // pred_region
    _
  $region33: #{convnet_forward.1} parent=0 // pred_fallthru
    _
  // Predicated region
  $region34: #{convnet_forward.1} parent=0 // pred_check
    _
  $region35: #{convnet_forward.1} parent=0 // pred_check_branch
    %37 = sbr.rel (0) target = $region37
  $region36: #{convnet_forward.1} parent=0 // pred_region
    _
  $region37: #{convnet_forward.1} parent=0 // pred_fallthru
    _
  // Predicated region
  $region38: #{convnet_forward.1} parent=0 // pred_check
    _
  $region39: #{convnet_forward.1} parent=0 // pred_check_branch
    %39 = sbr.rel (0) target = $region41
  $region40: #{convnet_forward.1} parent=0 // pred_region
    _
  $region41: #{convnet_forward.1} parent=0 // pred_fallthru
    _
  // Predicated region
  $region42: #{convnet_forward.1} parent=0 // pred_check
    _
  $region43: #{convnet_forward.1} parent=0 // pred_check_branch
    %41 = sbr.rel (0) target = $region45
  $region44: #{convnet_forward.1} parent=0 // pred_region
    _
  $region45: #{convnet_forward.1} parent=0 // pred_fallthru
    _
  // Predicated region
  $region46: #{convnet_forward.1} parent=0 // pred_check
    _
  $region47: #{convnet_forward.1} parent=0 // pred_check_branch
    %43 = sbr.rel (0) target = $region49
  $region48: #{convnet_forward.1} parent=0 // pred_region
    _
  $region49: #{convnet_forward.1} parent=0 // pred_fallthru
    _
  // Predicated region
  $region50: #{convnet_forward.1} parent=0 // pred_check
    _
  $region51: #{convnet_forward.1} parent=0 // pred_check_branch
    %45 = sbr.rel (0) target = $region53
  $region52: #{convnet_forward.1} parent=0 // pred_region
    _
  $region53: #{convnet_forward.1} parent=0 // pred_fallthru
    _
  // Predicated region
  $region54: #{convnet_forward.1} parent=0 // pred_check
    _
  $region55: #{convnet_forward.1} parent=0 // pred_check_branch
    %47 = sbr.rel (0) target = $region57
  $region56: #{convnet_forward.1} parent=0 // pred_region
    _
  $region57: #{convnet_forward.1} parent=0 // pred_fallthru
    _
  // Predicated region
  $region58: #{convnet_forward.1} parent=0 // pred_check
    _
  $region59: #{convnet_forward.1} parent=0 // pred_check_branch
    %49 = sbr.rel (0) target = $region61
  $region60: #{convnet_forward.1} parent=0 // pred_region
    _
  $region61: #{convnet_forward.1} parent=0 // pred_fallthru
    _
  %v50 = vld [vmem:[%s0] sm:$0xff]
  %v51 = vld [vmem:[%s0 + $0x8] sm:$0xff]
  %v52 = vld [vmem:[%s0 + $0x10] sm:$0xff]
  %v53 = vld [vmem:[%s0 + $0x18] sm:$0xf]
  %v54 = vld [vmem:[%s0 + $0x20] sm:$0xff]
  %v55 = vld [vmem:[%s0 + $0x28] sm:$0xff]
  %v56 = vld [vmem:[%s0 + $0x30] sm:$0xff]
  %v57 = vld [vmem:[%s0 + $0x38] sm:$0xf]
  %v58 = vld [vmem:[%s0 + $0x40] sm:$0xff]
  %v59 = vld [vmem:[%s0 + $0x48] sm:$0xff]
  %v60 = vld [vmem:[%s0 + $0x50] sm:$0xff]
  %v61 = vld [vmem:[%s0 + $0x58] sm:$0xf]
  %v62 = vld [vmem:[%s0 + $0x60] sm:$0xff]
  %v63 = vld [vmem:[%s0 + $0x68] sm:$0xff]
  %v64 = vld [vmem:[%s0 + $0x70] sm:$0xff]
  %v65 = vld [vmem:[%s0 + $0x78] sm:$0xf]
  %v66 = vld [vmem:[%s0 + $0x80] sm:$0xff]
  %v67 = vld [vmem:[%s0 + $0x88] sm:$0xff]
  %v68 = vld [vmem:[%s0 + $0x90] sm:$0xff]
  %v69 = vld [vmem:[%s0 + $0x98] sm:$0xf]
  %v70 = vld [vmem:[%s0 + $0xa0] sm:$0xff]
  %v71 = vld [vmem:[%s0 + $0xa8] sm:$0xff]
  %v72 = vld [vmem:[%s0 + $0xb0] sm:$0xff]
  %v73 = vld [vmem:[%s0 + $0xb8] sm:$0xf]
  %v74 = vld [vmem:[%s0 + $0xc0] sm:$0xff]
  %v75 = vld [vmem:[%s0 + $0xc8] sm:$0xff]
  %v76 = vld [vmem:[%s0 + $0xd0] sm:$0xff]
  %v77 = vld [vmem:[%s0 + $0xd8] sm:$0xf]
  %v78 = vld [vmem:[%s0 + $0xe0] sm:$0xff]
  %v79 = vld [vmem:[%s0 + $0xe8] sm:$0xff]
  %v80 = vld [vmem:[%s0 + $0xf0] sm:$0xff]
  %v81 = vld [vmem:[%s0 + $0xf8] sm:$0xf]
  %vm114 = vcmask 1046528
  %v115 = vrot.slane %v50, 1
  %v116 = vrot.slane %v51, 1
  %v117 = vsel %vm114, %v115, %v116
  %v118 = vrot.slane %v52, 1
  %v119 = vsel %vm114, %v116, %v118
  %v120 = vrot.slane %v53, 1
  %v121 = vsel %vm114, %v118, %v120
  %v122 = vrot.slane %v54, 1
  %v123 = vrot.slane %v55, 1
  %v124 = vsel %vm114, %v122, %v123
  %v125 = vrot.slane %v56, 1
  %v126 = vsel %vm114, %v123, %v125
  %v127 = vrot.slane %v57, 1
  %v128 = vsel %vm114, %v125, %v127
  %v129 = vrot.slane %v58, 1
  %v130 = vrot.slane %v59, 1
  %v131 = vsel %vm114, %v129, %v130
  %v132 = vrot.slane %v60, 1
  %v133 = vsel %vm114, %v130, %v132
  %v134 = vrot.slane %v61, 1
  %v135 = vsel %vm114, %v132, %v134
  %v136 = vrot.slane %v62, 1
  %v137 = vrot.slane %v63, 1
  %v138 = vsel %vm114, %v136, %v137
  %v139 = vrot.slane %v64, 1
  %v140 = vsel %vm114, %v137, %v139
  %v141 = vrot.slane %v65, 1
  %v142 = vsel %vm114, %v139, %v141
  %v143 = vrot.slane %v66, 1
  %v144 = vrot.slane %v67, 1
  %v145 = vsel %vm114, %v143, %v144
  %v146 = vrot.slane %v68, 1
  %v147 = vsel %vm114, %v144, %v146
  %v148 = vrot.slane %v69, 1
  %v149 = vsel %vm114, %v146, %v148
  %v150 = vrot.slane %v70, 1
  %v151 = vrot.slane %v71, 1
  %v152 = vsel %vm114, %v150, %v151
  %v153 = vrot.slane %v72, 1
  %v154 = vsel %vm114, %v151, %v153
  %v155 = vrot.slane %v73, 1
  %v156 = vsel %vm114, %v153, %v155
  %v157 = vrot.slane %v74, 1
  %v158 = vrot.slane %v75, 1
  %v159 = vsel %vm114, %v157, %v158
  %v160 = vrot.slane %v76, 1
  %v161 = vsel %vm114, %v158, %v160
  %v162 = vrot.slane %v77, 1
  %v163 = vsel %vm114, %v160, %v162
  %v164 = vrot.slane %v78, 1
  %v165 = vrot.slane %v79, 1
  %v166 = vsel %vm114, %v164, %v165
  %v167 = vrot.slane %v80, 1
  %v168 = vsel %vm114, %v165, %v167
  %v169 = vrot.slane %v81, 1
  %v170 = vsel %vm114, %v167, %v169
  %vm171 = vcmask 1045504
  %v172 = vrot.slane %v50, 2
  %v173 = vrot.slane %v51, 2
  %v174 = vsel %vm171, %v172, %v173
  %v175 = vrot.slane %v52, 2
  %v176 = vsel %vm171, %v173, %v175
  %v177 = vrot.slane %v53, 2
  %v178 = vsel %vm171, %v175, %v177
  %v179 = vrot.slane %v54, 2
  %v180 = vrot.slane %v55, 2
  %v181 = vsel %vm171, %v179, %v180
  %v182 = vrot.slane %v56, 2
  %v183 = vsel %vm171, %v180, %v182
  %v184 = vrot.slane %v57, 2
  %v185 = vsel %vm171, %v182, %v184
  %v186 = vrot.slane %v58, 2
  %v187 = vrot.slane %v59, 2
  %v188 = vsel %vm171, %v186, %v187
  %v189 = vrot.slane %v60, 2
  %v190 = vsel %vm171, %v187, %v189
  %v191 = vrot.slane %v61, 2
  %v192 = vsel %vm171, %v189, %v191
  %v193 = vrot.slane %v62, 2
  %v194 = vrot.slane %v63, 2
  %v195 = vsel %vm171, %v193, %v194
  %v196 = vrot.slane %v64, 2
  %v197 = vsel %vm171, %v194, %v196
  %v198 = vrot.slane %v65, 2
  %v199 = vsel %vm171, %v196, %v198
  %v200 = vrot.slane %v66, 2
  %v201 = vrot.slane %v67, 2
  %v202 = vsel %vm171, %v200, %v201
  %v203 = vrot.slane %v68, 2
  %v204 = vsel %vm171, %v201, %v203
  %v205 = vrot.slane %v69, 2
  %v206 = vsel %vm171, %v203, %v205
  %v207 = vrot.slane %v70, 2
  %v208 = vrot.slane %v71, 2
  %v209 = vsel %vm171, %v207, %v208
  %v210 = vrot.slane %v72, 2
  %v211 = vsel %vm171, %v208, %v210
  %v212 = vrot.slane %v73, 2
  %v213 = vsel %vm171, %v210, %v212
  %v214 = vrot.slane %v74, 2
  %v215 = vrot.slane %v75, 2
  %v216 = vsel %vm171, %v214, %v215
  %v217 = vrot.slane %v76, 2
  %v218 = vsel %vm171, %v215, %v217
  %v219 = vrot.slane %v77, 2
  %v220 = vsel %vm171, %v217, %v219
  %v221 = vrot.slane %v78, 2
  %v222 = vrot.slane %v79, 2
  %v223 = vsel %vm171, %v221, %v222
  %v224 = vrot.slane %v80, 2
  %v225 = vsel %vm171, %v222, %v224
  %v226 = vrot.slane %v81, 2
  %v227 = vsel %vm171, %v224, %v226
  %vm228 = vcmask 1044480
  %v229 = vrot.slane %v50, 3
  %v230 = vrot.slane %v51, 3
  %v231 = vsel %vm228, %v229, %v230
  %v232 = vrot.slane %v52, 3
  %v233 = vsel %vm228, %v230, %v232
  %v234 = vrot.slane %v53, 3
  %v235 = vsel %vm228, %v232, %v234
  %v236 = vrot.slane %v54, 3
  %v237 = vrot.slane %v55, 3
  %v238 = vsel %vm228, %v236, %v237
  %v239 = vrot.slane %v56, 3
  %v240 = vsel %vm228, %v237, %v239
  %v241 = vrot.slane %v57, 3
  %v242 = vsel %vm228, %v239, %v241
  %v243 = vrot.slane %v58, 3
  %v244 = vrot.slane %v59, 3
  %v245 = vsel %vm228, %v243, %v244
  %v246 = vrot.slane %v60, 3
  %v247 = vsel %vm228, %v244, %v246
  %v248 = vrot.slane %v61, 3
  %v249 = vsel %vm228, %v246, %v248
  %v250 = vrot.slane %v62, 3
  %v251 = vrot.slane %v63, 3
  %v252 = vsel %vm228, %v250, %v251
  %v253 = vrot.slane %v64, 3
  %v254 = vsel %vm228, %v251, %v253
  %v255 = vrot.slane %v65, 3
  %v256 = vsel %vm228, %v253, %v255
  %v257 = vrot.slane %v66, 3
  %v258 = vrot.slane %v67, 3
  %v259 = vsel %vm228, %v257, %v258
  %v260 = vrot.slane %v68, 3
  %v261 = vsel %vm228, %v258, %v260
  %v262 = vrot.slane %v69, 3
  %v263 = vsel %vm228, %v260, %v262
  %v264 = vrot.slane %v70, 3
  %v265 = vrot.slane %v71, 3
  %v266 = vsel %vm228, %v264, %v265
  %v267 = vrot.slane %v72, 3
  %v268 = vsel %vm228, %v265, %v267
  %v269 = vrot.slane %v73, 3
  %v270 = vsel %vm228, %v267, %v269
  %v271 = vrot.slane %v74, 3
  %v272 = vrot.slane %v75, 3
  %v273 = vsel %vm228, %v271, %v272
  %v274 = vrot.slane %v76, 3
  %v275 = vsel %vm228, %v272, %v274
  %v276 = vrot.slane %v77, 3
  %v277 = vsel %vm228, %v274, %v276
  %v278 = vrot.slane %v78, 3
  %v279 = vrot.slane %v79, 3
  %v280 = vsel %vm228, %v278, %v279
  %v281 = vrot.slane %v80, 3
  %v282 = vsel %vm228, %v279, %v281
  %v283 = vrot.slane %v81, 3
  %v284 = vsel %vm228, %v281, %v283
  %vm285 = vcmask 1043456
  %v286 = vrot.slane %v50, 4
  %v287 = vrot.slane %v51, 4
  %v288 = vsel %vm285, %v286, %v287
  %v289 = vrot.slane %v52, 4
  %v290 = vsel %vm285, %v287, %v289
  %v291 = vrot.slane %v53, 4
  %v292 = vsel %vm285, %v289, %v291
  %v293 = vrot.slane %v54, 4
  %v294 = vrot.slane %v55, 4
  %v295 = vsel %vm285, %v293, %v294
  %v296 = vrot.slane %v56, 4
  %v297 = vsel %vm285, %v294, %v296
  %v298 = vrot.slane %v57, 4
  %v299 = vsel %vm285, %v296, %v298
  %v300 = vrot.slane %v58, 4
  %v301 = vrot.slane %v59, 4
  %v302 = vsel %vm285, %v300, %v301
  %v303 = vrot.slane %v60, 4
  %v304 = vsel %vm285, %v301, %v303
  %v305 = vrot.slane %v61, 4
  %v306 = vsel %vm285, %v303, %v305
  %v307 = vrot.slane %v62, 4
  %v308 = vrot.slane %v63, 4
  %v309 = vsel %vm285, %v307, %v308
  %v310 = vrot.slane %v64, 4
  %v311 = vsel %vm285, %v308, %v310
  %v312 = vrot.slane %v65, 4
  %v313 = vsel %vm285, %v310, %v312
  %v314 = vrot.slane %v66, 4
  %v315 = vrot.slane %v67, 4
  %v316 = vsel %vm285, %v314, %v315
  %v317 = vrot.slane %v68, 4
  %v318 = vsel %vm285, %v315, %v317
  %v319 = vrot.slane %v69, 4
  %v320 = vsel %vm285, %v317, %v319
  %v321 = vrot.slane %v70, 4
  %v322 = vrot.slane %v71, 4
  %v323 = vsel %vm285, %v321, %v322
  %v324 = vrot.slane %v72, 4
  %v325 = vsel %vm285, %v322, %v324
  %v326 = vrot.slane %v73, 4
  %v327 = vsel %vm285, %v324, %v326
  %v328 = vrot.slane %v74, 4
  %v329 = vrot.slane %v75, 4
  %v330 = vsel %vm285, %v328, %v329
  %v331 = vrot.slane %v76, 4
  %v332 = vsel %vm285, %v329, %v331
  %v333 = vrot.slane %v77, 4
  %v334 = vsel %vm285, %v331, %v333
  %v335 = vrot.slane %v78, 4
  %v336 = vrot.slane %v79, 4
  %v337 = vsel %vm285, %v335, %v336
  %v338 = vrot.slane %v80, 4
  %v339 = vsel %vm285, %v336, %v338
  %v340 = vrot.slane %v81, 4
  %v341 = vsel %vm285, %v338, %v340
  %342 = vrot.lane.b32.xlu0 %v117, 28
  %v343 = vpop.permute.xlu0 %342
  %344 = vrot.lane.b32.xlu0 %v119, 28
  %v345 = vpop.permute.xlu0 %344
  %346 = vrot.lane.b32.xlu0 %v121, 28
  %v347 = vpop.permute.xlu0 %346
  %348 = vrot.lane.b32.xlu0 %v124, 28
  %v349 = vpop.permute.xlu0 %348
  %350 = vrot.lane.b32.xlu0 %v126, 28
  %v351 = vpop.permute.xlu0 %350
  %352 = vrot.lane.b32.xlu0 %v128, 28
  %v353 = vpop.permute.xlu0 %352
  %354 = vrot.lane.b32.xlu0 %v131, 28
  %v355 = vpop.permute.xlu0 %354
  %356 = vrot.lane.b32.xlu0 %v133, 28
  %v357 = vpop.permute.xlu0 %356
  %358 = vrot.lane.b32.xlu0 %v135, 28
  %v359 = vpop.permute.xlu0 %358
  %360 = vrot.lane.b32.xlu0 %v138, 28
  %v361 = vpop.permute.xlu0 %360
  %362 = vrot.lane.b32.xlu0 %v140, 28
  %v363 = vpop.permute.xlu0 %362
  %364 = vrot.lane.b32.xlu0 %v142, 28
  %v365 = vpop.permute.xlu0 %364
  %366 = vrot.lane.b32.xlu0 %v145, 28
  %v367 = vpop.permute.xlu0 %366
  %368 = vrot.lane.b32.xlu0 %v147, 28
  %v369 = vpop.permute.xlu0 %368
  %370 = vrot.lane.b32.xlu0 %v149, 28
  %v371 = vpop.permute.xlu0 %370
  %372 = vrot.lane.b32.xlu0 %v152, 28
  %v373 = vpop.permute.xlu0 %372
  %374 = vrot.lane.b32.xlu0 %v154, 28
  %v375 = vpop.permute.xlu0 %374
  %376 = vrot.lane.b32.xlu0 %v156, 28
  %v377 = vpop.permute.xlu0 %376
  %378 = vrot.lane.b32.xlu0 %v159, 28
  %v379 = vpop.permute.xlu0 %378
  %380 = vrot.lane.b32.xlu0 %v161, 28
  %v381 = vpop.permute.xlu0 %380
  %382 = vrot.lane.b32.xlu0 %v163, 28
  %v383 = vpop.permute.xlu0 %382
  %384 = vrot.lane.b32.xlu0 %v166, 28
  %v385 = vpop.permute.xlu0 %384
  %386 = vrot.lane.b32.xlu0 %v168, 28
  %v387 = vpop.permute.xlu0 %386
  %388 = vrot.lane.b32.xlu0 %v170, 28
  %v389 = vpop.permute.xlu0 %388
  %414 = vrot.lane.b32.xlu0 %v174, 56
  %v415 = vpop.permute.xlu0 %414
  %416 = vrot.lane.b32.xlu0 %v176, 56
  %v417 = vpop.permute.xlu0 %416
  %418 = vrot.lane.b32.xlu0 %v178, 56
  %v419 = vpop.permute.xlu0 %418
  %420 = vrot.lane.b32.xlu0 %v181, 56
  %v421 = vpop.permute.xlu0 %420
  %422 = vrot.lane.b32.xlu0 %v183, 56
  %v423 = vpop.permute.xlu0 %422
  %424 = vrot.lane.b32.xlu0 %v185, 56
  %v425 = vpop.permute.xlu0 %424
  %426 = vrot.lane.b32.xlu0 %v188, 56
  %v427 = vpop.permute.xlu0 %426
  %428 = vrot.lane.b32.xlu0 %v190, 56
  %v429 = vpop.permute.xlu0 %428
  %430 = vrot.lane.b32.xlu0 %v192, 56
  %v431 = vpop.permute.xlu0 %430
  %432 = vrot.lane.b32.xlu0 %v195, 56
  %v433 = vpop.permute.xlu0 %432
  %434 = vrot.lane.b32.xlu0 %v197, 56
  %v435 = vpop.permute.xlu0 %434
  %436 = vrot.lane.b32.xlu0 %v199, 56
  %v437 = vpop.permute.xlu0 %436
  %438 = vrot.lane.b32.xlu0 %v202, 56
  %v439 = vpop.permute.xlu0 %438
  %440 = vrot.lane.b32.xlu0 %v204, 56
  %v441 = vpop.permute.xlu0 %440
  %442 = vrot.lane.b32.xlu0 %v206, 56
  %v443 = vpop.permute.xlu0 %442
  %444 = vrot.lane.b32.xlu0 %v209, 56
  %v445 = vpop.permute.xlu0 %444
  %446 = vrot.lane.b32.xlu0 %v211, 56
  %v447 = vpop.permute.xlu0 %446
  %448 = vrot.lane.b32.xlu0 %v213, 56
  %v449 = vpop.permute.xlu0 %448
  %450 = vrot.lane.b32.xlu0 %v216, 56
  %v451 = vpop.permute.xlu0 %450
  %452 = vrot.lane.b32.xlu0 %v218, 56
  %v453 = vpop.permute.xlu0 %452
  %454 = vrot.lane.b32.xlu0 %v220, 56
  %v455 = vpop.permute.xlu0 %454
  %456 = vrot.lane.b32.xlu0 %v223, 56
  %v457 = vpop.permute.xlu0 %456
  %458 = vrot.lane.b32.xlu0 %v225, 56
  %v459 = vpop.permute.xlu0 %458
  %460 = vrot.lane.b32.xlu0 %v227, 56
  %v461 = vpop.permute.xlu0 %460
  %486 = vrot.lane.b32.xlu0 %v231, 84
  %v487 = vpop.permute.xlu0 %486
  %488 = vrot.lane.b32.xlu0 %v233, 84
  %v489 = vpop.permute.xlu0 %488
  %490 = vrot.lane.b32.xlu0 %v235, 84
  %v491 = vpop.permute.xlu0 %490
  %492 = vrot.lane.b32.xlu0 %v238, 84
  %v493 = vpop.permute.xlu0 %492
  %494 = vrot.lane.b32.xlu0 %v240, 84
  %v495 = vpop.permute.xlu0 %494
  %496 = vrot.lane.b32.xlu0 %v242, 84
  %v497 = vpop.permute.xlu0 %496
  %498 = vrot.lane.b32.xlu0 %v245, 84
  %v499 = vpop.permute.xlu0 %498
  %500 = vrot.lane.b32.xlu0 %v247, 84
  %v501 = vpop.permute.xlu0 %500
  %502 = vrot.lane.b32.xlu0 %v249, 84
  %v503 = vpop.permute.xlu0 %502
  %504 = vrot.lane.b32.xlu0 %v252, 84
  %v505 = vpop.permute.xlu0 %504
  %506 = vrot.lane.b32.xlu0 %v254, 84
  %v507 = vpop.permute.xlu0 %506
  %508 = vrot.lane.b32.xlu0 %v256, 84
  %v509 = vpop.permute.xlu0 %508
  %510 = vrot.lane.b32.xlu0 %v259, 84
  %v511 = vpop.permute.xlu0 %510
  %512 = vrot.lane.b32.xlu0 %v261, 84
  %v513 = vpop.permute.xlu0 %512
  %514 = vrot.lane.b32.xlu0 %v263, 84
  %v515 = vpop.permute.xlu0 %514
  %516 = vrot.lane.b32.xlu0 %v266, 84
  %v517 = vpop.permute.xlu0 %516
  %518 = vrot.lane.b32.xlu0 %v268, 84
  %v519 = vpop.permute.xlu0 %518
  %520 = vrot.lane.b32.xlu0 %v270, 84
  %v521 = vpop.permute.xlu0 %520
  %522 = vrot.lane.b32.xlu0 %v273, 84
  %v523 = vpop.permute.xlu0 %522
  %524 = vrot.lane.b32.xlu0 %v275, 84
  %v525 = vpop.permute.xlu0 %524
  %526 = vrot.lane.b32.xlu0 %v277, 84
  %v527 = vpop.permute.xlu0 %526
  %528 = vrot.lane.b32.xlu0 %v280, 84
  %v529 = vpop.permute.xlu0 %528
  %530 = vrot.lane.b32.xlu0 %v282, 84
  %v531 = vpop.permute.xlu0 %530
  %532 = vrot.lane.b32.xlu0 %v284, 84
  %v533 = vpop.permute.xlu0 %532
  %558 = vrot.lane.b32.xlu0 %v288, 112
  %v559 = vpop.permute.xlu0 %558
  %560 = vrot.lane.b32.xlu0 %v290, 112
  %v561 = vpop.permute.xlu0 %560
  %562 = vrot.lane.b32.xlu0 %v292, 112
  %v563 = vpop.permute.xlu0 %562
  %564 = vrot.lane.b32.xlu0 %v295, 112
  %v565 = vpop.permute.xlu0 %564
  %566 = vrot.lane.b32.xlu0 %v297, 112
  %v567 = vpop.permute.xlu0 %566
  %568 = vrot.lane.b32.xlu0 %v299, 112
  %v569 = vpop.permute.xlu0 %568
  %570 = vrot.lane.b32.xlu0 %v302, 112
  %v571 = vpop.permute.xlu0 %570
  %572 = vrot.lane.b32.xlu0 %v304, 112
  %v573 = vpop.permute.xlu0 %572
  %574 = vrot.lane.b32.xlu0 %v306, 112
  %v575 = vpop.permute.xlu0 %574
  %576 = vrot.lane.b32.xlu0 %v309, 112
  %v577 = vpop.permute.xlu0 %576
  %578 = vrot.lane.b32.xlu0 %v311, 112
  %v579 = vpop.permute.xlu0 %578
  %580 = vrot.lane.b32.xlu0 %v313, 112
  %v581 = vpop.permute.xlu0 %580
  %582 = vrot.lane.b32.xlu0 %v316, 112
  %v583 = vpop.permute.xlu0 %582
  %584 = vrot.lane.b32.xlu0 %v318, 112
  %v585 = vpop.permute.xlu0 %584
  %586 = vrot.lane.b32.xlu0 %v320, 112
  %v587 = vpop.permute.xlu0 %586
  %588 = vrot.lane.b32.xlu0 %v323, 112
  %v589 = vpop.permute.xlu0 %588
  %590 = vrot.lane.b32.xlu0 %v325, 112
  %v591 = vpop.permute.xlu0 %590
  %592 = vrot.lane.b32.xlu0 %v327, 112
  %v593 = vpop.permute.xlu0 %592
  %594 = vrot.lane.b32.xlu0 %v330, 112
  %v595 = vpop.permute.xlu0 %594
  %596 = vrot.lane.b32.xlu0 %v332, 112
  %v597 = vpop.permute.xlu0 %596
  %598 = vrot.lane.b32.xlu0 %v334, 112
  %v599 = vpop.permute.xlu0 %598
  %600 = vrot.lane.b32.xlu0 %v337, 112
  %v601 = vpop.permute.xlu0 %600
  %602 = vrot.lane.b32.xlu0 %v339, 112
  %v603 = vpop.permute.xlu0 %602
  %604 = vrot.lane.b32.xlu0 %v341, 112
  %v605 = vpop.permute.xlu0 %604
  %vm630 = vcmask 228352
  %v631 = vsel %vm630, %v50, %v343
  %v632 = vsel %vm630, %v51, %v345
  %v633 = vsel %vm630, %v52, %v347
  %v634 = vsel %vm630, %v54, %v349
  %v635 = vsel %vm630, %v55, %v351
  %v636 = vsel %vm630, %v56, %v353
  %v637 = vsel %vm630, %v58, %v355
  %v638 = vsel %vm630, %v59, %v357
  %v639 = vsel %vm630, %v60, %v359
  %v640 = vsel %vm630, %v62, %v361
  %v641 = vsel %vm630, %v63, %v363
  %v642 = vsel %vm630, %v64, %v365
  %v643 = vsel %vm630, %v66, %v367
  %v644 = vsel %vm630, %v67, %v369
  %v645 = vsel %vm630, %v68, %v371
  %v646 = vsel %vm630, %v70, %v373
  %v647 = vsel %vm630, %v71, %v375
  %v648 = vsel %vm630, %v72, %v377
  %v649 = vsel %vm630, %v74, %v379
  %v650 = vsel %vm630, %v75, %v381
  %v651 = vsel %vm630, %v76, %v383
  %v652 = vsel %vm630, %v78, %v385
  %v653 = vsel %vm630, %v79, %v387
  %v654 = vsel %vm630, %v80, %v389
  %vm655 = vcmask 457728
  %v656 = vsel %vm655, %v631, %v415
  %v657 = vsel %vm655, %v632, %v417
  %v658 = vsel %vm655, %v633, %v419
  %v659 = vsel %vm655, %v634, %v421
  %v660 = vsel %vm655, %v635, %v423
  %v661 = vsel %vm655, %v636, %v425
  %v662 = vsel %vm655, %v637, %v427
  %v663 = vsel %vm655, %v638, %v429
  %v664 = vsel %vm655, %v639, %v431
  %v665 = vsel %vm655, %v640, %v433
  %v666 = vsel %vm655, %v641, %v435
  %v667 = vsel %vm655, %v642, %v437
  %v668 = vsel %vm655, %v643, %v439
  %v669 = vsel %vm655, %v644, %v441
  %v670 = vsel %vm655, %v645, %v443
  %v671 = vsel %vm655, %v646, %v445
  %v672 = vsel %vm655, %v647, %v447
  %v673 = vsel %vm655, %v648, %v449
  %v674 = vsel %vm655, %v649, %v451
  %v675 = vsel %vm655, %v650, %v453
  %v676 = vsel %vm655, %v651, %v455
  %v677 = vsel %vm655, %v652, %v457
  %v678 = vsel %vm655, %v653, %v459
  %v679 = vsel %vm655, %v654, %v461
  %vm680 = vcmask 687104
  %v681 = vsel %vm680, %v656, %v487
  %v682 = vsel %vm680, %v657, %v489
  %v683 = vsel %vm680, %v658, %v491
  %v684 = vsel %vm680, %v659, %v493
  %v685 = vsel %vm680, %v660, %v495
  %v686 = vsel %vm680, %v661, %v497
  %v687 = vsel %vm680, %v662, %v499
  %v688 = vsel %vm680, %v663, %v501
  %v689 = vsel %vm680, %v664, %v503
  %v690 = vsel %vm680, %v665, %v505
  %v691 = vsel %vm680, %v666, %v507
  %v692 = vsel %vm680, %v667, %v509
  %v693 = vsel %vm680, %v668, %v511
  %v694 = vsel %vm680, %v669, %v513
  %v695 = vsel %vm680, %v670, %v515
  %v696 = vsel %vm680, %v671, %v517
  %v697 = vsel %vm680, %v672, %v519
  %v698 = vsel %vm680, %v673, %v521
  %v699 = vsel %vm680, %v674, %v523
  %v700 = vsel %vm680, %v675, %v525
  %v701 = vsel %vm680, %v676, %v527
  %v702 = vsel %vm680, %v677, %v529
  %v703 = vsel %vm680, %v678, %v531
  %v704 = vsel %vm680, %v679, %v533
  %vm705 = vcmask 916480
  %v706 = vsel %vm705, %v681, %v559
  %v707 = vsel %vm705, %v682, %v561
  %v708 = vsel %vm705, %v683, %v563
  %v709 = vsel %vm705, %v684, %v565
  %v710 = vsel %vm705, %v685, %v567
  %v711 = vsel %vm705, %v686, %v569
  %v712 = vsel %vm705, %v687, %v571
  %v713 = vsel %vm705, %v688, %v573
  %v714 = vsel %vm705, %v689, %v575
  %v715 = vsel %vm705, %v690, %v577
  %v716 = vsel %vm705, %v691, %v579
  %v717 = vsel %vm705, %v692, %v581
  %v718 = vsel %vm705, %v693, %v583
  %v719 = vsel %vm705, %v694, %v585
  %v720 = vsel %vm705, %v695, %v587
  %v721 = vsel %vm705, %v696, %v589
  %v722 = vsel %vm705, %v697, %v591
  %v723 = vsel %vm705, %v698, %v593
  %v724 = vsel %vm705, %v699, %v595
  %v725 = vsel %vm705, %v700, %v597
  %v726 = vsel %vm705, %v701, %v599
  %v727 = vsel %vm705, %v702, %v601
  %v728 = vsel %vm705, %v703, %v603
  %v729 = vsel %vm705, %v704, %v605
  %v730 = vld [vmem:[%s1] sm:$0xff]
  %v731 = vld [vmem:[%s1 + $0x8] sm:$0xff]
  %v732 = vld [vmem:[%s1 + $0x10] sm:$0xff]
  %v733 = vld [vmem:[%s1 + $0x18] sm:$0xff]
  %v734 = vld [vmem:[%s1 + $0x20] sm:$0xff]
  %v735 = vld [vmem:[%s1 + $0x28] sm:$0xff]
  %v736 = vld [vmem:[%s1 + $0x30] sm:$0xff]
  %v737 = vld [vmem:[%s1 + $0x38] sm:$0xff]
  %v738 = vld [vmem:[%s1 + $0x40] sm:$0xff]
  %v739 = vld [vmem:[%s1 + $0x48] sm:$0xff]
  %v740 = vld [vmem:[%s1 + $0x50] sm:$0xff]
  %v741 = vld [vmem:[%s1 + $0x58] sm:$0xff]
  %v742 = vld [vmem:[%s1 + $0x60] sm:$0xff]
  %v743 = vld [vmem:[%s1 + $0x68] sm:$0xff]
  %v744 = vld [vmem:[%s1 + $0x70] sm:$0xff]
  %v745 = vld [vmem:[%s1 + $0x78] sm:$0xff]
  %v746 = vld [vmem:[%s1 + $0x80] sm:$0xff]
  %v747 = vld [vmem:[%s1 + $0x88] sm:$0xff]
  %v748 = vld [vmem:[%s1 + $0x90] sm:$0xff]
  %v749 = vld [vmem:[%s1 + $0x98] sm:$0xff]
  %v750 = vld [vmem:[%s1 + $0xa0] sm:$0xff]
  %v751 = vld [vmem:[%s1 + $0xa8] sm:$0xff]
  %v752 = vld [vmem:[%s1 + $0xb0] sm:$0xff]
  %v753 = vld [vmem:[%s1 + $0xb8] sm:$0xff]
  %v754 = vld [vmem:[%s1 + $0xc0] sm:$0xff]
  %v755 = vld [vmem:[%s1 + $0xc8] sm:$0xff]
  %v756 = vld [vmem:[%s1 + $0xd0] sm:$0xff]
  %v757 = vld [vmem:[%s1 + $0xd8] sm:$0xff]
  %v758 = vld [vmem:[%s1 + $0xe0] sm:$0xff]
  %v759 = vld [vmem:[%s1 + $0xe8] sm:$0xff]
  %v760 = vld [vmem:[%s1 + $0xf0] sm:$0xff]
  %v761 = vld [vmem:[%s1 + $0xf8] sm:$0xff]
  %v762 = vld [vmem:[%s1 + $0x100] sm:$0xff]
  %v763 = vld [vmem:[%s1 + $0x108] sm:$0xff]
  %v764 = vld [vmem:[%s1 + $0x110] sm:$0xf]
  %v765 = vld [vmem:[%s1 + $0x118] sm:$0xf]
  %v766 = vld [vmem:[%s2] sm:$0x3]
  %v768 = vlaneseq
  %v769 = vshrl.u32 %v768, 7
  %v770 = vsub.s32 0, %v769
  %v771 = vrot.slane %v766, %v770
  %v772 = vlaneseq
  %v773 = vshrl.u32 %v772, 7
  %v774 = vsub.s32 1, %v773
  %v775 = vrot.slane %v766, %v774
  %vm778 = vcmask 97280
  %v779 = vsel %vm778, %v559, 0
  %v781 = vsel %vm778, %v561, 0
  %v783 = vsel %vm778, %v563, 0
  %v785 = vsel %vm778, %v565, 0
  %v787 = vsel %vm778, %v567, 0
  %v789 = vsel %vm778, %v569, 0
  %v791 = vsel %vm778, %v571, 0
  %v793 = vsel %vm778, %v573, 0
  %v795 = vsel %vm778, %v575, 0
  %v797 = vsel %vm778, %v577, 0
  %v799 = vsel %vm778, %v579, 0
  %v801 = vsel %vm778, %v581, 0
  %v803 = vsel %vm778, %v583, 0
  %v805 = vsel %vm778, %v585, 0
  %v807 = vsel %vm778, %v587, 0
  %v809 = vsel %vm778, %v589, 0
  %v811 = vsel %vm778, %v591, 0
  %v813 = vsel %vm778, %v593, 0
  %v815 = vsel %vm778, %v595, 0
  %v817 = vsel %vm778, %v597, 0
  %v819 = vsel %vm778, %v599, 0
  %v821 = vsel %vm778, %v601, 0
  %v823 = vsel %vm778, %v603, 0
  %v825 = vsel %vm778, %v605, 0
  %v828 = vsel %vm285, %v764, 0
  %v831 = vsel %vm285, %v765, 0
  %833 = vmatprep.subr.mxu0 %v761
  %834 = vmatpush1.msra.mxu0 %v760
  %835 = vmatprep.subr.mxu0 %v759
  %836 = vmatpush1.msra.mxu0 %v758
  %837 = vmatprep.subr.mxu0 %v757
  %838 = vmatpush1.msra.mxu0 %v756
  %839 = vmatprep.subr.mxu0 %v755
  %840 = vmatpush1.msra.mxu0 %v754
  %841 = vmatprep.subr.mxu0 %v753
  %842 = vmatpush1.msra.mxu0 %v752
  %843 = vmatprep.subr.mxu0 %v751
  %844 = vmatpush1.msra.mxu0 %v750
  %845 = vmatprep.subr.mxu0 %v749
  %846 = vmatpush1.msra.mxu0 %v748
  %847 = vmatprep.subr.mxu0 %v747
  %848 = vmatpush1.msra.mxu0 %v746
  %849 = vmatprep.subr.mxu0 %v745
  %850 = vmatpush1.msra.mxu0 %v744
  %851 = vmatprep.subr.mxu0 %v743
  %852 = vmatpush1.msra.mxu0 %v742
  %853 = vmatprep.subr.mxu0 %v741
  %854 = vmatpush1.msra.mxu0 %v740
  %855 = vmatprep.subr.mxu0 %v739
  %856 = vmatpush1.msra.mxu0 %v738
  %857 = vmatprep.subr.mxu0 %v737
  %858 = vmatpush1.msra.mxu0 %v736
  %859 = vmatprep.subr.mxu0 %v735
  %860 = vmatpush1.msra.mxu0 %v734
  %861 = vmatprep.subr.mxu0 %v733
  %862 = vmatpush1.msra.mxu0 %v732
  %863 = vmatprep.subr.mxu0 %v731
  %864 = vmatpush1.msra.mxu0 %v730
  %865 = vmatprep.subr.mxu0 0.0
  %866 = vmatpush2.msra.mxu0 0.0
  %867 = vmatprep.subr.mxu0 0.0
  %868 = vmatpush2.msra.mxu0 0.0
  %869 = vmatprep.subr.mxu0 0.0
  %870 = vmatpush2.msra.mxu0 0.0
  %871 = vmatprep.subr.mxu0 0.0
  %872 = vmatpush2.msra.mxu0 0.0
  %873 = vmatprep.subr.mxu0 0.0
  %874 = vmatpush2.msra.mxu0 0.0
  %875 = vmatprep.subr.mxu0 0.0
  %876 = vmatpush2.msra.mxu0 0.0
  %877 = vmatprep.subr.mxu0 0.0
  %878 = vmatpush2.msra.mxu0 0.0
  %879 = vmatprep.subr.mxu0 0.0
  %880 = vmatpush2.msra.mxu0 0.0
  %881 = vmatprep.subr.mxu0 0.0
  %882 = vmatpush2.msra.mxu0 0.0
  %883 = vmatprep.subr.mxu0 0.0
  %884 = vmatpush2.msra.mxu0 0.0
  %885 = vmatprep.subr.mxu0 0.0
  %886 = vmatpush2.msra.mxu0 0.0
  %887 = vmatprep.subr.mxu0 0.0
  %888 = vmatpush2.msra.mxu0 0.0
  %889 = vmatprep.subr.mxu0 0.0
  %890 = vmatpush2.msra.mxu0 0.0
  %891 = vmatprep.subr.mxu0 0.0
  %892 = vmatpush2.msra.mxu0 0.0
  %893 = vmatprep.subr.mxu0 %v831
  %894 = vmatpush2.msra.mxu0 %v828
  %895 = vmatprep.subr.mxu0 %v763
  %896 = vmatpush2.msra.mxu0 %v762
  %897 = vmatprep.mubr.f32.mxu0 %v779
  %898 = vmatmul.mubr.f32.gmra.mxu0 %v706
  %v899 = vpop.f32.mrf.mxu0
  %v900 = vadd.f32 %v771, %v899
  %v901 = vpop.f32.mrf.mxu0
  %v902 = vadd.f32 %v775, %v901
  %903 = vmatprep.mubr.f32.mxu0 %v781
  %904 = vmatmul.mubr.f32.gmra.mxu0 %v707
  %v905 = vpop.f32.mrf.mxu0
  %v906 = vadd.f32 %v771, %v905
  %v907 = vpop.f32.mrf.mxu0
  %v908 = vadd.f32 %v775, %v907
  %909 = vmatprep.mubr.f32.mxu0 %v783
  %910 = vmatmul.mubr.f32.gmra.mxu0 %v708
  %v911 = vpop.f32.mrf.mxu0
  %v912 = vadd.f32 %v771, %v911
  %v913 = vpop.f32.mrf.mxu0
  %v914 = vadd.f32 %v775, %v913
  %915 = vmatprep.mubr.f32.mxu0 %v785
  %916 = vmatmul.mubr.f32.gmra.mxu0 %v709
  %v917 = vpop.f32.mrf.mxu0
  %v918 = vadd.f32 %v771, %v917
  %v919 = vpop.f32.mrf.mxu0
  %v920 = vadd.f32 %v775, %v919
  %921 = vmatprep.mubr.f32.mxu0 %v787
  %922 = vmatmul.mubr.f32.gmra.mxu0 %v710
  %v923 = vpop.f32.mrf.mxu0
  %v924 = vadd.f32 %v771, %v923
  %v925 = vpop.f32.mrf.mxu0
  %v926 = vadd.f32 %v775, %v925
  %927 = vmatprep.mubr.f32.mxu0 %v789
  %928 = vmatmul.mubr.f32.gmra.mxu0 %v711
  %v929 = vpop.f32.mrf.mxu0
  %v930 = vadd.f32 %v771, %v929
  %v931 = vpop.f32.mrf.mxu0
  %v932 = vadd.f32 %v775, %v931
  %933 = vmatprep.mubr.f32.mxu0 %v791
  %934 = vmatmul.mubr.f32.gmra.mxu0 %v712
  %v935 = vpop.f32.mrf.mxu0
  %v936 = vadd.f32 %v771, %v935
  %v937 = vpop.f32.mrf.mxu0
  %v938 = vadd.f32 %v775, %v937
  %939 = vmatprep.mubr.f32.mxu0 %v793
  %940 = vmatmul.mubr.f32.gmra.mxu0 %v713
  %v941 = vpop.f32.mrf.mxu0
  %v942 = vadd.f32 %v771, %v941
  %v943 = vpop.f32.mrf.mxu0
  %v944 = vadd.f32 %v775, %v943
  %945 = vmatprep.mubr.f32.mxu0 %v795
  %946 = vmatmul.mubr.f32.gmra.mxu0 %v714
  %v947 = vpop.f32.mrf.mxu0
  %v948 = vadd.f32 %v771, %v947
  %v949 = vpop.f32.mrf.mxu0
  %v950 = vadd.f32 %v775, %v949
  %951 = vmatprep.mubr.f32.mxu0 %v797
  %952 = vmatmul.mubr.f32.gmra.mxu0 %v715
  %v953 = vpop.f32.mrf.mxu0
  %v954 = vadd.f32 %v771, %v953
  %v955 = vpop.f32.mrf.mxu0
  %v956 = vadd.f32 %v775, %v955
  %957 = vmatprep.mubr.f32.mxu0 %v799
  %958 = vmatmul.mubr.f32.gmra.mxu0 %v716
  %v959 = vpop.f32.mrf.mxu0
  %v960 = vadd.f32 %v771, %v959
  %v961 = vpop.f32.mrf.mxu0
  %v962 = vadd.f32 %v775, %v961
  %963 = vmatprep.mubr.f32.mxu0 %v801
  %964 = vmatmul.mubr.f32.gmra.mxu0 %v717
  %v965 = vpop.f32.mrf.mxu0
  %v966 = vadd.f32 %v771, %v965
  %v967 = vpop.f32.mrf.mxu0
  %v968 = vadd.f32 %v775, %v967
  %969 = vmatprep.mubr.f32.mxu0 %v803
  %970 = vmatmul.mubr.f32.gmra.mxu0 %v718
  %v971 = vpop.f32.mrf.mxu0
  %v972 = vadd.f32 %v771, %v971
  %v973 = vpop.f32.mrf.mxu0
  %v974 = vadd.f32 %v775, %v973
  %975 = vmatprep.mubr.f32.mxu0 %v805
  %976 = vmatmul.mubr.f32.gmra.mxu0 %v719
  %v977 = vpop.f32.mrf.mxu0
  %v978 = vadd.f32 %v771, %v977
  %v979 = vpop.f32.mrf.mxu0
  %v980 = vadd.f32 %v775, %v979
  %981 = vmatprep.mubr.f32.mxu0 %v807
  %982 = vmatmul.mubr.f32.gmra.mxu0 %v720
  %v983 = vpop.f32.mrf.mxu0
  %v984 = vadd.f32 %v771, %v983
  %v985 = vpop.f32.mrf.mxu0
  %v986 = vadd.f32 %v775, %v985
  %987 = vmatprep.mubr.f32.mxu0 %v809
  %988 = vmatmul.mubr.f32.gmra.mxu0 %v721
  %v989 = vpop.f32.mrf.mxu0
  %v990 = vadd.f32 %v771, %v989
  %v991 = vpop.f32.mrf.mxu0
  %v992 = vadd.f32 %v775, %v991
  %993 = vmatprep.mubr.f32.mxu0 %v811
  %994 = vmatmul.mubr.f32.gmra.mxu0 %v722
  %v995 = vpop.f32.mrf.mxu0
  %v996 = vadd.f32 %v771, %v995
  %v997 = vpop.f32.mrf.mxu0
  %v998 = vadd.f32 %v775, %v997
  %999 = vmatprep.mubr.f32.mxu0 %v813
  %1000 = vmatmul.mubr.f32.gmra.mxu0 %v723
  %v1001 = vpop.f32.mrf.mxu0
  %v1002 = vadd.f32 %v771, %v1001
  %v1003 = vpop.f32.mrf.mxu0
  %v1004 = vadd.f32 %v775, %v1003
  %1005 = vmatprep.mubr.f32.mxu0 %v815
  %1006 = vmatmul.mubr.f32.gmra.mxu0 %v724
  %v1007 = vpop.f32.mrf.mxu0
  %v1008 = vadd.f32 %v771, %v1007
  %v1009 = vpop.f32.mrf.mxu0
  %v1010 = vadd.f32 %v775, %v1009
  %1011 = vmatprep.mubr.f32.mxu0 %v817
  %1012 = vmatmul.mubr.f32.gmra.mxu0 %v725
  %v1013 = vpop.f32.mrf.mxu0
  %v1014 = vadd.f32 %v771, %v1013
  %v1015 = vpop.f32.mrf.mxu0
  %v1016 = vadd.f32 %v775, %v1015
  %1017 = vmatprep.mubr.f32.mxu0 %v819
  %1018 = vmatmul.mubr.f32.gmra.mxu0 %v726
  %v1019 = vpop.f32.mrf.mxu0
  %v1020 = vadd.f32 %v771, %v1019
  %v1021 = vpop.f32.mrf.mxu0
  %v1022 = vadd.f32 %v775, %v1021
  %1023 = vmatprep.mubr.f32.mxu0 %v821
  %1024 = vmatmul.mubr.f32.gmra.mxu0 %v727
  %v1025 = vpop.f32.mrf.mxu0
  %v1026 = vadd.f32 %v771, %v1025
  %v1027 = vpop.f32.mrf.mxu0
  %v1028 = vadd.f32 %v775, %v1027
  %1029 = vmatprep.mubr.f32.mxu0 %v823
  %1030 = vmatmul.mubr.f32.gmra.mxu0 %v728
  %v1031 = vpop.f32.mrf.mxu0
  %v1032 = vadd.f32 %v771, %v1031
  %v1033 = vpop.f32.mrf.mxu0
  %v1034 = vadd.f32 %v775, %v1033
  %1035 = vmatprep.mubr.f32.mxu0 %v825
  %1036 = vmatmul.mubr.f32.gmra.mxu0 %v729
  %v1037 = vpop.f32.mrf.mxu0
  %v1038 = vadd.f32 %v771, %v1037
  %v1039 = vpop.f32.mrf.mxu0
  %v1040 = vadd.f32 %v775, %v1039
  %1041 = vdwg.mxu0
  %v1042 = vmax.f32 %v900, 0.0
  %v1043 = vmax.f32 %v902, 0.0
  %v1044 = vmax.f32 %v906, 0.0
  %v1045 = vmax.f32 %v908, 0.0
  %v1046 = vmax.f32 %v912, 0.0
  %v1047 = vmax.f32 %v914, 0.0
  %v1048 = vmax.f32 %v918, 0.0
  %v1049 = vmax.f32 %v920, 0.0
  %v1050 = vmax.f32 %v924, 0.0
  %v1051 = vmax.f32 %v926, 0.0
  %v1052 = vmax.f32 %v930, 0.0
  %v1053 = vmax.f32 %v932, 0.0
  %v1054 = vmax.f32 %v936, 0.0
  %v1055 = vmax.f32 %v938, 0.0
  %v1056 = vmax.f32 %v942, 0.0
  %v1057 = vmax.f32 %v944, 0.0
  %v1058 = vmax.f32 %v948, 0.0
  %v1059 = vmax.f32 %v950, 0.0
  %v1060 = vmax.f32 %v954, 0.0
  %v1061 = vmax.f32 %v956, 0.0
  %v1062 = vmax.f32 %v960, 0.0
  %v1063 = vmax.f32 %v962, 0.0
  %v1064 = vmax.f32 %v966, 0.0
  %v1065 = vmax.f32 %v968, 0.0
  %v1066 = vmax.f32 %v972, 0.0
  %v1067 = vmax.f32 %v974, 0.0
  %v1068 = vmax.f32 %v978, 0.0
  %v1069 = vmax.f32 %v980, 0.0
  %v1070 = vmax.f32 %v984, 0.0
  %v1071 = vmax.f32 %v986, 0.0
  %v1072 = vmax.f32 %v990, 0.0
  %v1073 = vmax.f32 %v992, 0.0
  %v1074 = vmax.f32 %v996, 0.0
  %v1075 = vmax.f32 %v998, 0.0
  %v1076 = vmax.f32 %v1002, 0.0
  %v1077 = vmax.f32 %v1004, 0.0
  %v1078 = vmax.f32 %v1008, 0.0
  %v1079 = vmax.f32 %v1010, 0.0
  %v1080 = vmax.f32 %v1014, 0.0
  %v1081 = vmax.f32 %v1016, 0.0
  %v1082 = vmax.f32 %v1020, 0.0
  %v1083 = vmax.f32 %v1022, 0.0
  %v1084 = vmax.f32 %v1026, 0.0
  %v1085 = vmax.f32 %v1028, 0.0
  %v1086 = vmax.f32 %v1032, 0.0
  %v1087 = vmax.f32 %v1034, 0.0
  %v1088 = vmax.f32 %v1038, 0.0
  %v1089 = vmax.f32 %v1040, 0.0
  %v1090 = vld [vmem:[%s3] sm:$0xff]
  %v1091 = vld [vmem:[%s3 + $0x8] sm:$0xff]
  %v1092 = vld [vmem:[%s3 + $0x10] sm:$0xff]
  %v1093 = vld [vmem:[%s3 + $0x18] sm:$0xff]
  %v1094 = vld [vmem:[%s3 + $0x20] sm:$0xff]
  %v1095 = vld [vmem:[%s3 + $0x28] sm:$0xff]
  %v1096 = vld [vmem:[%s3 + $0x30] sm:$0xff]
  %v1097 = vld [vmem:[%s3 + $0x38] sm:$0xff]
  %v1098 = vld [vmem:[%s3 + $0x40] sm:$0xff]
  %v1099 = vld [vmem:[%s3 + $0x48] sm:$0xff]
  %v1100 = vld [vmem:[%s3 + $0x50] sm:$0xff]
  %v1101 = vld [vmem:[%s3 + $0x58] sm:$0xff]
  %v1102 = vld [vmem:[%s3 + $0x60] sm:$0xff]
  %v1103 = vld [vmem:[%s3 + $0x68] sm:$0xff]
  %v1104 = vld [vmem:[%s3 + $0x70] sm:$0xff]
  %v1105 = vld [vmem:[%s3 + $0x78] sm:$0xff]
  %v1106 = vld [vmem:[%s3 + $0x80] sm:$0xff]
  %v1107 = vld [vmem:[%s3 + $0x88] sm:$0xff]
  %vm1108 = vcmask 130048
  %v1110 = vsel %vm1108, %v1043, 0
  %v1113 = vsel %vm1108, %v1045, 0
  %v1116 = vsel %vm1108, %v1047, 0
  %v1119 = vsel %vm1108, %v1049, 0
  %v1122 = vsel %vm1108, %v1051, 0
  %v1125 = vsel %vm1108, %v1053, 0
  %v1128 = vsel %vm1108, %v1055, 0
  %v1131 = vsel %vm1108, %v1057, 0
  %v1134 = vsel %vm1108, %v1059, 0
  %v1137 = vsel %vm1108, %v1061, 0
  %v1140 = vsel %vm1108, %v1063, 0
  %v1143 = vsel %vm1108, %v1065, 0
  %v1146 = vsel %vm1108, %v1067, 0
  %v1149 = vsel %vm1108, %v1069, 0
  %v1152 = vsel %vm1108, %v1071, 0
  %v1155 = vsel %vm1108, %v1073, 0
  %v1158 = vsel %vm1108, %v1075, 0
  %v1161 = vsel %vm1108, %v1077, 0
  %v1164 = vsel %vm1108, %v1079, 0
  %v1167 = vsel %vm1108, %v1081, 0
  %v1170 = vsel %vm1108, %v1083, 0
  %v1173 = vsel %vm1108, %v1085, 0
  %v1176 = vsel %vm1108, %v1087, 0
  %v1179 = vsel %vm1108, %v1089, 0
  %1181 = vmatprep.subr.mxu0 0.0
  %1182 = vmatpush1.msra.mxu0 %v1105
  %1183 = vmatprep.subr.mxu0 0.0
  %1184 = vmatpush1.msra.mxu0 %v1104
  %1185 = vmatprep.subr.mxu0 0.0
  %1186 = vmatpush1.msra.mxu0 %v1103
  %1187 = vmatprep.subr.mxu0 0.0
  %1188 = vmatpush1.msra.mxu0 %v1102
  %1189 = vmatprep.subr.mxu0 0.0
  %1190 = vmatpush1.msra.mxu0 %v1101
  %1191 = vmatprep.subr.mxu0 0.0
  %1192 = vmatpush1.msra.mxu0 %v1100
  %1193 = vmatprep.subr.mxu0 0.0
  %1194 = vmatpush1.msra.mxu0 %v1099
  %1195 = vmatprep.subr.mxu0 0.0
  %1196 = vmatpush1.msra.mxu0 %v1098
  %1197 = vmatprep.subr.mxu0 0.0
  %1198 = vmatpush1.msra.mxu0 %v1097
  %1199 = vmatprep.subr.mxu0 0.0
  %1200 = vmatpush1.msra.mxu0 %v1096
  %1201 = vmatprep.subr.mxu0 0.0
  %1202 = vmatpush1.msra.mxu0 %v1095
  %1203 = vmatprep.subr.mxu0 0.0
  %1204 = vmatpush1.msra.mxu0 %v1094
  %1205 = vmatprep.subr.mxu0 0.0
  %1206 = vmatpush1.msra.mxu0 %v1093
  %1207 = vmatprep.subr.mxu0 0.0
  %1208 = vmatpush1.msra.mxu0 %v1092
  %1209 = vmatprep.subr.mxu0 0.0
  %1210 = vmatpush1.msra.mxu0 %v1091
  %1211 = vmatprep.subr.mxu0 0.0
  %1212 = vmatpush1.msra.mxu0 %v1090
  %1213 = vmatprep.subr.mxu0 0.0
  %1214 = vmatpush2.msra.mxu0 0.0
  %1215 = vmatprep.subr.mxu0 0.0
  %1216 = vmatpush2.msra.mxu0 0.0
  %1217 = vmatprep.subr.mxu0 0.0
  %1218 = vmatpush2.msra.mxu0 0.0
  %1219 = vmatprep.subr.mxu0 0.0
  %1220 = vmatpush2.msra.mxu0 0.0
  %1221 = vmatprep.subr.mxu0 0.0
  %1222 = vmatpush2.msra.mxu0 0.0
  %1223 = vmatprep.subr.mxu0 0.0
  %1224 = vmatpush2.msra.mxu0 0.0
  %1225 = vmatprep.subr.mxu0 0.0
  %1226 = vmatpush2.msra.mxu0 0.0
  %1227 = vmatprep.subr.mxu0 0.0
  %1228 = vmatpush2.msra.mxu0 0.0
  %1229 = vmatprep.subr.mxu0 0.0
  %1230 = vmatpush2.msra.mxu0 0.0
  %1231 = vmatprep.subr.mxu0 0.0
  %1232 = vmatpush2.msra.mxu0 0.0
  %1233 = vmatprep.subr.mxu0 0.0
  %1234 = vmatpush2.msra.mxu0 0.0
  %1235 = vmatprep.subr.mxu0 0.0
  %1236 = vmatpush2.msra.mxu0 0.0
  %1237 = vmatprep.subr.mxu0 0.0
  %1238 = vmatpush2.msra.mxu0 0.0
  %1239 = vmatprep.subr.mxu0 0.0
  %1240 = vmatpush2.msra.mxu0 0.0
  %1241 = vmatprep.subr.mxu0 0.0
  %1242 = vmatpush2.msra.mxu0 %v1107
  %1243 = vmatprep.subr.mxu0 0.0
  %1244 = vmatpush2.msra.mxu0 %v1106
  %1245 = vmatprep.mubr.f32.mxu0 %v1110
  %1246 = vmatmul.mubr.f32.gmra.mxu0 %v1042
  %v1247 = vpop.f32.mrf.mxu0
  %v1248 = vadd.f32 0.0, %v1247
  %v1249 = vpop.f32.mrf.mxu0
  %1250 = vmatprep.mubr.f32.mxu0 %v1113
  %1251 = vmatmul.mubr.f32.gmra.mxu0 %v1044
  %v1252 = vpop.f32.mrf.mxu0
  %v1253 = vadd.f32 0.0, %v1252
  %v1254 = vpop.f32.mrf.mxu0
  %1255 = vmatprep.mubr.f32.mxu0 %v1116
  %1256 = vmatmul.mubr.f32.gmra.mxu0 %v1046
  %v1257 = vpop.f32.mrf.mxu0
  %v1258 = vadd.f32 0.0, %v1257
  %v1259 = vpop.f32.mrf.mxu0
  %1260 = vmatprep.mubr.f32.mxu0 %v1119
  %1261 = vmatmul.mubr.f32.gmra.mxu0 %v1048
  %v1262 = vpop.f32.mrf.mxu0
  %v1263 = vadd.f32 0.0, %v1262
  %v1264 = vpop.f32.mrf.mxu0
  %1265 = vmatprep.mubr.f32.mxu0 %v1122
  %1266 = vmatmul.mubr.f32.gmra.mxu0 %v1050
  %v1267 = vpop.f32.mrf.mxu0
  %v1268 = vadd.f32 0.0, %v1267
  %v1269 = vpop.f32.mrf.mxu0
  %1270 = vmatprep.mubr.f32.mxu0 %v1125
  %1271 = vmatmul.mubr.f32.gmra.mxu0 %v1052
  %v1272 = vpop.f32.mrf.mxu0
  %v1273 = vadd.f32 0.0, %v1272
  %v1274 = vpop.f32.mrf.mxu0
  %1275 = vmatprep.mubr.f32.mxu0 %v1128
  %1276 = vmatmul.mubr.f32.gmra.mxu0 %v1054
  %v1277 = vpop.f32.mrf.mxu0
  %v1278 = vadd.f32 0.0, %v1277
  %v1279 = vpop.f32.mrf.mxu0
  %1280 = vmatprep.mubr.f32.mxu0 %v1131
  %1281 = vmatmul.mubr.f32.gmra.mxu0 %v1056
  %v1282 = vpop.f32.mrf.mxu0
  %v1283 = vadd.f32 0.0, %v1282
  %v1284 = vpop.f32.mrf.mxu0
  %1285 = vmatprep.mubr.f32.mxu0 %v1134
  %1286 = vmatmul.mubr.f32.gmra.mxu0 %v1058
  %v1287 = vpop.f32.mrf.mxu0
  %v1288 = vadd.f32 0.0, %v1287
  %v1289 = vpop.f32.mrf.mxu0
  %1290 = vmatprep.mubr.f32.mxu0 %v1137
  %1291 = vmatmul.mubr.f32.gmra.mxu0 %v1060
  %v1292 = vpop.f32.mrf.mxu0
  %v1293 = vadd.f32 0.0, %v1292
  %v1294 = vpop.f32.mrf.mxu0
  %1295 = vmatprep.mubr.f32.mxu0 %v1140
  %1296 = vmatmul.mubr.f32.gmra.mxu0 %v1062
  %v1297 = vpop.f32.mrf.mxu0
  %v1298 = vadd.f32 0.0, %v1297
  %v1299 = vpop.f32.mrf.mxu0
  %1300 = vmatprep.mubr.f32.mxu0 %v1143
  %1301 = vmatmul.mubr.f32.gmra.mxu0 %v1064
  %v1302 = vpop.f32.mrf.mxu0
  %v1303 = vadd.f32 0.0, %v1302
  %v1304 = vpop.f32.mrf.mxu0
  %1305 = vmatprep.mubr.f32.mxu0 %v1146
  %1306 = vmatmul.mubr.f32.gmra.mxu0 %v1066
  %v1307 = vpop.f32.mrf.mxu0
  %v1308 = vadd.f32 0.0, %v1307
  %v1309 = vpop.f32.mrf.mxu0
  %1310 = vmatprep.mubr.f32.mxu0 %v1149
  %1311 = vmatmul.mubr.f32.gmra.mxu0 %v1068
  %v1312 = vpop.f32.mrf.mxu0
  %v1313 = vadd.f32 0.0, %v1312
  %v1314 = vpop.f32.mrf.mxu0
  %1315 = vmatprep.mubr.f32.mxu0 %v1152
  %1316 = vmatmul.mubr.f32.gmra.mxu0 %v1070
  %v1317 = vpop.f32.mrf.mxu0
  %v1318 = vadd.f32 0.0, %v1317
  %v1319 = vpop.f32.mrf.mxu0
  %1320 = vmatprep.mubr.f32.mxu0 %v1155
  %1321 = vmatmul.mubr.f32.gmra.mxu0 %v1072
  %v1322 = vpop.f32.mrf.mxu0
  %v1323 = vadd.f32 0.0, %v1322
  %v1324 = vpop.f32.mrf.mxu0
  %1325 = vmatprep.mubr.f32.mxu0 %v1158
  %1326 = vmatmul.mubr.f32.gmra.mxu0 %v1074
  %v1327 = vpop.f32.mrf.mxu0
  %v1328 = vadd.f32 0.0, %v1327
  %v1329 = vpop.f32.mrf.mxu0
  %1330 = vmatprep.mubr.f32.mxu0 %v1161
  %1331 = vmatmul.mubr.f32.gmra.mxu0 %v1076
  %v1332 = vpop.f32.mrf.mxu0
  %v1333 = vadd.f32 0.0, %v1332
  %v1334 = vpop.f32.mrf.mxu0
  %1335 = vmatprep.mubr.f32.mxu0 %v1164
  %1336 = vmatmul.mubr.f32.gmra.mxu0 %v1078
  %v1337 = vpop.f32.mrf.mxu0
  %v1338 = vadd.f32 0.0, %v1337
  %v1339 = vpop.f32.mrf.mxu0
  %1340 = vmatprep.mubr.f32.mxu0 %v1167
  %1341 = vmatmul.mubr.f32.gmra.mxu0 %v1080
  %v1342 = vpop.f32.mrf.mxu0
  %v1343 = vadd.f32 0.0, %v1342
  %v1344 = vpop.f32.mrf.mxu0
  %1345 = vmatprep.mubr.f32.mxu0 %v1170
  %1346 = vmatmul.mubr.f32.gmra.mxu0 %v1082
  %v1347 = vpop.f32.mrf.mxu0
  %v1348 = vadd.f32 0.0, %v1347
  %v1349 = vpop.f32.mrf.mxu0
  %1350 = vmatprep.mubr.f32.mxu0 %v1173
  %1351 = vmatmul.mubr.f32.gmra.mxu0 %v1084
  %v1352 = vpop.f32.mrf.mxu0
  %v1353 = vadd.f32 0.0, %v1352
  %v1354 = vpop.f32.mrf.mxu0
  %1355 = vmatprep.mubr.f32.mxu0 %v1176
  %1356 = vmatmul.mubr.f32.gmra.mxu0 %v1086
  %v1357 = vpop.f32.mrf.mxu0
  %v1358 = vadd.f32 0.0, %v1357
  %v1359 = vpop.f32.mrf.mxu0
  %1360 = vmatprep.mubr.f32.mxu0 %v1179
  %1361 = vmatmul.mubr.f32.gmra.mxu0 %v1088
  %v1362 = vpop.f32.mrf.mxu0
  %v1363 = vadd.f32 0.0, %v1362
  %v1364 = vpop.f32.mrf.mxu0
  %1365 = vdwg.mxu0
  %v1366 = vld [vmem:[%s4] sm:$0xff]
  %v1367 = vld [vmem:[%s4 + $0x8] sm:$0xff]
  %v1368 = vld [vmem:[%s4 + $0x10] sm:$0xff]
  %v1369 = vld [vmem:[%s4 + $0x18] sm:$0xff]
  %v1370 = vld [vmem:[%s4 + $0x20] sm:$0xff]
  %v1371 = vld [vmem:[%s4 + $0x28] sm:$0xff]
  %v1372 = vld [vmem:[%s4 + $0x30] sm:$0xff]
  %v1373 = vld [vmem:[%s4 + $0x38] sm:$0xff]
  %v1374 = vld [vmem:[%s4 + $0x40] sm:$0xff]
  %v1375 = vld [vmem:[%s4 + $0x48] sm:$0xff]
  %v1376 = vld [vmem:[%s4 + $0x50] sm:$0xff]
  %v1377 = vld [vmem:[%s4 + $0x58] sm:$0xff]
  %v1378 = vld [vmem:[%s4 + $0x60] sm:$0xff]
  %v1379 = vld [vmem:[%s4 + $0x68] sm:$0xff]
  %v1380 = vld [vmem:[%s4 + $0x70] sm:$0xff]
  %v1381 = vld [vmem:[%s4 + $0x78] sm:$0xff]
  %v1382 = vld [vmem:[%s4 + $0x80] sm:$0xff]
  %v1383 = vld [vmem:[%s4 + $0x88] sm:$0xff]
  %1384 = vmatprep.subr.mxu0 0.0
  %1385 = vmatpush1.msra.mxu0 %v1381
  %1386 = vmatprep.subr.mxu0 0.0
  %1387 = vmatpush1.msra.mxu0 %v1380
  %1388 = vmatprep.subr.mxu0 0.0
  %1389 = vmatpush1.msra.mxu0 %v1379
  %1390 = vmatprep.subr.mxu0 0.0
  %1391 = vmatpush1.msra.mxu0 %v1378
  %1392 = vmatprep.subr.mxu0 0.0
  %1393 = vmatpush1.msra.mxu0 %v1377
  %1394 = vmatprep.subr.mxu0 0.0
  %1395 = vmatpush1.msra.mxu0 %v1376
  %1396 = vmatprep.subr.mxu0 0.0
  %1397 = vmatpush1.msra.mxu0 %v1375
  %1398 = vmatprep.subr.mxu0 0.0
  %1399 = vmatpush1.msra.mxu0 %v1374
  %1400 = vmatprep.subr.mxu0 0.0
  %1401 = vmatpush1.msra.mxu0 %v1373
  %1402 = vmatprep.subr.mxu0 0.0
  %1403 = vmatpush1.msra.mxu0 %v1372
  %1404 = vmatprep.subr.mxu0 0.0
  %1405 = vmatpush1.msra.mxu0 %v1371
  %1406 = vmatprep.subr.mxu0 0.0
  %1407 = vmatpush1.msra.mxu0 %v1370
  %1408 = vmatprep.subr.mxu0 0.0
  %1409 = vmatpush1.msra.mxu0 %v1369
  %1410 = vmatprep.subr.mxu0 0.0
  %1411 = vmatpush1.msra.mxu0 %v1368
  %1412 = vmatprep.subr.mxu0 0.0
  %1413 = vmatpush1.msra.mxu0 %v1367
  %1414 = vmatprep.subr.mxu0 0.0
  %1415 = vmatpush1.msra.mxu0 %v1366
  %1416 = vmatprep.subr.mxu0 0.0
  %1417 = vmatpush2.msra.mxu0 0.0
  %1418 = vmatprep.subr.mxu0 0.0
  %1419 = vmatpush2.msra.mxu0 0.0
  %1420 = vmatprep.subr.mxu0 0.0
  %1421 = vmatpush2.msra.mxu0 0.0
  %1422 = vmatprep.subr.mxu0 0.0
  %1423 = vmatpush2.msra.mxu0 0.0
  %1424 = vmatprep.subr.mxu0 0.0
  %1425 = vmatpush2.msra.mxu0 0.0
  %1426 = vmatprep.subr.mxu0 0.0
  %1427 = vmatpush2.msra.mxu0 0.0
  %1428 = vmatprep.subr.mxu0 0.0
  %1429 = vmatpush2.msra.mxu0 0.0
  %1430 = vmatprep.subr.mxu0 0.0
  %1431 = vmatpush2.msra.mxu0 0.0
  %1432 = vmatprep.subr.mxu0 0.0
  %1433 = vmatpush2.msra.mxu0 0.0
  %1434 = vmatprep.subr.mxu0 0.0
  %1435 = vmatpush2.msra.mxu0 0.0
  %1436 = vmatprep.subr.mxu0 0.0
  %1437 = vmatpush2.msra.mxu0 0.0
  %1438 = vmatprep.subr.mxu0 0.0
  %1439 = vmatpush2.msra.mxu0 0.0
  %1440 = vmatprep.subr.mxu0 0.0
  %1441 = vmatpush2.msra.mxu0 0.0
  %1442 = vmatprep.subr.mxu0 0.0
  %1443 = vmatpush2.msra.mxu0 0.0
  %1444 = vmatprep.subr.mxu0 0.0
  %1445 = vmatpush2.msra.mxu0 %v1383
  %1446 = vmatprep.subr.mxu0 0.0
  %1447 = vmatpush2.msra.mxu0 %v1382
  %1448 = vmatprep.mubr.f32.mxu0 %v1110
  %1449 = vmatmul.mubr.f32.gmra.mxu0 %v1042
  %v1450 = vpop.f32.mrf.mxu0
  %v1451 = vadd.f32 0.0, %v1450
  %v1452 = vpop.f32.mrf.mxu0
  %1453 = vmatprep.mubr.f32.mxu0 %v1113
  %1454 = vmatmul.mubr.f32.gmra.mxu0 %v1044
  %v1455 = vpop.f32.mrf.mxu0
  %v1456 = vadd.f32 0.0, %v1455
  %v1457 = vpop.f32.mrf.mxu0
  %1458 = vmatprep.mubr.f32.mxu0 %v1116
  %1459 = vmatmul.mubr.f32.gmra.mxu0 %v1046
  %v1460 = vpop.f32.mrf.mxu0
  %v1461 = vadd.f32 0.0, %v1460
  %v1462 = vpop.f32.mrf.mxu0
  %1463 = vmatprep.mubr.f32.mxu0 %v1119
  %1464 = vmatmul.mubr.f32.gmra.mxu0 %v1048
  %v1465 = vpop.f32.mrf.mxu0
  %v1466 = vadd.f32 0.0, %v1465
  %v1467 = vpop.f32.mrf.mxu0
  %1468 = vmatprep.mubr.f32.mxu0 %v1122
  %1469 = vmatmul.mubr.f32.gmra.mxu0 %v1050
  %v1470 = vpop.f32.mrf.mxu0
  %v1471 = vadd.f32 0.0, %v1470
  %v1472 = vpop.f32.mrf.mxu0
  %1473 = vmatprep.mubr.f32.mxu0 %v1125
  %1474 = vmatmul.mubr.f32.gmra.mxu0 %v1052
  %v1475 = vpop.f32.mrf.mxu0
  %v1476 = vadd.f32 0.0, %v1475
  %v1477 = vpop.f32.mrf.mxu0
  %1478 = vmatprep.mubr.f32.mxu0 %v1128
  %1479 = vmatmul.mubr.f32.gmra.mxu0 %v1054
  %v1480 = vpop.f32.mrf.mxu0
  %v1481 = vadd.f32 0.0, %v1480
  %v1482 = vpop.f32.mrf.mxu0
  %1483 = vmatprep.mubr.f32.mxu0 %v1131
  %1484 = vmatmul.mubr.f32.gmra.mxu0 %v1056
  %v1485 = vpop.f32.mrf.mxu0
  %v1486 = vadd.f32 0.0, %v1485
  %v1487 = vpop.f32.mrf.mxu0
  %1488 = vmatprep.mubr.f32.mxu0 %v1134
  %1489 = vmatmul.mubr.f32.gmra.mxu0 %v1058
  %v1490 = vpop.f32.mrf.mxu0
  %v1491 = vadd.f32 0.0, %v1490
  %v1492 = vpop.f32.mrf.mxu0
  %1493 = vmatprep.mubr.f32.mxu0 %v1137
  %1494 = vmatmul.mubr.f32.gmra.mxu0 %v1060
  %v1495 = vpop.f32.mrf.mxu0
  %v1496 = vadd.f32 0.0, %v1495
  %v1497 = vpop.f32.mrf.mxu0
  %1498 = vmatprep.mubr.f32.mxu0 %v1140
  %1499 = vmatmul.mubr.f32.gmra.mxu0 %v1062
  %v1500 = vpop.f32.mrf.mxu0
  %v1501 = vadd.f32 0.0, %v1500
  %v1502 = vpop.f32.mrf.mxu0
  %1503 = vmatprep.mubr.f32.mxu0 %v1143
  %1504 = vmatmul.mubr.f32.gmra.mxu0 %v1064
  %v1505 = vpop.f32.mrf.mxu0
  %v1506 = vadd.f32 0.0, %v1505
  %v1507 = vpop.f32.mrf.mxu0
  %1508 = vmatprep.mubr.f32.mxu0 %v1146
  %1509 = vmatmul.mubr.f32.gmra.mxu0 %v1066
  %v1510 = vpop.f32.mrf.mxu0
  %v1511 = vadd.f32 0.0, %v1510
  %v1512 = vpop.f32.mrf.mxu0
  %1513 = vmatprep.mubr.f32.mxu0 %v1149
  %1514 = vmatmul.mubr.f32.gmra.mxu0 %v1068
  %v1515 = vpop.f32.mrf.mxu0
  %v1516 = vadd.f32 0.0, %v1515
  %v1517 = vpop.f32.mrf.mxu0
  %1518 = vmatprep.mubr.f32.mxu0 %v1152
  %1519 = vmatmul.mubr.f32.gmra.mxu0 %v1070
  %v1520 = vpop.f32.mrf.mxu0
  %v1521 = vadd.f32 0.0, %v1520
  %v1522 = vpop.f32.mrf.mxu0
  %1523 = vmatprep.mubr.f32.mxu0 %v1155
  %1524 = vmatmul.mubr.f32.gmra.mxu0 %v1072
  %v1525 = vpop.f32.mrf.mxu0
  %v1526 = vadd.f32 0.0, %v1525
  %v1527 = vpop.f32.mrf.mxu0
  %1528 = vmatprep.mubr.f32.mxu0 %v1158
  %1529 = vmatmul.mubr.f32.gmra.mxu0 %v1074
  %v1530 = vpop.f32.mrf.mxu0
  %v1531 = vadd.f32 0.0, %v1530
  %v1532 = vpop.f32.mrf.mxu0
  %1533 = vmatprep.mubr.f32.mxu0 %v1161
  %1534 = vmatmul.mubr.f32.gmra.mxu0 %v1076
  %v1535 = vpop.f32.mrf.mxu0
  %v1536 = vadd.f32 0.0, %v1535
  %v1537 = vpop.f32.mrf.mxu0
  %1538 = vmatprep.mubr.f32.mxu0 %v1164
  %1539 = vmatmul.mubr.f32.gmra.mxu0 %v1078
  %v1540 = vpop.f32.mrf.mxu0
  %v1541 = vadd.f32 0.0, %v1540
  %v1542 = vpop.f32.mrf.mxu0
  %1543 = vmatprep.mubr.f32.mxu0 %v1167
  %1544 = vmatmul.mubr.f32.gmra.mxu0 %v1080
  %v1545 = vpop.f32.mrf.mxu0
  %v1546 = vadd.f32 0.0, %v1545
  %v1547 = vpop.f32.mrf.mxu0
  %1548 = vmatprep.mubr.f32.mxu0 %v1170
  %1549 = vmatmul.mubr.f32.gmra.mxu0 %v1082
  %v1550 = vpop.f32.mrf.mxu0
  %v1551 = vadd.f32 0.0, %v1550
  %v1552 = vpop.f32.mrf.mxu0
  %1553 = vmatprep.mubr.f32.mxu0 %v1173
  %1554 = vmatmul.mubr.f32.gmra.mxu0 %v1084
  %v1555 = vpop.f32.mrf.mxu0
  %v1556 = vadd.f32 0.0, %v1555
  %v1557 = vpop.f32.mrf.mxu0
  %1558 = vmatprep.mubr.f32.mxu0 %v1176
  %1559 = vmatmul.mubr.f32.gmra.mxu0 %v1086
  %v1560 = vpop.f32.mrf.mxu0
  %v1561 = vadd.f32 0.0, %v1560
  %v1562 = vpop.f32.mrf.mxu0
  %1563 = vmatprep.mubr.f32.mxu0 %v1179
  %1564 = vmatmul.mubr.f32.gmra.mxu0 %v1088
  %v1565 = vpop.f32.mrf.mxu0
  %v1566 = vadd.f32 0.0, %v1565
  %v1567 = vpop.f32.mrf.mxu0
  %1568 = vdwg.mxu0
  %v1569 = vmax.f32 %v1248, %v1451
  %v1570 = vmax.f32 %v1253, %v1456
  %v1571 = vmax.f32 %v1258, %v1461
  %v1572 = vmax.f32 %v1263, %v1466
  %v1573 = vmax.f32 %v1268, %v1471
  %v1574 = vmax.f32 %v1273, %v1476
  %v1575 = vmax.f32 %v1278, %v1481
  %v1576 = vmax.f32 %v1283, %v1486
  %v1577 = vmax.f32 %v1288, %v1491
  %v1578 = vmax.f32 %v1293, %v1496
  %v1579 = vmax.f32 %v1298, %v1501
  %v1580 = vmax.f32 %v1303, %v1506
  %v1581 = vmax.f32 %v1308, %v1511
  %v1582 = vmax.f32 %v1313, %v1516
  %v1583 = vmax.f32 %v1318, %v1521
  %v1584 = vmax.f32 %v1323, %v1526
  %v1585 = vmax.f32 %v1328, %v1531
  %v1586 = vmax.f32 %v1333, %v1536
  %v1587 = vmax.f32 %v1338, %v1541
  %v1588 = vmax.f32 %v1343, %v1546
  %v1589 = vmax.f32 %v1348, %v1551
  %v1590 = vmax.f32 %v1353, %v1556
  %v1591 = vmax.f32 %v1358, %v1561
  %v1592 = vmax.f32 %v1363, %v1566
  %vm1593 = vcmask 588800
  %1594 = vst.msk [vmem:[#allocation2] sm:$0xff] %vm1593, %v1569
  %1595 = vst.msk [vmem:[#allocation2 + $0x8] sm:$0xff] %vm1593, %v1570
  %1596 = vst.msk [vmem:[#allocation2 + $0x10] sm:$0xff] %vm1593, %v1571
  %1597 = vst.msk [vmem:[#allocation2 + $0x18] sm:$0xff] %vm1593, %v1572
  %1598 = vst.msk [vmem:[#allocation2 + $0x20] sm:$0xff] %vm1593, %v1573
  %1599 = vst.msk [vmem:[#allocation2 + $0x28] sm:$0xff] %vm1593, %v1574
  %1600 = vst.msk [vmem:[#allocation2 + $0x30] sm:$0xff] %vm1593, %v1575
  %1601 = vst.msk [vmem:[#allocation2 + $0x38] sm:$0xff] %vm1593, %v1576
  %1602 = vst.msk [vmem:[#allocation2 + $0x40] sm:$0xff] %vm1593, %v1577
  %1603 = vst.msk [vmem:[#allocation2 + $0x48] sm:$0xff] %vm1593, %v1578
  %1604 = vst.msk [vmem:[#allocation2 + $0x50] sm:$0xff] %vm1593, %v1579
  %1605 = vst.msk [vmem:[#allocation2 + $0x58] sm:$0xff] %vm1593, %v1580
  %1606 = vst.msk [vmem:[#allocation2 + $0x60] sm:$0xff] %vm1593, %v1581
  %1607 = vst.msk [vmem:[#allocation2 + $0x68] sm:$0xff] %vm1593, %v1582
  %1608 = vst.msk [vmem:[#allocation2 + $0x70] sm:$0xff] %vm1593, %v1583
  %1609 = vst.msk [vmem:[#allocation2 + $0x78] sm:$0xff] %vm1593, %v1584
  %1610 = vst.msk [vmem:[#allocation2 + $0x80] sm:$0xff] %vm1593, %v1585
  %1611 = vst.msk [vmem:[#allocation2 + $0x88] sm:$0xff] %vm1593, %v1586
  %1612 = vst.msk [vmem:[#allocation2 + $0x90] sm:$0xff] %vm1593, %v1587
  %1613 = vst.msk [vmem:[#allocation2 + $0x98] sm:$0xff] %vm1593, %v1588
  %1614 = vst.msk [vmem:[#allocation2 + $0xa0] sm:$0xff] %vm1593, %v1589
  %1615 = vst.msk [vmem:[#allocation2 + $0xa8] sm:$0xff] %vm1593, %v1590
  %1616 = vst.msk [vmem:[#allocation2 + $0xb0] sm:$0xff] %vm1593, %v1591
  %1617 = vst.msk [vmem:[#allocation2 + $0xb8] sm:$0xff] %vm1593, %v1592
  %v1618 = vld [vmem:[#allocation2] ss:$2 sm:$0xff]
  %s1619 = scalar_lea.vmem [#allocation2], 16
  %v1620 = vld [vmem:[%s1619] ss:$2 sm:$0xf]
  %s1621 = scalar_lea.vmem [#allocation2], 24
  %v1622 = vld [vmem:[%s1621] ss:$2 sm:$0xff]
  %s1623 = scalar_lea.vmem [#allocation2], 40
  %v1624 = vld [vmem:[%s1623] ss:$2 sm:$0xf]
  %s1625 = scalar_lea.vmem [#allocation2], 48
  %v1626 = vld [vmem:[%s1625] ss:$2 sm:$0xff]
  %s1627 = scalar_lea.vmem [#allocation2], 64
  %v1628 = vld [vmem:[%s1627] ss:$2 sm:$0xf]
  %s1629 = scalar_lea.vmem [#allocation2], 72
  %v1630 = vld [vmem:[%s1629] ss:$2 sm:$0xff]
  %s1631 = scalar_lea.vmem [#allocation2], 88
  %v1632 = vld [vmem:[%s1631] ss:$2 sm:$0xf]
  %s1633 = scalar_lea.vmem [#allocation2], 96
  %v1634 = vld [vmem:[%s1633] ss:$2 sm:$0xff]
  %s1635 = scalar_lea.vmem [#allocation2], 112
  %v1636 = vld [vmem:[%s1635] ss:$2 sm:$0xf]
  %s1637 = scalar_lea.vmem [#allocation2], 120
  %v1638 = vld [vmem:[%s1637] ss:$2 sm:$0xff]
  %s1639 = scalar_lea.vmem [#allocation2], 136
  %v1640 = vld [vmem:[%s1639] ss:$2 sm:$0xf]
  %s1641 = scalar_lea.vmem [#allocation2], 144
  %v1642 = vld [vmem:[%s1641] ss:$2 sm:$0xff]
  %s1643 = scalar_lea.vmem [#allocation2], 160
  %v1644 = vld [vmem:[%s1643] ss:$2 sm:$0xf]
  %s1645 = scalar_lea.vmem [#allocation2], 168
  %v1646 = vld [vmem:[%s1645] ss:$2 sm:$0xff]
  %s1647 = scalar_lea.vmem [#allocation2], 184
  %v1648 = vld [vmem:[%s1647] ss:$2 sm:$0xf]
  %s1649 = scalar_lea.vmem [#allocation2], 1
  %v1650 = vld [vmem:[%s1649] ss:$2 sm:$0xff]
  %s1651 = scalar_lea.vmem [#allocation2], 17
  %v1652 = vld [vmem:[%s1651] ss:$2 sm:$0xf]
  %s1653 = scalar_lea.vmem [#allocation2], 25
  %v1654 = vld [vmem:[%s1653] ss:$2 sm:$0xff]
  %s1655 = scalar_lea.vmem [#allocation2], 41
  %v1656 = vld [vmem:[%s1655] ss:$2 sm:$0xf]
  %s1657 = scalar_lea.vmem [#allocation2], 49
  %v1658 = vld [vmem:[%s1657] ss:$2 sm:$0xff]
  %s1659 = scalar_lea.vmem [#allocation2], 65
  %v1660 = vld [vmem:[%s1659] ss:$2 sm:$0xf]
  %s1661 = scalar_lea.vmem [#allocation2], 73
  %v1662 = vld [vmem:[%s1661] ss:$2 sm:$0xff]
  %s1663 = scalar_lea.vmem [#allocation2], 89
  %v1664 = vld [vmem:[%s1663] ss:$2 sm:$0xf]
  %s1665 = scalar_lea.vmem [#allocation2], 97
  %v1666 = vld [vmem:[%s1665] ss:$2 sm:$0xff]
  %s1667 = scalar_lea.vmem [#allocation2], 113
  %v1668 = vld [vmem:[%s1667] ss:$2 sm:$0xf]
  %s1669 = scalar_lea.vmem [#allocation2], 121
  %v1670 = vld [vmem:[%s1669] ss:$2 sm:$0xff]
  %s1671 = scalar_lea.vmem [#allocation2], 137
  %v1672 = vld [vmem:[%s1671] ss:$2 sm:$0xf]
  %s1673 = scalar_lea.vmem [#allocation2], 145
  %v1674 = vld [vmem:[%s1673] ss:$2 sm:$0xff]
  %s1675 = scalar_lea.vmem [#allocation2], 161
  %v1676 = vld [vmem:[%s1675] ss:$2 sm:$0xf]
  %s1677 = scalar_lea.vmem [#allocation2], 169
  %v1678 = vld [vmem:[%s1677] ss:$2 sm:$0xff]
  %s1679 = scalar_lea.vmem [#allocation2], 185
  %v1680 = vld [vmem:[%s1679] ss:$2 sm:$0xf]
  %v1681 = vmax.f32 %v1618, %v1650
  %v1682 = vmax.f32 %v1620, %v1652
  %v1683 = vmax.f32 %v1622, %v1654
  %v1684 = vmax.f32 %v1624, %v1656
  %v1685 = vmax.f32 %v1626, %v1658
  %v1686 = vmax.f32 %v1628, %v1660
  %v1687 = vmax.f32 %v1630, %v1662
  %v1688 = vmax.f32 %v1632, %v1664
  %v1689 = vmax.f32 %v1634, %v1666
  %v1690 = vmax.f32 %v1636, %v1668
  %v1691 = vmax.f32 %v1638, %v1670
  %v1692 = vmax.f32 %v1640, %v1672
  %v1693 = vmax.f32 %v1642, %v1674
  %v1694 = vmax.f32 %v1644, %v1676
  %v1695 = vmax.f32 %v1646, %v1678
  %v1696 = vmax.f32 %v1648, %v1680
  %v1713 = vrot.slane %v1681, 1
  %v1714 = vrot.slane %v1682, 1
  %v1715 = vsel %vm114, %v1713, %v1714
  %v1716 = vrot.slane %v1683, 1
  %v1717 = vrot.slane %v1684, 1
  %v1718 = vsel %vm114, %v1716, %v1717
  %v1719 = vrot.slane %v1685, 1
  %v1720 = vrot.slane %v1686, 1
  %v1721 = vsel %vm114, %v1719, %v1720
  %v1722 = vrot.slane %v1687, 1
  %v1723 = vrot.slane %v1688, 1
  %v1724 = vsel %vm114, %v1722, %v1723
  %v1725 = vrot.slane %v1689, 1
  %v1726 = vrot.slane %v1690, 1
  %v1727 = vsel %vm114, %v1725, %v1726
  %v1728 = vrot.slane %v1691, 1
  %v1729 = vrot.slane %v1692, 1
  %v1730 = vsel %vm114, %v1728, %v1729
  %v1731 = vrot.slane %v1693, 1
  %v1732 = vrot.slane %v1694, 1
  %v1733 = vsel %vm114, %v1731, %v1732
  %v1734 = vrot.slane %v1695, 1
  %v1735 = vrot.slane %v1696, 1
  %v1736 = vsel %vm114, %v1734, %v1735
  %v1737 = vrot.slane %v1681, 2
  %v1738 = vrot.slane %v1682, 2
  %v1739 = vsel %vm171, %v1737, %v1738
  %v1740 = vrot.slane %v1683, 2
  %v1741 = vrot.slane %v1684, 2
  %v1742 = vsel %vm171, %v1740, %v1741
  %v1743 = vrot.slane %v1685, 2
  %v1744 = vrot.slane %v1686, 2
  %v1745 = vsel %vm171, %v1743, %v1744
  %v1746 = vrot.slane %v1687, 2
  %v1747 = vrot.slane %v1688, 2
  %v1748 = vsel %vm171, %v1746, %v1747
  %v1749 = vrot.slane %v1689, 2
  %v1750 = vrot.slane %v1690, 2
  %v1751 = vsel %vm171, %v1749, %v1750
  %v1752 = vrot.slane %v1691, 2
  %v1753 = vrot.slane %v1692, 2
  %v1754 = vsel %vm171, %v1752, %v1753
  %v1755 = vrot.slane %v1693, 2
  %v1756 = vrot.slane %v1694, 2
  %v1757 = vsel %vm171, %v1755, %v1756
  %v1758 = vrot.slane %v1695, 2
  %v1759 = vrot.slane %v1696, 2
  %v1760 = vsel %vm171, %v1758, %v1759
  %v1761 = vrot.slane %v1681, 3
  %v1762 = vrot.slane %v1682, 3
  %v1763 = vsel %vm228, %v1761, %v1762
  %v1764 = vrot.slane %v1683, 3
  %v1765 = vrot.slane %v1684, 3
  %v1766 = vsel %vm228, %v1764, %v1765
  %v1767 = vrot.slane %v1685, 3
  %v1768 = vrot.slane %v1686, 3
  %v1769 = vsel %vm228, %v1767, %v1768
  %v1770 = vrot.slane %v1687, 3
  %v1771 = vrot.slane %v1688, 3
  %v1772 = vsel %vm228, %v1770, %v1771
  %v1773 = vrot.slane %v1689, 3
  %v1774 = vrot.slane %v1690, 3
  %v1775 = vsel %vm228, %v1773, %v1774
  %v1776 = vrot.slane %v1691, 3
  %v1777 = vrot.slane %v1692, 3
  %v1778 = vsel %vm228, %v1776, %v1777
  %v1779 = vrot.slane %v1693, 3
  %v1780 = vrot.slane %v1694, 3
  %v1781 = vsel %vm228, %v1779, %v1780
  %v1782 = vrot.slane %v1695, 3
  %v1783 = vrot.slane %v1696, 3
  %v1784 = vsel %vm228, %v1782, %v1783
  %v1785 = vrot.slane %v1681, 4
  %v1786 = vrot.slane %v1682, 4
  %v1787 = vsel %vm285, %v1785, %v1786
  %v1788 = vrot.slane %v1683, 4
  %v1789 = vrot.slane %v1684, 4
  %v1790 = vsel %vm285, %v1788, %v1789
  %v1791 = vrot.slane %v1685, 4
  %v1792 = vrot.slane %v1686, 4
  %v1793 = vsel %vm285, %v1791, %v1792
  %v1794 = vrot.slane %v1687, 4
  %v1795 = vrot.slane %v1688, 4
  %v1796 = vsel %vm285, %v1794, %v1795
  %v1797 = vrot.slane %v1689, 4
  %v1798 = vrot.slane %v1690, 4
  %v1799 = vsel %vm285, %v1797, %v1798
  %v1800 = vrot.slane %v1691, 4
  %v1801 = vrot.slane %v1692, 4
  %v1802 = vsel %vm285, %v1800, %v1801
  %v1803 = vrot.slane %v1693, 4
  %v1804 = vrot.slane %v1694, 4
  %v1805 = vsel %vm285, %v1803, %v1804
  %v1806 = vrot.slane %v1695, 4
  %v1807 = vrot.slane %v1696, 4
  %v1808 = vsel %vm285, %v1806, %v1807
  %1809 = vrot.lane.b32.xlu0 %v1715, 72
  %v1810 = vpop.permute.xlu0 %1809
  %1811 = vrot.lane.b32.xlu0 %v1718, 72
  %v1812 = vpop.permute.xlu0 %1811
  %1813 = vrot.lane.b32.xlu0 %v1721, 72
  %v1814 = vpop.permute.xlu0 %1813
  %1815 = vrot.lane.b32.xlu0 %v1724, 72
  %v1816 = vpop.permute.xlu0 %1815
  %1817 = vrot.lane.b32.xlu0 %v1727, 72
  %v1818 = vpop.permute.xlu0 %1817
  %1819 = vrot.lane.b32.xlu0 %v1730, 72
  %v1820 = vpop.permute.xlu0 %1819
  %1821 = vrot.lane.b32.xlu0 %v1733, 72
  %v1822 = vpop.permute.xlu0 %1821
  %1823 = vrot.lane.b32.xlu0 %v1736, 72
  %v1824 = vpop.permute.xlu0 %1823
  %1833 = vrot.lane.b32.xlu0 %v1739, 16
  %v1834 = vpop.permute.xlu0 %1833
  %1835 = vrot.lane.b32.xlu0 %v1742, 16
  %v1836 = vpop.permute.xlu0 %1835
  %1837 = vrot.lane.b32.xlu0 %v1745, 16
  %v1838 = vpop.permute.xlu0 %1837
  %1839 = vrot.lane.b32.xlu0 %v1748, 16
  %v1840 = vpop.permute.xlu0 %1839
  %1841 = vrot.lane.b32.xlu0 %v1751, 16
  %v1842 = vpop.permute.xlu0 %1841
  %1843 = vrot.lane.b32.xlu0 %v1754, 16
  %v1844 = vpop.permute.xlu0 %1843
  %1845 = vrot.lane.b32.xlu0 %v1757, 16
  %v1846 = vpop.permute.xlu0 %1845
  %1847 = vrot.lane.b32.xlu0 %v1760, 16
  %v1848 = vpop.permute.xlu0 %1847
  %1857 = vrot.lane.b32.xlu0 %v1763, 88
  %v1858 = vpop.permute.xlu0 %1857
  %1859 = vrot.lane.b32.xlu0 %v1766, 88
  %v1860 = vpop.permute.xlu0 %1859
  %1861 = vrot.lane.b32.xlu0 %v1769, 88
  %v1862 = vpop.permute.xlu0 %1861
  %1863 = vrot.lane.b32.xlu0 %v1772, 88
  %v1864 = vpop.permute.xlu0 %1863
  %1865 = vrot.lane.b32.xlu0 %v1775, 88
  %v1866 = vpop.permute.xlu0 %1865
  %1867 = vrot.lane.b32.xlu0 %v1778, 88
  %v1868 = vpop.permute.xlu0 %1867
  %1869 = vrot.lane.b32.xlu0 %v1781, 88
  %v1870 = vpop.permute.xlu0 %1869
  %1871 = vrot.lane.b32.xlu0 %v1784, 88
  %v1872 = vpop.permute.xlu0 %1871
  %1881 = vrot.lane.b32.xlu0 %v1787, 32
  %v1882 = vpop.permute.xlu0 %1881
  %1883 = vrot.lane.b32.xlu0 %v1790, 32
  %v1884 = vpop.permute.xlu0 %1883
  %1885 = vrot.lane.b32.xlu0 %v1793, 32
  %v1886 = vpop.permute.xlu0 %1885
  %1887 = vrot.lane.b32.xlu0 %v1796, 32
  %v1888 = vpop.permute.xlu0 %1887
  %1889 = vrot.lane.b32.xlu0 %v1799, 32
  %v1890 = vpop.permute.xlu0 %1889
  %1891 = vrot.lane.b32.xlu0 %v1802, 32
  %v1892 = vpop.permute.xlu0 %1891
  %1893 = vrot.lane.b32.xlu0 %v1805, 32
  %v1894 = vpop.permute.xlu0 %1893
  %1895 = vrot.lane.b32.xlu0 %v1808, 32
  %v1896 = vpop.permute.xlu0 %1895
  %v1905 = vsel %vm1593, %v1681, %v1810
  %v1906 = vsel %vm1593, %v1683, %v1812
  %v1907 = vsel %vm1593, %v1685, %v1814
  %v1908 = vsel %vm1593, %v1687, %v1816
  %v1909 = vsel %vm1593, %v1689, %v1818
  %v1910 = vsel %vm1593, %v1691, %v1820
  %v1911 = vsel %vm1593, %v1693, %v1822
  %v1912 = vsel %vm1593, %v1695, %v1824
  %v1913 = vsel %vm1108, %v1810, %v1834
  %v1914 = vsel %vm1108, %v1812, %v1836
  %v1915 = vsel %vm1108, %v1814, %v1838
  %v1916 = vsel %vm1108, %v1816, %v1840
  %v1917 = vsel %vm1108, %v1818, %v1842
  %v1918 = vsel %vm1108, %v1820, %v1844
  %v1919 = vsel %vm1108, %v1822, %v1846
  %v1920 = vsel %vm1108, %v1824, %v1848
  %vm1921 = vcmask 719872
  %v1922 = vsel %vm1921, %v1913, %v1858
  %v1923 = vsel %vm1921, %v1914, %v1860
  %v1924 = vsel %vm1921, %v1915, %v1862
  %v1925 = vsel %vm1921, %v1916, %v1864
  %v1926 = vsel %vm1921, %v1917, %v1866
  %v1927 = vsel %vm1921, %v1918, %v1868
  %v1928 = vsel %vm1921, %v1919, %v1870
  %v1929 = vsel %vm1921, %v1920, %v1872
  %vm1930 = vcmask 261120
  %v1931 = vsel %vm1930, %v1858, %v1882
  %v1932 = vsel %vm1930, %v1860, %v1884
  %v1933 = vsel %vm1930, %v1862, %v1886
  %v1934 = vsel %vm1930, %v1864, %v1888
  %v1935 = vsel %vm1930, %v1866, %v1890
  %v1936 = vsel %vm1930, %v1868, %v1892
  %v1937 = vsel %vm1930, %v1870, %v1894
  %v1938 = vsel %vm1930, %v1872, %v1896
  %v1939 = vld [vmem:[%s5] sm:$0xff]
  %v1940 = vld [vmem:[%s5 + $0x8] sm:$0xff]
  %v1941 = vld [vmem:[%s5 + $0x10] sm:$0xff]
  %v1942 = vld [vmem:[%s5 + $0x18] sm:$0xff]
  %v1943 = vld [vmem:[%s5 + $0x20] sm:$0xff]
  %v1944 = vld [vmem:[%s5 + $0x28] sm:$0xff]
  %v1945 = vld [vmem:[%s5 + $0x30] sm:$0xff]
  %v1946 = vld [vmem:[%s5 + $0x38] sm:$0xff]
  %v1947 = vld [vmem:[%s5 + $0x40] sm:$0xff]
  %v1948 = vld [vmem:[%s5 + $0x48] sm:$0xff]
  %v1949 = vld [vmem:[%s5 + $0x50] sm:$0xff]
  %v1950 = vld [vmem:[%s5 + $0x58] sm:$0xff]
  %v1951 = vld [vmem:[%s5 + $0x60] sm:$0xff]
  %v1952 = vld [vmem:[%s5 + $0x68] sm:$0xff]
  %v1953 = vld [vmem:[%s5 + $0x70] sm:$0xff]
  %v1954 = vld [vmem:[%s5 + $0x78] sm:$0xff]
  %v1955 = vld [vmem:[%s5 + $0x80] sm:$0xff]
  %v1956 = vld [vmem:[%s5 + $0x88] sm:$0xff]
  %v1957 = vld [vmem:[%s5 + $0x90] sm:$0xff]
  %v1958 = vld [vmem:[%s5 + $0x98] sm:$0xff]
  %v1959 = vld [vmem:[%s5 + $0xa0] sm:$0xff]
  %v1960 = vld [vmem:[%s5 + $0xa8] sm:$0xff]
  %v1961 = vld [vmem:[%s5 + $0xb0] sm:$0xff]
  %v1962 = vld [vmem:[%s5 + $0xb8] sm:$0xff]
  %v1963 = vld [vmem:[%s5 + $0xc0] sm:$0xff]
  %v1964 = vld [vmem:[%s5 + $0xc8] sm:$0xff]
  %v1965 = vld [vmem:[%s5 + $0xd0] sm:$0xff]
  %v1966 = vld [vmem:[%s5 + $0xd8] sm:$0xff]
  %v1967 = vld [vmem:[%s5 + $0xe0] sm:$0xff]
  %v1968 = vld [vmem:[%s5 + $0xe8] sm:$0xff]
  %v1969 = vld [vmem:[%s5 + $0xf0] sm:$0xff]
  %v1970 = vld [vmem:[%s5 + $0xf8] sm:$0xff]
  %v1971 = vld [vmem:[%s5 + $0x100] sm:$0xff]
  %v1972 = vld [vmem:[%s5 + $0x108] sm:$0xff]
  %v1973 = vld [vmem:[%s5 + $0x110] sm:$0xff]
  %v1974 = vld [vmem:[%s5 + $0x118] sm:$0xff]
  %v1975 = vld [vmem:[%s5 + $0x120] sm:$0xff]
  %v1976 = vld [vmem:[%s5 + $0x128] sm:$0xff]
  %v1977 = vld [vmem:[%s5 + $0x130] sm:$0xff]
  %v1978 = vld [vmem:[%s5 + $0x138] sm:$0xff]
  %v1979 = vld [vmem:[%s5 + $0x140] sm:$0xff]
  %v1980 = vld [vmem:[%s5 + $0x148] sm:$0xff]
  %v1981 = vld [vmem:[%s5 + $0x150] sm:$0xff]
  %v1982 = vld [vmem:[%s5 + $0x158] sm:$0xff]
  %v1983 = vld [vmem:[%s5 + $0x160] sm:$0xff]
  %v1984 = vld [vmem:[%s6] sm:$0x1]
  %v1986 = vlaneseq
  %v1987 = vshrl.u32 %v1986, 7
  %v1988 = vsub.s32 0, %v1987
  %v1989 = vrot.slane %v1984, %v1988
  %vm1991 = vcmask 850944
  %v1993 = vsel %vm1991, %v1931, 0
  %v1996 = vsel %vm1991, %v1932, 0
  %v1999 = vsel %vm1991, %v1933, 0
  %v2002 = vsel %vm1991, %v1934, 0
  %v2005 = vsel %vm1991, %v1935, 0
  %v2008 = vsel %vm1991, %v1936, 0
  %v2011 = vsel %vm1991, %v1937, 0
  %v2014 = vsel %vm1991, %v1938, 0
  %2016 = vmatprep.subr.mxu0 0.0
  %2017 = vmatpush1.msra.mxu0 %v1954
  %2018 = vmatprep.subr.mxu0 0.0
  %2019 = vmatpush1.msra.mxu0 %v1953
  %2020 = vmatprep.subr.mxu0 0.0
  %2021 = vmatpush1.msra.mxu0 %v1952
  %2022 = vmatprep.subr.mxu0 0.0
  %2023 = vmatpush1.msra.mxu0 %v1951
  %2024 = vmatprep.subr.mxu0 0.0
  %2025 = vmatpush1.msra.mxu0 %v1950
  %2026 = vmatprep.subr.mxu0 0.0
  %2027 = vmatpush1.msra.mxu0 %v1949
  %2028 = vmatprep.subr.mxu0 0.0
  %2029 = vmatpush1.msra.mxu0 %v1948
  %2030 = vmatprep.subr.mxu0 0.0
  %2031 = vmatpush1.msra.mxu0 %v1947
  %2032 = vmatprep.subr.mxu0 0.0
  %2033 = vmatpush1.msra.mxu0 %v1946
  %2034 = vmatprep.subr.mxu0 0.0
  %2035 = vmatpush1.msra.mxu0 %v1945
  %2036 = vmatprep.subr.mxu0 0.0
  %2037 = vmatpush1.msra.mxu0 %v1944
  %2038 = vmatprep.subr.mxu0 0.0
  %2039 = vmatpush1.msra.mxu0 %v1943
  %2040 = vmatprep.subr.mxu0 0.0
  %2041 = vmatpush1.msra.mxu0 %v1942
  %2042 = vmatprep.subr.mxu0 0.0
  %2043 = vmatpush1.msra.mxu0 %v1941
  %2044 = vmatprep.subr.mxu0 0.0
  %2045 = vmatpush1.msra.mxu0 %v1940
  %2046 = vmatprep.subr.mxu0 0.0
  %2047 = vmatpush1.msra.mxu0 %v1939
  %2048 = vmatprep.subr.mxu0 0.0
  %2049 = vmatpush2.msra.mxu0 %v1970
  %2050 = vmatprep.subr.mxu0 0.0
  %2051 = vmatpush2.msra.mxu0 %v1969
  %2052 = vmatprep.subr.mxu0 0.0
  %2053 = vmatpush2.msra.mxu0 %v1968
  %2054 = vmatprep.subr.mxu0 0.0
  %2055 = vmatpush2.msra.mxu0 %v1967
  %2056 = vmatprep.subr.mxu0 0.0
  %2057 = vmatpush2.msra.mxu0 %v1966
  %2058 = vmatprep.subr.mxu0 0.0
  %2059 = vmatpush2.msra.mxu0 %v1965
  %2060 = vmatprep.subr.mxu0 0.0
  %2061 = vmatpush2.msra.mxu0 %v1964
  %2062 = vmatprep.subr.mxu0 0.0
  %2063 = vmatpush2.msra.mxu0 %v1963
  %2064 = vmatprep.subr.mxu0 0.0
  %2065 = vmatpush2.msra.mxu0 %v1962
  %2066 = vmatprep.subr.mxu0 0.0
  %2067 = vmatpush2.msra.mxu0 %v1961
  %2068 = vmatprep.subr.mxu0 0.0
  %2069 = vmatpush2.msra.mxu0 %v1960
  %2070 = vmatprep.subr.mxu0 0.0
  %2071 = vmatpush2.msra.mxu0 %v1959
  %2072 = vmatprep.subr.mxu0 0.0
  %2073 = vmatpush2.msra.mxu0 %v1958
  %2074 = vmatprep.subr.mxu0 0.0
  %2075 = vmatpush2.msra.mxu0 %v1957
  %2076 = vmatprep.subr.mxu0 0.0
  %2077 = vmatpush2.msra.mxu0 %v1956
  %2078 = vmatprep.subr.mxu0 0.0
  %2079 = vmatpush2.msra.mxu0 %v1955
  %2080 = vmatprep.mubr.f32.mxu0 %v1922
  %2081 = vmatmul.mubr.f32.gmra.mxu0 %v1905
  %v2082 = vpop.f32.mrf.mxu0
  %v2083 = vadd.f32 %v1989, %v2082
  %v2084 = vpop.f32.mrf.mxu0
  %2085 = vmatprep.mubr.f32.mxu0 %v1923
  %2086 = vmatmul.mubr.f32.gmra.mxu0 %v1906
  %v2087 = vpop.f32.mrf.mxu0
  %v2088 = vadd.f32 %v1989, %v2087
  %v2089 = vpop.f32.mrf.mxu0
  %2090 = vmatprep.mubr.f32.mxu0 %v1924
  %2091 = vmatmul.mubr.f32.gmra.mxu0 %v1907
  %v2092 = vpop.f32.mrf.mxu0
  %v2093 = vadd.f32 %v1989, %v2092
  %v2094 = vpop.f32.mrf.mxu0
  %2095 = vmatprep.mubr.f32.mxu0 %v1925
  %2096 = vmatmul.mubr.f32.gmra.mxu0 %v1908
  %v2097 = vpop.f32.mrf.mxu0
  %v2098 = vadd.f32 %v1989, %v2097
  %v2099 = vpop.f32.mrf.mxu0
  %2100 = vmatprep.mubr.f32.mxu0 %v1926
  %2101 = vmatmul.mubr.f32.gmra.mxu0 %v1909
  %v2102 = vpop.f32.mrf.mxu0
  %v2103 = vadd.f32 %v1989, %v2102
  %v2104 = vpop.f32.mrf.mxu0
  %2105 = vmatprep.mubr.f32.mxu0 %v1927
  %2106 = vmatmul.mubr.f32.gmra.mxu0 %v1910
  %v2107 = vpop.f32.mrf.mxu0
  %v2108 = vadd.f32 %v1989, %v2107
  %v2109 = vpop.f32.mrf.mxu0
  %2110 = vmatprep.mubr.f32.mxu0 %v1928
  %2111 = vmatmul.mubr.f32.gmra.mxu0 %v1911
  %v2112 = vpop.f32.mrf.mxu0
  %v2113 = vadd.f32 %v1989, %v2112
  %v2114 = vpop.f32.mrf.mxu0
  %2115 = vmatprep.mubr.f32.mxu0 %v1929
  %2116 = vmatmul.mubr.f32.gmra.mxu0 %v1912
  %v2117 = vpop.f32.mrf.mxu0
  %v2118 = vadd.f32 %v1989, %v2117
  %v2119 = vpop.f32.mrf.mxu0
  %2120 = vdwg.mxu0
  %2121 = vmatprep.subr.mxu0 0.0
  %2122 = vmatpush1.msra.mxu0 0.0
  %2123 = vmatprep.subr.mxu0 0.0
  %2124 = vmatpush1.msra.mxu0 0.0
  %2125 = vmatprep.subr.mxu0 0.0
  %2126 = vmatpush1.msra.mxu0 0.0
  %2127 = vmatprep.subr.mxu0 0.0
  %2128 = vmatpush1.msra.mxu0 %v1983
  %2129 = vmatprep.subr.mxu0 0.0
  %2130 = vmatpush1.msra.mxu0 %v1982
  %2131 = vmatprep.subr.mxu0 0.0
  %2132 = vmatpush1.msra.mxu0 %v1981
  %2133 = vmatprep.subr.mxu0 0.0
  %2134 = vmatpush1.msra.mxu0 %v1980
  %2135 = vmatprep.subr.mxu0 0.0
  %2136 = vmatpush1.msra.mxu0 %v1979
  %2137 = vmatprep.subr.mxu0 0.0
  %2138 = vmatpush1.msra.mxu0 %v1978
  %2139 = vmatprep.subr.mxu0 0.0
  %2140 = vmatpush1.msra.mxu0 %v1977
  %2141 = vmatprep.subr.mxu0 0.0
  %2142 = vmatpush1.msra.mxu0 %v1976
  %2143 = vmatprep.subr.mxu0 0.0
  %2144 = vmatpush1.msra.mxu0 %v1975
  %2145 = vmatprep.subr.mxu0 0.0
  %2146 = vmatpush1.msra.mxu0 %v1974
  %2147 = vmatprep.subr.mxu0 0.0
  %2148 = vmatpush1.msra.mxu0 %v1973
  %2149 = vmatprep.subr.mxu0 0.0
  %2150 = vmatpush1.msra.mxu0 %v1972
  %2151 = vmatprep.subr.mxu0 0.0
  %2152 = vmatpush1.msra.mxu0 %v1971
  %2153 = vmatprep.subr.mxu0 0.0
  %2154 = vmatpush2.msra.mxu0 0.0
  %2155 = vmatprep.subr.mxu0 0.0
  %2156 = vmatpush2.msra.mxu0 0.0
  %2157 = vmatprep.subr.mxu0 0.0
  %2158 = vmatpush2.msra.mxu0 0.0
  %2159 = vmatprep.subr.mxu0 0.0
  %2160 = vmatpush2.msra.mxu0 0.0
  %2161 = vmatprep.subr.mxu0 0.0
  %2162 = vmatpush2.msra.mxu0 0.0
  %2163 = vmatprep.subr.mxu0 0.0
  %2164 = vmatpush2.msra.mxu0 0.0
  %2165 = vmatprep.subr.mxu0 0.0
  %2166 = vmatpush2.msra.mxu0 0.0
  %2167 = vmatprep.subr.mxu0 0.0
  %2168 = vmatpush2.msra.mxu0 0.0
  %2169 = vmatprep.subr.mxu0 0.0
  %2170 = vmatpush2.msra.mxu0 0.0
  %2171 = vmatprep.subr.mxu0 0.0
  %2172 = vmatpush2.msra.mxu0 0.0
  %2173 = vmatprep.subr.mxu0 0.0
  %2174 = vmatpush2.msra.mxu0 0.0
  %2175 = vmatprep.subr.mxu0 0.0
  %2176 = vmatpush2.msra.mxu0 0.0
  %2177 = vmatprep.subr.mxu0 0.0
  %2178 = vmatpush2.msra.mxu0 0.0
  %2179 = vmatprep.subr.mxu0 0.0
  %2180 = vmatpush2.msra.mxu0 0.0
  %2181 = vmatprep.subr.mxu0 0.0
  %2182 = vmatpush2.msra.mxu0 0.0
  %2183 = vmatprep.subr.mxu0 0.0
  %2184 = vmatpush2.msra.mxu0 0.0
  %2185 = vmatprep.mubr.f32.mxu0 0.0
  %2186 = vmatmul.mubr.f32.gmra.mxu0 %v1993
  %v2187 = vpop.f32.mrf.mxu0
  %v2188 = vadd.f32 %v2083, %v2187
  %v2189 = vpop.f32.mrf.mxu0
  %2190 = vmatprep.mubr.f32.mxu0 0.0
  %2191 = vmatmul.mubr.f32.gmra.mxu0 %v1996
  %v2192 = vpop.f32.mrf.mxu0
  %v2193 = vadd.f32 %v2088, %v2192
  %v2194 = vpop.f32.mrf.mxu0
  %2195 = vmatprep.mubr.f32.mxu0 0.0
  %2196 = vmatmul.mubr.f32.gmra.mxu0 %v1999
  %v2197 = vpop.f32.mrf.mxu0
  %v2198 = vadd.f32 %v2093, %v2197
  %v2199 = vpop.f32.mrf.mxu0
  %2200 = vmatprep.mubr.f32.mxu0 0.0
  %2201 = vmatmul.mubr.f32.gmra.mxu0 %v2002
  %v2202 = vpop.f32.mrf.mxu0
  %v2203 = vadd.f32 %v2098, %v2202
  %v2204 = vpop.f32.mrf.mxu0
  %2205 = vmatprep.mubr.f32.mxu0 0.0
  %2206 = vmatmul.mubr.f32.gmra.mxu0 %v2005
  %v2207 = vpop.f32.mrf.mxu0
  %v2208 = vadd.f32 %v2103, %v2207
  %v2209 = vpop.f32.mrf.mxu0
  %2210 = vmatprep.mubr.f32.mxu0 0.0
  %2211 = vmatmul.mubr.f32.gmra.mxu0 %v2008
  %v2212 = vpop.f32.mrf.mxu0
  %v2213 = vadd.f32 %v2108, %v2212
  %v2214 = vpop.f32.mrf.mxu0
  %2215 = vmatprep.mubr.f32.mxu0 0.0
  %2216 = vmatmul.mubr.f32.gmra.mxu0 %v2011
  %v2217 = vpop.f32.mrf.mxu0
  %v2218 = vadd.f32 %v2113, %v2217
  %v2219 = vpop.f32.mrf.mxu0
  %2220 = vmatprep.mubr.f32.mxu0 0.0
  %2221 = vmatmul.mubr.f32.gmra.mxu0 %v2014
  %v2222 = vpop.f32.mrf.mxu0
  %v2223 = vadd.f32 %v2118, %v2222
  %v2224 = vpop.f32.mrf.mxu0
  %2225 = vdwg.mxu0
  %v2226 = vmax.f32 %v2188, 0.0
  %v2227 = vmax.f32 %v2193, 0.0
  %v2228 = vmax.f32 %v2198, 0.0
  %v2229 = vmax.f32 %v2203, 0.0
  %v2230 = vmax.f32 %v2208, 0.0
  %v2231 = vmax.f32 %v2213, 0.0
  %v2232 = vmax.f32 %v2218, 0.0
  %v2233 = vmax.f32 %v2223, 0.0
  %v2234 = vld [vmem:[%s7] sm:$0xff]
  %v2235 = vld [vmem:[%s7 + $0x8] sm:$0xff]
  %v2236 = vld [vmem:[%s7 + $0x10] sm:$0xff]
  %v2237 = vld [vmem:[%s7 + $0x18] sm:$0xff]
  %v2238 = vld [vmem:[%s7 + $0x20] sm:$0xff]
  %v2239 = vld [vmem:[%s7 + $0x28] sm:$0xff]
  %v2240 = vld [vmem:[%s7 + $0x30] sm:$0xff]
  %v2241 = vld [vmem:[%s7 + $0x38] sm:$0xff]
  %v2242 = vld [vmem:[%s7 + $0x40] sm:$0xff]
  %v2243 = vld [vmem:[%s7 + $0x48] sm:$0xff]
  %v2244 = vld [vmem:[%s7 + $0x50] sm:$0xff]
  %v2245 = vld [vmem:[%s7 + $0x58] sm:$0xff]
  %v2246 = vld [vmem:[%s7 + $0x60] sm:$0xff]
  %v2247 = vld [vmem:[%s7 + $0x68] sm:$0xff]
  %v2248 = vld [vmem:[%s7 + $0x70] sm:$0xff]
  %v2249 = vld [vmem:[%s7 + $0x78] sm:$0xff]
  %2250 = vmatprep.subr.mxu0 0.0
  %2251 = vmatpush1.msra.mxu0 %v2249
  %2252 = vmatprep.subr.mxu0 0.0
  %2253 = vmatpush1.msra.mxu0 %v2248
  %2254 = vmatprep.subr.mxu0 0.0
  %2255 = vmatpush1.msra.mxu0 %v2247
  %2256 = vmatprep.subr.mxu0 0.0
  %2257 = vmatpush1.msra.mxu0 %v2246
  %2258 = vmatprep.subr.mxu0 0.0
  %2259 = vmatpush1.msra.mxu0 %v2245
  %2260 = vmatprep.subr.mxu0 0.0
  %2261 = vmatpush1.msra.mxu0 %v2244
  %2262 = vmatprep.subr.mxu0 0.0
  %2263 = vmatpush1.msra.mxu0 %v2243
  %2264 = vmatprep.subr.mxu0 0.0
  %2265 = vmatpush1.msra.mxu0 %v2242
  %2266 = vmatprep.subr.mxu0 0.0
  %2267 = vmatpush1.msra.mxu0 %v2241
  %2268 = vmatprep.subr.mxu0 0.0
  %2269 = vmatpush1.msra.mxu0 %v2240
  %2270 = vmatprep.subr.mxu0 0.0
  %2271 = vmatpush1.msra.mxu0 %v2239
  %2272 = vmatprep.subr.mxu0 0.0
  %2273 = vmatpush1.msra.mxu0 %v2238
  %2274 = vmatprep.subr.mxu0 0.0
  %2275 = vmatpush1.msra.mxu0 %v2237
  %2276 = vmatprep.subr.mxu0 0.0
  %2277 = vmatpush1.msra.mxu0 %v2236
  %2278 = vmatprep.subr.mxu0 0.0
  %2279 = vmatpush1.msra.mxu0 %v2235
  %2280 = vmatprep.subr.mxu0 0.0
  %2281 = vmatpush1.msra.mxu0 %v2234
  %2282 = vmatprep.subr.mxu0 0.0
  %2283 = vmatpush2.msra.mxu0 0.0
  %2284 = vmatprep.subr.mxu0 0.0
  %2285 = vmatpush2.msra.mxu0 0.0
  %2286 = vmatprep.subr.mxu0 0.0
  %2287 = vmatpush2.msra.mxu0 0.0
  %2288 = vmatprep.subr.mxu0 0.0
  %2289 = vmatpush2.msra.mxu0 0.0
  %2290 = vmatprep.subr.mxu0 0.0
  %2291 = vmatpush2.msra.mxu0 0.0
  %2292 = vmatprep.subr.mxu0 0.0
  %2293 = vmatpush2.msra.mxu0 0.0
  %2294 = vmatprep.subr.mxu0 0.0
  %2295 = vmatpush2.msra.mxu0 0.0
  %2296 = vmatprep.subr.mxu0 0.0
  %2297 = vmatpush2.msra.mxu0 0.0
  %2298 = vmatprep.subr.mxu0 0.0
  %2299 = vmatpush2.msra.mxu0 0.0
  %2300 = vmatprep.subr.mxu0 0.0
  %2301 = vmatpush2.msra.mxu0 0.0
  %2302 = vmatprep.subr.mxu0 0.0
  %2303 = vmatpush2.msra.mxu0 0.0
  %2304 = vmatprep.subr.mxu0 0.0
  %2305 = vmatpush2.msra.mxu0 0.0
  %2306 = vmatprep.subr.mxu0 0.0
  %2307 = vmatpush2.msra.mxu0 0.0
  %2308 = vmatprep.subr.mxu0 0.0
  %2309 = vmatpush2.msra.mxu0 0.0
  %2310 = vmatprep.subr.mxu0 0.0
  %2311 = vmatpush2.msra.mxu0 0.0
  %2312 = vmatprep.subr.mxu0 0.0
  %2313 = vmatpush2.msra.mxu0 0.0
  %2314 = vmatprep.mubr.f32.mxu0 0.0
  %2315 = vmatmul.mubr.f32.gmra.mxu0 %v2226
  %v2316 = vpop.f32.mrf.mxu0
  %v2317 = vadd.f32 0.0, %v2316
  %v2318 = vpop.f32.mrf.mxu0
  %2319 = vmatprep.mubr.f32.mxu0 0.0
  %2320 = vmatmul.mubr.f32.gmra.mxu0 %v2227
  %v2321 = vpop.f32.mrf.mxu0
  %v2322 = vadd.f32 0.0, %v2321
  %v2323 = vpop.f32.mrf.mxu0
  %2324 = vmatprep.mubr.f32.mxu0 0.0
  %2325 = vmatmul.mubr.f32.gmra.mxu0 %v2228
  %v2326 = vpop.f32.mrf.mxu0
  %v2327 = vadd.f32 0.0, %v2326
  %v2328 = vpop.f32.mrf.mxu0
  %2329 = vmatprep.mubr.f32.mxu0 0.0
  %2330 = vmatmul.mubr.f32.gmra.mxu0 %v2229
  %v2331 = vpop.f32.mrf.mxu0
  %v2332 = vadd.f32 0.0, %v2331
  %v2333 = vpop.f32.mrf.mxu0
  %2334 = vmatprep.mubr.f32.mxu0 0.0
  %2335 = vmatmul.mubr.f32.gmra.mxu0 %v2230
  %v2336 = vpop.f32.mrf.mxu0
  %v2337 = vadd.f32 0.0, %v2336
  %v2338 = vpop.f32.mrf.mxu0
  %2339 = vmatprep.mubr.f32.mxu0 0.0
  %2340 = vmatmul.mubr.f32.gmra.mxu0 %v2231
  %v2341 = vpop.f32.mrf.mxu0
  %v2342 = vadd.f32 0.0, %v2341
  %v2343 = vpop.f32.mrf.mxu0
  %2344 = vmatprep.mubr.f32.mxu0 0.0
  %2345 = vmatmul.mubr.f32.gmra.mxu0 %v2232
  %v2346 = vpop.f32.mrf.mxu0
  %v2347 = vadd.f32 0.0, %v2346
  %v2348 = vpop.f32.mrf.mxu0
  %2349 = vmatprep.mubr.f32.mxu0 0.0
  %2350 = vmatmul.mubr.f32.gmra.mxu0 %v2233
  %v2351 = vpop.f32.mrf.mxu0
  %v2352 = vadd.f32 0.0, %v2351
  %v2353 = vpop.f32.mrf.mxu0
  %2354 = vdwg.mxu0
  %v2355 = vld [vmem:[%s8] sm:$0xff]
  %v2356 = vld [vmem:[%s8 + $0x8] sm:$0xff]
  %v2357 = vld [vmem:[%s8 + $0x10] sm:$0xff]
  %v2358 = vld [vmem:[%s8 + $0x18] sm:$0xff]
  %v2359 = vld [vmem:[%s8 + $0x20] sm:$0xff]
  %v2360 = vld [vmem:[%s8 + $0x28] sm:$0xff]
  %v2361 = vld [vmem:[%s8 + $0x30] sm:$0xff]
  %v2362 = vld [vmem:[%s8 + $0x38] sm:$0xff]
  %v2363 = vld [vmem:[%s8 + $0x40] sm:$0xff]
  %v2364 = vld [vmem:[%s8 + $0x48] sm:$0xff]
  %v2365 = vld [vmem:[%s8 + $0x50] sm:$0xff]
  %v2366 = vld [vmem:[%s8 + $0x58] sm:$0xff]
  %v2367 = vld [vmem:[%s8 + $0x60] sm:$0xff]
  %v2368 = vld [vmem:[%s8 + $0x68] sm:$0xff]
  %v2369 = vld [vmem:[%s8 + $0x70] sm:$0xff]
  %v2370 = vld [vmem:[%s8 + $0x78] sm:$0xff]
  %2371 = vmatprep.subr.mxu0 0.0
  %2372 = vmatpush1.msra.mxu0 %v2370
  %2373 = vmatprep.subr.mxu0 0.0
  %2374 = vmatpush1.msra.mxu0 %v2369
  %2375 = vmatprep.subr.mxu0 0.0
  %2376 = vmatpush1.msra.mxu0 %v2368
  %2377 = vmatprep.subr.mxu0 0.0
  %2378 = vmatpush1.msra.mxu0 %v2367
  %2379 = vmatprep.subr.mxu0 0.0
  %2380 = vmatpush1.msra.mxu0 %v2366
  %2381 = vmatprep.subr.mxu0 0.0
  %2382 = vmatpush1.msra.mxu0 %v2365
  %2383 = vmatprep.subr.mxu0 0.0
  %2384 = vmatpush1.msra.mxu0 %v2364
  %2385 = vmatprep.subr.mxu0 0.0
  %2386 = vmatpush1.msra.mxu0 %v2363
  %2387 = vmatprep.subr.mxu0 0.0
  %2388 = vmatpush1.msra.mxu0 %v2362
  %2389 = vmatprep.subr.mxu0 0.0
  %2390 = vmatpush1.msra.mxu0 %v2361
  %2391 = vmatprep.subr.mxu0 0.0
  %2392 = vmatpush1.msra.mxu0 %v2360
  %2393 = vmatprep.subr.mxu0 0.0
  %2394 = vmatpush1.msra.mxu0 %v2359
  %2395 = vmatprep.subr.mxu0 0.0
  %2396 = vmatpush1.msra.mxu0 %v2358
  %2397 = vmatprep.subr.mxu0 0.0
  %2398 = vmatpush1.msra.mxu0 %v2357
  %2399 = vmatprep.subr.mxu0 0.0
  %2400 = vmatpush1.msra.mxu0 %v2356
  %2401 = vmatprep.subr.mxu0 0.0
  %2402 = vmatpush1.msra.mxu0 %v2355
  %2403 = vmatprep.subr.mxu0 0.0
  %2404 = vmatpush2.msra.mxu0 0.0
  %2405 = vmatprep.subr.mxu0 0.0
  %2406 = vmatpush2.msra.mxu0 0.0
  %2407 = vmatprep.subr.mxu0 0.0
  %2408 = vmatpush2.msra.mxu0 0.0
  %2409 = vmatprep.subr.mxu0 0.0
  %2410 = vmatpush2.msra.mxu0 0.0
  %2411 = vmatprep.subr.mxu0 0.0
  %2412 = vmatpush2.msra.mxu0 0.0
  %2413 = vmatprep.subr.mxu0 0.0
  %2414 = vmatpush2.msra.mxu0 0.0
  %2415 = vmatprep.subr.mxu0 0.0
  %2416 = vmatpush2.msra.mxu0 0.0
  %2417 = vmatprep.subr.mxu0 0.0
  %2418 = vmatpush2.msra.mxu0 0.0
  %2419 = vmatprep.subr.mxu0 0.0
  %2420 = vmatpush2.msra.mxu0 0.0
  %2421 = vmatprep.subr.mxu0 0.0
  %2422 = vmatpush2.msra.mxu0 0.0
  %2423 = vmatprep.subr.mxu0 0.0
  %2424 = vmatpush2.msra.mxu0 0.0
  %2425 = vmatprep.subr.mxu0 0.0
  %2426 = vmatpush2.msra.mxu0 0.0
  %2427 = vmatprep.subr.mxu0 0.0
  %2428 = vmatpush2.msra.mxu0 0.0
  %2429 = vmatprep.subr.mxu0 0.0
  %2430 = vmatpush2.msra.mxu0 0.0
  %2431 = vmatprep.subr.mxu0 0.0
  %2432 = vmatpush2.msra.mxu0 0.0
  %2433 = vmatprep.subr.mxu0 0.0
  %2434 = vmatpush2.msra.mxu0 0.0
  %2435 = vmatprep.mubr.f32.mxu0 0.0
  %2436 = vmatmul.mubr.f32.gmra.mxu0 %v2226
  %v2437 = vpop.f32.mrf.mxu0
  %v2438 = vadd.f32 0.0, %v2437
  %v2439 = vpop.f32.mrf.mxu0
  %2440 = vmatprep.mubr.f32.mxu0 0.0
  %2441 = vmatmul.mubr.f32.gmra.mxu0 %v2227
  %v2442 = vpop.f32.mrf.mxu0
  %v2443 = vadd.f32 0.0, %v2442
  %v2444 = vpop.f32.mrf.mxu0
  %2445 = vmatprep.mubr.f32.mxu0 0.0
  %2446 = vmatmul.mubr.f32.gmra.mxu0 %v2228
  %v2447 = vpop.f32.mrf.mxu0
  %v2448 = vadd.f32 0.0, %v2447
  %v2449 = vpop.f32.mrf.mxu0
  %2450 = vmatprep.mubr.f32.mxu0 0.0
  %2451 = vmatmul.mubr.f32.gmra.mxu0 %v2229
  %v2452 = vpop.f32.mrf.mxu0
  %v2453 = vadd.f32 0.0, %v2452
  %v2454 = vpop.f32.mrf.mxu0
  %2455 = vmatprep.mubr.f32.mxu0 0.0
  %2456 = vmatmul.mubr.f32.gmra.mxu0 %v2230
  %v2457 = vpop.f32.mrf.mxu0
  %v2458 = vadd.f32 0.0, %v2457
  %v2459 = vpop.f32.mrf.mxu0
  %2460 = vmatprep.mubr.f32.mxu0 0.0
  %2461 = vmatmul.mubr.f32.gmra.mxu0 %v2231
  %v2462 = vpop.f32.mrf.mxu0
  %v2463 = vadd.f32 0.0, %v2462
  %v2464 = vpop.f32.mrf.mxu0
  %2465 = vmatprep.mubr.f32.mxu0 0.0
  %2466 = vmatmul.mubr.f32.gmra.mxu0 %v2232
  %v2467 = vpop.f32.mrf.mxu0
  %v2468 = vadd.f32 0.0, %v2467
  %v2469 = vpop.f32.mrf.mxu0
  %2470 = vmatprep.mubr.f32.mxu0 0.0
  %2471 = vmatmul.mubr.f32.gmra.mxu0 %v2233
  %v2472 = vpop.f32.mrf.mxu0
  %v2473 = vadd.f32 0.0, %v2472
  %v2474 = vpop.f32.mrf.mxu0
  %2475 = vdwg.mxu0
  %v2476 = vmax.f32 %v2317, %v2438
  %v2477 = vmax.f32 %v2322, %v2443
  %v2478 = vmax.f32 %v2327, %v2448
  %v2479 = vmax.f32 %v2332, %v2453
  %v2480 = vmax.f32 %v2337, %v2458
  %v2481 = vmax.f32 %v2342, %v2463
  %v2482 = vmax.f32 %v2347, %v2468
  %v2483 = vmax.f32 %v2352, %v2473
  %vm2484 = vcmask 523264
  %2485 = vst.msk [vmem:[#allocation3] sm:$0xff] %vm2484, %v2476
  %2486 = vst.msk [vmem:[#allocation3 + $0x8] sm:$0xff] %vm2484, %v2477
  %2487 = vst.msk [vmem:[#allocation3 + $0x10] sm:$0xff] %vm2484, %v2478
  %2488 = vst.msk [vmem:[#allocation3 + $0x18] sm:$0xff] %vm2484, %v2479
  %2489 = vst.msk [vmem:[#allocation3 + $0x20] sm:$0xff] %vm2484, %v2480
  %2490 = vst.msk [vmem:[#allocation3 + $0x28] sm:$0xff] %vm2484, %v2481
  %2491 = vst.msk [vmem:[#allocation3 + $0x30] sm:$0xff] %vm2484, %v2482
  %2492 = vst.msk [vmem:[#allocation3 + $0x38] sm:$0xff] %vm2484, %v2483
  %v2493 = vld [vmem:[#allocation3] sm:$0x1]
  %v2494 = vld [vmem:[#allocation3 + $0x8] sm:$0x1]
  %v2495 = vld [vmem:[#allocation3 + $0x10] sm:$0x1]
  %v2496 = vld [vmem:[#allocation3 + $0x18] sm:$0x1]
  %v2497 = vld [vmem:[#allocation3 + $0x20] sm:$0x1]
  %v2498 = vld [vmem:[#allocation3 + $0x28] sm:$0x1]
  %v2499 = vld [vmem:[#allocation3 + $0x30] sm:$0x1]
  %v2500 = vld [vmem:[#allocation3 + $0x38] sm:$0x1]
  %v2501 = vld [vmem:[#allocation3 + $0x1] sm:$0x1]
  %v2502 = vld [vmem:[#allocation3 + $0x9] sm:$0x1]
  %v2503 = vld [vmem:[#allocation3 + $0x11] sm:$0x1]
  %v2504 = vld [vmem:[#allocation3 + $0x19] sm:$0x1]
  %v2505 = vld [vmem:[#allocation3 + $0x21] sm:$0x1]
  %v2506 = vld [vmem:[#allocation3 + $0x29] sm:$0x1]
  %v2507 = vld [vmem:[#allocation3 + $0x31] sm:$0x1]
  %v2508 = vld [vmem:[#allocation3 + $0x39] sm:$0x1]
  %v2509 = vmax.f32 %v2493, %v2501
  %v2510 = vmax.f32 %v2494, %v2502
  %v2511 = vmax.f32 %v2495, %v2503
  %v2512 = vmax.f32 %v2496, %v2504
  %v2513 = vmax.f32 %v2497, %v2505
  %v2514 = vmax.f32 %v2498, %v2506
  %v2515 = vmax.f32 %v2499, %v2507
  %v2516 = vmax.f32 %v2500, %v2508
  %v2517 = vld [vmem:[#allocation3 + $0x2] sm:$0x1]
  %v2518 = vld [vmem:[#allocation3 + $0xa] sm:$0x1]
  %v2519 = vld [vmem:[#allocation3 + $0x12] sm:$0x1]
  %v2520 = vld [vmem:[#allocation3 + $0x1a] sm:$0x1]
  %v2521 = vld [vmem:[#allocation3 + $0x22] sm:$0x1]
  %v2522 = vld [vmem:[#allocation3 + $0x2a] sm:$0x1]
  %v2523 = vld [vmem:[#allocation3 + $0x32] sm:$0x1]
  %v2524 = vld [vmem:[#allocation3 + $0x3a] sm:$0x1]
  %v2525 = vld [vmem:[#allocation3 + $0x3] sm:$0x1]
  %v2526 = vld [vmem:[#allocation3 + $0xb] sm:$0x1]
  %v2527 = vld [vmem:[#allocation3 + $0x13] sm:$0x1]
  %v2528 = vld [vmem:[#allocation3 + $0x1b] sm:$0x1]
  %v2529 = vld [vmem:[#allocation3 + $0x23] sm:$0x1]
  %v2530 = vld [vmem:[#allocation3 + $0x2b] sm:$0x1]
  %v2531 = vld [vmem:[#allocation3 + $0x33] sm:$0x1]
  %v2532 = vld [vmem:[#allocation3 + $0x3b] sm:$0x1]
  %v2533 = vmax.f32 %v2517, %v2525
  %v2534 = vmax.f32 %v2518, %v2526
  %v2535 = vmax.f32 %v2519, %v2527
  %v2536 = vmax.f32 %v2520, %v2528
  %v2537 = vmax.f32 %v2521, %v2529
  %v2538 = vmax.f32 %v2522, %v2530
  %v2539 = vmax.f32 %v2523, %v2531
  %v2540 = vmax.f32 %v2524, %v2532
  %v2541 = vld [vmem:[#allocation3 + $0x4] sm:$0x1]
  %v2542 = vld [vmem:[#allocation3 + $0xc] sm:$0x1]
  %v2543 = vld [vmem:[#allocation3 + $0x14] sm:$0x1]
  %v2544 = vld [vmem:[#allocation3 + $0x1c] sm:$0x1]
  %v2545 = vld [vmem:[#allocation3 + $0x24] sm:$0x1]
  %v2546 = vld [vmem:[#allocation3 + $0x2c] sm:$0x1]
  %v2547 = vld [vmem:[#allocation3 + $0x34] sm:$0x1]
  %v2548 = vld [vmem:[#allocation3 + $0x3c] sm:$0x1]
  %v2549 = vld [vmem:[#allocation3 + $0x5] sm:$0x1]
  %v2550 = vld [vmem:[#allocation3 + $0xd] sm:$0x1]
  %v2551 = vld [vmem:[#allocation3 + $0x15] sm:$0x1]
  %v2552 = vld [vmem:[#allocation3 + $0x1d] sm:$0x1]
  %v2553 = vld [vmem:[#allocation3 + $0x25] sm:$0x1]
  %v2554 = vld [vmem:[#allocation3 + $0x2d] sm:$0x1]
  %v2555 = vld [vmem:[#allocation3 + $0x35] sm:$0x1]
  %v2556 = vld [vmem:[#allocation3 + $0x3d] sm:$0x1]
  %v2557 = vmax.f32 %v2541, %v2549
  %v2558 = vmax.f32 %v2542, %v2550
  %v2559 = vmax.f32 %v2543, %v2551
  %v2560 = vmax.f32 %v2544, %v2552
  %v2561 = vmax.f32 %v2545, %v2553
  %v2562 = vmax.f32 %v2546, %v2554
  %v2563 = vmax.f32 %v2547, %v2555
  %v2564 = vmax.f32 %v2548, %v2556
  %v2565 = vld [vmem:[#allocation3 + $0x6] sm:$0x1]
  %v2566 = vld [vmem:[#allocation3 + $0xe] sm:$0x1]
  %v2567 = vld [vmem:[#allocation3 + $0x16] sm:$0x1]
  %v2568 = vld [vmem:[#allocation3 + $0x1e] sm:$0x1]
  %v2569 = vld [vmem:[#allocation3 + $0x26] sm:$0x1]
  %v2570 = vld [vmem:[#allocation3 + $0x2e] sm:$0x1]
  %v2571 = vld [vmem:[#allocation3 + $0x36] sm:$0x1]
  %v2572 = vld [vmem:[#allocation3 + $0x3e] sm:$0x1]
  %v2573 = vld [vmem:[#allocation3 + $0x7] sm:$0x1]
  %v2574 = vld [vmem:[#allocation3 + $0xf] sm:$0x1]
  %v2575 = vld [vmem:[#allocation3 + $0x17] sm:$0x1]
  %v2576 = vld [vmem:[#allocation3 + $0x1f] sm:$0x1]
  %v2577 = vld [vmem:[#allocation3 + $0x27] sm:$0x1]
  %v2578 = vld [vmem:[#allocation3 + $0x2f] sm:$0x1]
  %v2579 = vld [vmem:[#allocation3 + $0x37] sm:$0x1]
  %v2580 = vld [vmem:[#allocation3 + $0x3f] sm:$0x1]
  %v2581 = vmax.f32 %v2565, %v2573
  %v2582 = vmax.f32 %v2566, %v2574
  %v2583 = vmax.f32 %v2567, %v2575
  %v2584 = vmax.f32 %v2568, %v2576
  %v2585 = vmax.f32 %v2569, %v2577
  %v2586 = vmax.f32 %v2570, %v2578
  %v2587 = vmax.f32 %v2571, %v2579
  %v2588 = vmax.f32 %v2572, %v2580
  %v2597 = vrot.slane %v2510, 7
  %vm2598 = vcmask 1041409
  %v2599 = vsel %vm2598, %v2597, %v2509
  %v2600 = vrot.slane %v2511, 6
  %vm2601 = vcmask 1042434
  %v2602 = vsel %vm2601, %v2600, %v2599
  %v2603 = vrot.slane %v2512, 5
  %vm2604 = vcmask 1043459
  %v2605 = vsel %vm2604, %v2603, %v2602
  %v2606 = vrot.slane %v2513, 4
  %vm2607 = vcmask 1044484
  %v2608 = vsel %vm2607, %v2606, %v2605
  %v2609 = vrot.slane %v2514, 3
  %vm2610 = vcmask 1045509
  %v2611 = vsel %vm2610, %v2609, %v2608
  %v2612 = vrot.slane %v2515, 2
  %vm2613 = vcmask 1046534
  %v2614 = vsel %vm2613, %v2612, %v2611
  %v2615 = vrot.slane %v2516, 1
  %vm2616 = vcmask 1047559
  %v2617 = vsel %vm2616, %v2615, %v2614
  %v2627 = vrot.slane %v2534, 7
  %v2628 = vsel %vm2598, %v2627, %v2533
  %v2629 = vrot.slane %v2535, 6
  %v2630 = vsel %vm2601, %v2629, %v2628
  %v2631 = vrot.slane %v2536, 5
  %v2632 = vsel %vm2604, %v2631, %v2630
  %v2633 = vrot.slane %v2537, 4
  %v2634 = vsel %vm2607, %v2633, %v2632
  %v2635 = vrot.slane %v2538, 3
  %v2636 = vsel %vm2610, %v2635, %v2634
  %v2637 = vrot.slane %v2539, 2
  %v2638 = vsel %vm2613, %v2637, %v2636
  %v2639 = vrot.slane %v2540, 1
  %v2640 = vsel %vm2616, %v2639, %v2638
  %2641 = vrot.lane.b32.xlu0 %v2640, 64
  %v2642 = vpop.permute.xlu0 %2641
  %v2652 = vrot.slane %v2558, 7
  %v2653 = vsel %vm2598, %v2652, %v2557
  %v2654 = vrot.slane %v2559, 6
  %v2655 = vsel %vm2601, %v2654, %v2653
  %v2656 = vrot.slane %v2560, 5
  %v2657 = vsel %vm2604, %v2656, %v2655
  %v2658 = vrot.slane %v2561, 4
  %v2659 = vsel %vm2607, %v2658, %v2657
  %v2660 = vrot.slane %v2562, 3
  %v2661 = vsel %vm2610, %v2660, %v2659
  %v2662 = vrot.slane %v2563, 2
  %v2663 = vsel %vm2613, %v2662, %v2661
  %v2664 = vrot.slane %v2564, 1
  %v2665 = vsel %vm2616, %v2664, %v2663
  %v2675 = vrot.slane %v2582, 7
  %v2676 = vsel %vm2598, %v2675, %v2581
  %v2677 = vrot.slane %v2583, 6
  %v2678 = vsel %vm2601, %v2677, %v2676
  %v2679 = vrot.slane %v2584, 5
  %v2680 = vsel %vm2604, %v2679, %v2678
  %v2681 = vrot.slane %v2585, 4
  %v2682 = vsel %vm2607, %v2681, %v2680
  %v2683 = vrot.slane %v2586, 3
  %v2684 = vsel %vm2610, %v2683, %v2682
  %v2685 = vrot.slane %v2587, 2
  %v2686 = vsel %vm2613, %v2685, %v2684
  %v2687 = vrot.slane %v2588, 1
  %v2688 = vsel %vm2616, %v2687, %v2686
  %2689 = vrot.lane.b32.xlu0 %v2688, 64
  %v2690 = vpop.permute.xlu0 %2689
  %v2692 = vsel %vm2484, %v2617, %v2642
  %v2693 = vsel %vm2484, %v2665, %v2690
  %v2694 = vld [vmem:[%s9] sm:$0xff]
  %v2695 = vld [vmem:[%s9 + $0x8] sm:$0xff]
  %v2696 = vld [vmem:[%s9 + $0x10] sm:$0xff]
  %v2697 = vld [vmem:[%s9 + $0x18] sm:$0xff]
  %v2698 = vld [vmem:[%s9 + $0x20] sm:$0xff]
  %v2699 = vld [vmem:[%s9 + $0x28] sm:$0xff]
  %v2700 = vld [vmem:[%s9 + $0x30] sm:$0xff]
  %v2701 = vld [vmem:[%s9 + $0x38] sm:$0xff]
  %v2702 = vld [vmem:[%s9 + $0x40] sm:$0xff]
  %v2703 = vld [vmem:[%s9 + $0x48] sm:$0xff]
  %v2704 = vld [vmem:[%s9 + $0x50] sm:$0xff]
  %v2705 = vld [vmem:[%s9 + $0x58] sm:$0xff]
  %v2706 = vld [vmem:[%s9 + $0x60] sm:$0xff]
  %v2707 = vld [vmem:[%s9 + $0x68] sm:$0xff]
  %v2708 = vld [vmem:[%s9 + $0x70] sm:$0xff]
  %v2709 = vld [vmem:[%s9 + $0x78] sm:$0xff]
  %v2710 = vld [vmem:[%s9 + $0x80] sm:$0xff]
  %v2711 = vld [vmem:[%s9 + $0x88] sm:$0xff]
  %v2712 = vld [vmem:[%s9 + $0x90] sm:$0xff]
  %v2713 = vld [vmem:[%s9 + $0x98] sm:$0xff]
  %v2714 = vld [vmem:[%s9 + $0xa0] sm:$0xff]
  %v2715 = vld [vmem:[%s9 + $0xa8] sm:$0xff]
  %v2716 = vld [vmem:[%s9 + $0xb0] sm:$0xff]
  %v2717 = vld [vmem:[%s9 + $0xb8] sm:$0xff]
  %v2718 = vld [vmem:[%s9 + $0xc0] sm:$0xff]
  %v2719 = vld [vmem:[%s9 + $0xc8] sm:$0xff]
  %v2720 = vld [vmem:[%s9 + $0xd0] sm:$0xff]
  %v2721 = vld [vmem:[%s9 + $0xd8] sm:$0xff]
  %v2722 = vld [vmem:[%s9 + $0xe0] sm:$0xff]
  %v2723 = vld [vmem:[%s9 + $0xe8] sm:$0xff]
  %v2724 = vld [vmem:[%s9 + $0xf0] sm:$0xff]
  %v2725 = vld [vmem:[%s9 + $0xf8] sm:$0xff]
  %v2726 = vld [vmem:[%s10] sm:$0x1]
  %v2728 = vlaneseq
  %v2729 = vshrl.u32 %v2728, 7
  %v2730 = vsub.s32 0, %v2729
  %v2731 = vrot.slane %v2726, %v2730
  %2733 = vmatprep.subr.mxu0 0.0
  %2734 = vmatpush1.msra.mxu0 %v2709
  %2735 = vmatprep.subr.mxu0 0.0
  %2736 = vmatpush1.msra.mxu0 %v2708
  %2737 = vmatprep.subr.mxu0 0.0
  %2738 = vmatpush1.msra.mxu0 %v2707
  %2739 = vmatprep.subr.mxu0 0.0
  %2740 = vmatpush1.msra.mxu0 %v2706
  %2741 = vmatprep.subr.mxu0 0.0
  %2742 = vmatpush1.msra.mxu0 %v2705
  %2743 = vmatprep.subr.mxu0 0.0
  %2744 = vmatpush1.msra.mxu0 %v2704
  %2745 = vmatprep.subr.mxu0 0.0
  %2746 = vmatpush1.msra.mxu0 %v2703
  %2747 = vmatprep.subr.mxu0 0.0
  %2748 = vmatpush1.msra.mxu0 %v2702
  %2749 = vmatprep.subr.mxu0 0.0
  %2750 = vmatpush1.msra.mxu0 %v2701
  %2751 = vmatprep.subr.mxu0 0.0
  %2752 = vmatpush1.msra.mxu0 %v2700
  %2753 = vmatprep.subr.mxu0 0.0
  %2754 = vmatpush1.msra.mxu0 %v2699
  %2755 = vmatprep.subr.mxu0 0.0
  %2756 = vmatpush1.msra.mxu0 %v2698
  %2757 = vmatprep.subr.mxu0 0.0
  %2758 = vmatpush1.msra.mxu0 %v2697
  %2759 = vmatprep.subr.mxu0 0.0
  %2760 = vmatpush1.msra.mxu0 %v2696
  %2761 = vmatprep.subr.mxu0 0.0
  %2762 = vmatpush1.msra.mxu0 %v2695
  %2763 = vmatprep.subr.mxu0 0.0
  %2764 = vmatpush1.msra.mxu0 %v2694
  %2765 = vmatprep.subr.mxu0 0.0
  %2766 = vmatpush2.msra.mxu0 %v2725
  %2767 = vmatprep.subr.mxu0 0.0
  %2768 = vmatpush2.msra.mxu0 %v2724
  %2769 = vmatprep.subr.mxu0 0.0
  %2770 = vmatpush2.msra.mxu0 %v2723
  %2771 = vmatprep.subr.mxu0 0.0
  %2772 = vmatpush2.msra.mxu0 %v2722
  %2773 = vmatprep.subr.mxu0 0.0
  %2774 = vmatpush2.msra.mxu0 %v2721
  %2775 = vmatprep.subr.mxu0 0.0
  %2776 = vmatpush2.msra.mxu0 %v2720
  %2777 = vmatprep.subr.mxu0 0.0
  %2778 = vmatpush2.msra.mxu0 %v2719
  %2779 = vmatprep.subr.mxu0 0.0
  %2780 = vmatpush2.msra.mxu0 %v2718
  %2781 = vmatprep.subr.mxu0 0.0
  %2782 = vmatpush2.msra.mxu0 %v2717
  %2783 = vmatprep.subr.mxu0 0.0
  %2784 = vmatpush2.msra.mxu0 %v2716
  %2785 = vmatprep.subr.mxu0 0.0
  %2786 = vmatpush2.msra.mxu0 %v2715
  %2787 = vmatprep.subr.mxu0 0.0
  %2788 = vmatpush2.msra.mxu0 %v2714
  %2789 = vmatprep.subr.mxu0 0.0
  %2790 = vmatpush2.msra.mxu0 %v2713
  %2791 = vmatprep.subr.mxu0 0.0
  %2792 = vmatpush2.msra.mxu0 %v2712
  %2793 = vmatprep.subr.mxu0 0.0
  %2794 = vmatpush2.msra.mxu0 %v2711
  %2795 = vmatprep.subr.mxu0 0.0
  %2796 = vmatpush2.msra.mxu0 %v2710
  %2797 = vmatprep.mubr.f32.mxu0 %v2693
  %2798 = vmatmul.mubr.f32.gmra.mxu0 %v2692
  %v2799 = vpop.f32.mrf.mxu0
  %v2800 = vadd.f32 %v2731, %v2799
  %v2801 = vpop.f32.mrf.mxu0
  %2802 = vdwg.mxu0
  %v2803 = vmax.f32 %v2800, 0.0
  %v2804 = vld [vmem:[%s11] sm:$0xff]
  %v2805 = vld [vmem:[%s11 + $0x8] sm:$0xff]
  %v2806 = vld [vmem:[%s11 + $0x10] sm:$0xff]
  %v2807 = vld [vmem:[%s11 + $0x18] sm:$0xff]
  %v2808 = vld [vmem:[%s11 + $0x20] sm:$0xff]
  %v2809 = vld [vmem:[%s11 + $0x28] sm:$0xff]
  %v2810 = vld [vmem:[%s11 + $0x30] sm:$0xff]
  %v2811 = vld [vmem:[%s11 + $0x38] sm:$0xff]
  %v2812 = vld [vmem:[%s11 + $0x40] sm:$0xff]
  %v2813 = vld [vmem:[%s11 + $0x48] sm:$0xff]
  %v2814 = vld [vmem:[%s11 + $0x50] sm:$0xff]
  %v2815 = vld [vmem:[%s11 + $0x58] sm:$0xff]
  %v2816 = vld [vmem:[%s11 + $0x60] sm:$0xff]
  %v2817 = vld [vmem:[%s11 + $0x68] sm:$0xff]
  %v2818 = vld [vmem:[%s11 + $0x70] sm:$0xff]
  %v2819 = vld [vmem:[%s12] sm:$0x1]
  %v2821 = vlaneseq
  %v2822 = vshrl.u32 %v2821, 7
  %v2823 = vsub.s32 0, %v2822
  %v2824 = vrot.slane %v2819, %v2823
  %vm2826 = vcmask 982016
  %v2828 = vsel %vm2826, %v2803, 0
  %2830 = vmatprep.subr.mxu0 0.0
  %2831 = vmatpush1.msra.mxu0 0.0
  %2832 = vmatprep.subr.mxu0 0.0
  %2833 = vmatpush1.msra.mxu0 %v2818
  %2834 = vmatprep.subr.mxu0 0.0
  %2835 = vmatpush1.msra.mxu0 %v2817
  %2836 = vmatprep.subr.mxu0 0.0
  %2837 = vmatpush1.msra.mxu0 %v2816
  %2838 = vmatprep.subr.mxu0 0.0
  %2839 = vmatpush1.msra.mxu0 %v2815
  %2840 = vmatprep.subr.mxu0 0.0
  %2841 = vmatpush1.msra.mxu0 %v2814
  %2842 = vmatprep.subr.mxu0 0.0
  %2843 = vmatpush1.msra.mxu0 %v2813
  %2844 = vmatprep.subr.mxu0 0.0
  %2845 = vmatpush1.msra.mxu0 %v2812
  %2846 = vmatprep.subr.mxu0 0.0
  %2847 = vmatpush1.msra.mxu0 %v2811
  %2848 = vmatprep.subr.mxu0 0.0
  %2849 = vmatpush1.msra.mxu0 %v2810
  %2850 = vmatprep.subr.mxu0 0.0
  %2851 = vmatpush1.msra.mxu0 %v2809
  %2852 = vmatprep.subr.mxu0 0.0
  %2853 = vmatpush1.msra.mxu0 %v2808
  %2854 = vmatprep.subr.mxu0 0.0
  %2855 = vmatpush1.msra.mxu0 %v2807
  %2856 = vmatprep.subr.mxu0 0.0
  %2857 = vmatpush1.msra.mxu0 %v2806
  %2858 = vmatprep.subr.mxu0 0.0
  %2859 = vmatpush1.msra.mxu0 %v2805
  %2860 = vmatprep.subr.mxu0 0.0
  %2861 = vmatpush1.msra.mxu0 %v2804
  %2862 = vmatprep.subr.mxu0 0.0
  %2863 = vmatpush2.msra.mxu0 0.0
  %2864 = vmatprep.subr.mxu0 0.0
  %2865 = vmatpush2.msra.mxu0 0.0
  %2866 = vmatprep.subr.mxu0 0.0
  %2867 = vmatpush2.msra.mxu0 0.0
  %2868 = vmatprep.subr.mxu0 0.0
  %2869 = vmatpush2.msra.mxu0 0.0
  %2870 = vmatprep.subr.mxu0 0.0
  %2871 = vmatpush2.msra.mxu0 0.0
  %2872 = vmatprep.subr.mxu0 0.0
  %2873 = vmatpush2.msra.mxu0 0.0
  %2874 = vmatprep.subr.mxu0 0.0
  %2875 = vmatpush2.msra.mxu0 0.0
  %2876 = vmatprep.subr.mxu0 0.0
  %2877 = vmatpush2.msra.mxu0 0.0
  %2878 = vmatprep.subr.mxu0 0.0
  %2879 = vmatpush2.msra.mxu0 0.0
  %2880 = vmatprep.subr.mxu0 0.0
  %2881 = vmatpush2.msra.mxu0 0.0
  %2882 = vmatprep.subr.mxu0 0.0
  %2883 = vmatpush2.msra.mxu0 0.0
  %2884 = vmatprep.subr.mxu0 0.0
  %2885 = vmatpush2.msra.mxu0 0.0
  %2886 = vmatprep.subr.mxu0 0.0
  %2887 = vmatpush2.msra.mxu0 0.0
  %2888 = vmatprep.subr.mxu0 0.0
  %2889 = vmatpush2.msra.mxu0 0.0
  %2890 = vmatprep.subr.mxu0 0.0
  %2891 = vmatpush2.msra.mxu0 0.0
  %2892 = vmatprep.subr.mxu0 0.0
  %2893 = vmatpush2.msra.mxu0 0.0
  %2894 = vmatprep.mubr.f32.mxu0 0.0
  %2895 = vmatmul.mubr.f32.gmra.mxu0 %v2828
  %v2896 = vpop.f32.mrf.mxu0
  %v2897 = vadd.f32 %v2824, %v2896
  %v2898 = vpop.f32.mrf.mxu0
  %2899 = vdwg.mxu0
  %v2900 = vmax.f32 %v2897, 0.0
  %v2901 = vld [vmem:[%s13] sm:$0xff]
  %v2902 = vld [vmem:[%s13 + $0x8] sm:$0xff]
  %v2903 = vld [vmem:[%s13 + $0x10] sm:$0xff]
  %v2904 = vld [vmem:[%s13 + $0x18] sm:$0xff]
  %v2905 = vld [vmem:[%s13 + $0x20] sm:$0xff]
  %v2906 = vld [vmem:[%s13 + $0x28] sm:$0xff]
  %v2907 = vld [vmem:[%s13 + $0x30] sm:$0xff]
  %v2908 = vld [vmem:[%s13 + $0x38] sm:$0xff]
  %v2909 = vld [vmem:[%s13 + $0x40] sm:$0xff]
  %v2910 = vld [vmem:[%s13 + $0x48] sm:$0xff]
  %v2911 = vld [vmem:[%s13 + $0x50] sm:$0xf]
  %v2912 = vld [vmem:[%s14] sm:$0x1]
  %v2914 = vlaneseq
  %v2915 = vshrl.u32 %v2914, 7
  %v2916 = vsub.s32 0, %v2915
  %v2917 = vrot.slane %v2912, %v2916
  %v2920 = vsel %vm680, %v2900, 0
  %v2923 = vsel %vm285, %v2911, 0
  %2925 = vmatprep.subr.mxu0 0.0
  %2926 = vmatpush1.msra.mxu0 0.0
  %2927 = vmatprep.subr.mxu0 0.0
  %2928 = vmatpush1.msra.mxu0 0.0
  %2929 = vmatprep.subr.mxu0 0.0
  %2930 = vmatpush1.msra.mxu0 0.0
  %2931 = vmatprep.subr.mxu0 0.0
  %2932 = vmatpush1.msra.mxu0 0.0
  %2933 = vmatprep.subr.mxu0 0.0
  %2934 = vmatpush1.msra.mxu0 0.0
  %2935 = vmatprep.subr.mxu0 0.0
  %2936 = vmatpush1.msra.mxu0 %v2923
  %2937 = vmatprep.subr.mxu0 0.0
  %2938 = vmatpush1.msra.mxu0 %v2910
  %2939 = vmatprep.subr.mxu0 0.0
  %2940 = vmatpush1.msra.mxu0 %v2909
  %2941 = vmatprep.subr.mxu0 0.0
  %2942 = vmatpush1.msra.mxu0 %v2908
  %2943 = vmatprep.subr.mxu0 0.0
  %2944 = vmatpush1.msra.mxu0 %v2907
  %2945 = vmatprep.subr.mxu0 0.0
  %2946 = vmatpush1.msra.mxu0 %v2906
  %2947 = vmatprep.subr.mxu0 0.0
  %2948 = vmatpush1.msra.mxu0 %v2905
  %2949 = vmatprep.subr.mxu0 0.0
  %2950 = vmatpush1.msra.mxu0 %v2904
  %2951 = vmatprep.subr.mxu0 0.0
  %2952 = vmatpush1.msra.mxu0 %v2903
  %2953 = vmatprep.subr.mxu0 0.0
  %2954 = vmatpush1.msra.mxu0 %v2902
  %2955 = vmatprep.subr.mxu0 0.0
  %2956 = vmatpush1.msra.mxu0 %v2901
  %2957 = vmatprep.subr.mxu0 0.0
  %2958 = vmatpush2.msra.mxu0 0.0
  %2959 = vmatprep.subr.mxu0 0.0
  %2960 = vmatpush2.msra.mxu0 0.0
  %2961 = vmatprep.subr.mxu0 0.0
  %2962 = vmatpush2.msra.mxu0 0.0
  %2963 = vmatprep.subr.mxu0 0.0
  %2964 = vmatpush2.msra.mxu0 0.0
  %2965 = vmatprep.subr.mxu0 0.0
  %2966 = vmatpush2.msra.mxu0 0.0
  %2967 = vmatprep.subr.mxu0 0.0
  %2968 = vmatpush2.msra.mxu0 0.0
  %2969 = vmatprep.subr.mxu0 0.0
  %2970 = vmatpush2.msra.mxu0 0.0
  %2971 = vmatprep.subr.mxu0 0.0
  %2972 = vmatpush2.msra.mxu0 0.0
  %2973 = vmatprep.subr.mxu0 0.0
  %2974 = vmatpush2.msra.mxu0 0.0
  %2975 = vmatprep.subr.mxu0 0.0
  %2976 = vmatpush2.msra.mxu0 0.0
  %2977 = vmatprep.subr.mxu0 0.0
  %2978 = vmatpush2.msra.mxu0 0.0
  %2979 = vmatprep.subr.mxu0 0.0
  %2980 = vmatpush2.msra.mxu0 0.0
  %2981 = vmatprep.subr.mxu0 0.0
  %2982 = vmatpush2.msra.mxu0 0.0
  %2983 = vmatprep.subr.mxu0 0.0
  %2984 = vmatpush2.msra.mxu0 0.0
  %2985 = vmatprep.subr.mxu0 0.0
  %2986 = vmatpush2.msra.mxu0 0.0
  %2987 = vmatprep.subr.mxu0 0.0
  %2988 = vmatpush2.msra.mxu0 0.0
  %2989 = vmatprep.mubr.f32.mxu0 0.0
  %2990 = vmatmul.mubr.f32.gmra.mxu0 %v2920
  %v2991 = vpop.f32.mrf.mxu0
  %v2992 = vadd.f32 %v2917, %v2991
  %v2993 = vpop.f32.mrf.mxu0
  %2994 = vdwg.mxu0
  %2995 = vst [vmem:[%s15] sm:$0xff] %v2992
  // Predicated region
  $region62: #{convnet_forward.1} parent=0 // pred_check
    _
  $region63: #{convnet_forward.1} parent=0 // pred_check_branch
    %2997 = sbr.rel (0) target = $region65
  $region64: #{convnet_forward.1} parent=0 // pred_region
    _
  $region65: #{convnet_forward.1} parent=0 // pred_fallthru
    _
  // Predicated region
  $region66: #{convnet_forward.1} parent=0 // pred_check
    _
  $region67: #{convnet_forward.1} parent=0 // pred_check_branch
    %2999 = sbr.rel (0) target = $region69
  $region68: #{convnet_forward.1} parent=0 // pred_region
    _
  $region69: #{convnet_forward.1} parent=0 // pred_fallthru
    _

</llo_original>
